<compile_context>
chip_gen: v5e
topology: v5e:2x2
jax: 0.10.0
libtpu: 0.0.40
codegen_flags: <defaults>
</compile_context>

<pallas_src>
import numpy as np
import jax
import jax.numpy as jnp
from jax.experimental import pallas as pl
from jax.experimental.pallas import tpu as pltpu


# ---------------------------------------------------------------------------
# Wrapper-side constant builders (host numpy; shape-only -> built once/trace)
# ---------------------------------------------------------------------------
def _pool_select_mats(h, w):
    """Four (h*w, (h//2)*(w//2)) 0/1 matrices selecting the 4 corners of each
    2x2/stride-2 pool window (flat row-major layout)."""
    ho, wo = h // 2, w // 2
    mats = np.zeros((4, h * w, ho * wo), np.float32)
    k = 0
    for dy in (0, 1):
        for dx in (0, 1):
            for yo in range(ho):
                for xo in range(wo):
                    mats[k, (2 * yo + dy) * w + (2 * xo + dx), yo * wo + xo] = 1.0
            k += 1
    return mats


def _conv_tap_mats(h, w, k):
    """(k*k, h*w, h*w) 0/1 tap matrices for 'same' KxK conv (pad=(k-1)//2,
    stride 1) in flat row-major layout; zero padding folded in (missing taps
    simply contribute nothing)."""
    p = (k - 1) // 2
    taps = np.zeros((k * k, h * w, h * w), np.float32)
    for ky in range(k):
        for kx in range(k):
            t = ky * k + kx
            for yo in range(h):
                yi = yo + ky - p
                if yi < 0 or yi >= h:
                    continue
                for xo in range(w):
                    xi = xo + kx - p
                    if xi < 0 or xi >= w:
                        continue
                    taps[t, yi * w + xi, yo * w + xo] = 1.0
    return taps


def _interp_matrix(n_out, n_in):
    """(n_out, n_in) bilinear align_corners=True interpolation weights
    (integer index arithmetic -- no float-equality construction)."""
    m = np.zeros((n_out, n_in), np.float32)
    if n_in == 1:
        m[:, 0] = 1.0
        return m
    if n_out == 1:
        m[0, 0] = 1.0
        return m
    scale = (n_in - 1) / (n_out - 1)
    for y in range(n_out):
        src = y * scale
        lo = min(int(np.floor(src)), n_in - 2)
        fr = src - lo
        m[y, lo] += 1.0 - fr
        m[y, lo + 1] += fr
    return m


def _upsample_flat_mat(hin, win, hout, wout):
    """(hin*win, hout*wout) matrix U s.t. flat_out = flat_in @ U implements
    separable bilinear align_corners=True resize in flat row-major layout."""
    a = _interp_matrix(hout, hin)            # (hout, hin)
    b = _interp_matrix(wout, win)            # (wout, win)
    u = np.einsum("yi,xj->ijyx", a, b).reshape(hin * win, hout * wout)
    return u.astype(np.float32)


def _fold_conv(w, taps):
    """Fold conv weights (1, cin, k, k) into per-input-channel flat conv
    matrices (cin, n, n): M_c = sum_t w[0,c,t] * T_t."""
    cin = w.shape[1]
    return jnp.einsum("ct,tpq->cpq", w[0].reshape(cin, -1).astype(jnp.float32),
                      jnp.asarray(taps))


def _pick_bblk(batch):
    """Images per grid step: amortize step overhead but keep >=2 grid steps
    (v7x megacore) when possible."""
    cap = max(1, min(4, batch // 2))
    for cand in range(cap, 0, -1):
        if batch % cand == 0:
            return cand
    return 1


# ---------------------------------------------------------------------------
# Fused FPA kernel (one grid step == bblk batch elements)
# ---------------------------------------------------------------------------
def _make_fpa_kernel(Cin, Cout, H, W, bblk):
    HW = H * W

    def _mm(a, b):
        return jnp.dot(a, b, preferred_element_type=jnp.float32)

    def kernel(x_ref, wmid_ref, bmid_ref, wb1_ref, bb1_ref,
               p1_ref, p2_ref, p3_ref,
               md1_ref, md2_ref, md3a_ref, md3b_ref, mc2_ref, mc1_ref,
               u3_ref, u2_ref, u1_ref, cb_ref, o_ref):
        # GAP weight column -- hoisted out of the per-image loop; the mean runs
        # on the MXU instead of an XLU cross-lane reduce.
        gcol = jnp.full((HW, 1), 1.0 / HW, dtype=jnp.float32)
        wmid = wmid_ref[...]
        wb1 = wb1_ref[...]
        bmid = bmid_ref[...]
        bb1 = bb1_ref[...]

        for i in range(bblk):
            xf = x_ref[i]                                       # (Cin, HW) lane-dense

            # mid: 1x1 conv + bias + ReLU -- one lane-dense MXU matmul.
            mid = jnp.maximum(_mm(wmid, xf) + bmid, 0.0)        # (Cout, HW)

            # branch1: GAP (matmul) + 1x1 conv + bias + ReLU.
            gap = _mm(xf, gcol)                                 # (Cin, 1)
            b1 = jnp.maximum(_mm(wb1, gap) + bb1, 0.0)          # (Cout, 1)

            # ---- down1: maxpool 2x2/s2 + 7x7 conv (Cin -> 1) -- all MXU ----
            pooled1 = _mm(xf, p1_ref[0])
            for k in range(1, 4):
                pooled1 = jnp.maximum(pooled1, _mm(xf, p1_ref[k]))   # (Cin, H2*W2)
            # TODO(synk): for large Cin fold this per-channel loop into one
            # (1, Cin*H2W2) x (Cin*H2W2, H2W2) matmul (needs a sublane->lane pack).
            x1 = _mm(pooled1[0:1, :], md1_ref[0])
            for c in range(1, Cin):
                x1 = x1 + _mm(pooled1[c:c + 1, :], md1_ref[c])
            x1 = jnp.maximum(x1 + cb_ref[0], 0.0)               # (1, H2*W2)

            # ---- down2: maxpool + 5x5 conv ---------------------------------
            pooled2 = _mm(x1, p2_ref[0])
            for k in range(1, 4):
                pooled2 = jnp.maximum(pooled2, _mm(x1, p2_ref[k]))
            x2 = jnp.maximum(_mm(pooled2, md2_ref[...]) + cb_ref[1], 0.0)

            # ---- down3: maxpool + 3x3 conv + 3x3 conv ----------------------
            pooled3 = _mm(x2, p3_ref[0])
            for k in range(1, 4):
                pooled3 = jnp.maximum(pooled3, _mm(x2, p3_ref[k]))
            t3 = jnp.maximum(_mm(pooled3, md3a_ref[...]) + cb_ref[2], 0.0)
            x3 = jnp.maximum(_mm(t3, md3b_ref[...]) + cb_ref[3], 0.0)

            # ---- lateral convs (padding folded into the matrices) ----------
            x2c = jnp.maximum(_mm(x2, mc2_ref[...]) + cb_ref[4], 0.0)
            x1c = jnp.maximum(_mm(x1, mc1_ref[...]) + cb_ref[5], 0.0)

            # ---- top-down: bilinear (align_corners=True) upsample matmuls --
            s1 = x2c + _mm(x3, u3_ref[...])                     # (1, H4*W4)
            s2 = x1c + _mm(s1, u2_ref[...])                     # (1, H2*W2)
            up = _mm(s2, u1_ref[...])                           # (1, HW)

            # ---- final fuse: ONE unmasked lane-dense (Cout, HW) store ------
            o_ref[i] = up * mid + b1

    return kernel


# ---------------------------------------------------------------------------
# Wrapper
# ---------------------------------------------------------------------------
def fpa_forward(x, p):
    B, Cin, H, W = x.shape
    Cout = p["w_mid"].shape[0]
    HW = H * W
    H2, W2, H4, W4, H8, W8 = H // 2, W // 2, H // 4, W // 4, H // 8, W // 8
    assert H % 8 == 0 and W % 8 == 0, "FPA pyramid needs H, W divisible by 8"

    bblk = _pick_bblk(B)

    # Single lane-dense input view (free reshape; no HBM concat/copy).
    xf = x.reshape(B, Cin, HW).astype(jnp.float32)

    # Shape-only constants (built once per trace on host).
    pool1 = _pool_select_mats(H, W)              # (4, HW,     H2*W2)
    pool2 = _pool_select_mats(H2, W2)            # (4, H2*W2,  H4*W4)
    pool3 = _pool_select_mats(H4, W4)            # (4, H4*W4,  H8*W8)
    t7 = _conv_tap_mats(H2, W2, 7)
    t5 = _conv_tap_mats(H4, W4, 5)
    t3 = _conv_tap_mats(H8, W8, 3)
    u3 = _upsample_flat_mat(H8, W8, H4, W4)      # (H8*W8, H4*W4)
    u2 = _upsample_flat_mat(H4, W4, H2, W2)      # (H4*W4, H2*W2)
    u1 = _upsample_flat_mat(H2, W2, H, W)        # (H2*W2, HW)

    # Conv weights folded (with zero padding) into flat conv matrices.
    m_d1 = _fold_conv(p["w_d1"], t7)             # (Cin, H2*W2, H2*W2)
    m_d2 = _fold_conv(p["w_d2"], t5)[0]          # (H4*W4, H4*W4)
    m_d3a = _fold_conv(p["w_d3a"], t3)[0]        # (H8*W8, H8*W8)
    m_d3b = _fold_conv(p["w_d3b"], t3)[0]
    m_c2 = _fold_conv(p["w_c2"], t5)[0]
    m_c1 = _fold_conv(p["w_c1"], t7)[0]          # (H2*W2, H2*W2)

    cbias = jnp.stack([p["b_d1"][0], p["b_d2"][0], p["b_d3a"][0],
                       p["b_d3b"][0], p["b_c2"][0], p["b_c1"][0]]).astype(jnp.float32)
    b_mid = p["b_mid"][:, None].astype(jnp.float32)   # (Cout, 1)
    b_b1 = p["b_b1"][:, None].astype(jnp.float32)     # (Cout, 1)

    kernel = _make_fpa_kernel(Cin, Cout, H, W, bblk)

    def c2d(shape):                                   # grid-invariant 2-D operand
        return pl.BlockSpec(shape, lambda g: (0, 0))

    def c3d(shape):                                   # grid-invariant 3-D operand
        return pl.BlockSpec(shape, lambda g: (0, 0, 0))

    # TODO(synk): for real sizes (Cout >= 128, H = W >= 64) add a Cout tile axis
    # to the grid (stream mid + fuse over Cout blocks) and cast the matmul
    # operands to bf16 so the resident set fits v7x's 64 MiB VMEM.
    out = pl.pallas_call(
        kernel,
        out_shape=jax.ShapeDtypeStruct((B, Cout, HW), jnp.float32),
        grid=(B // bblk,),
        in_specs=[
            pl.BlockSpec((bblk, Cin, HW), lambda g: (g, 0, 0)),   # x (single DMA)
            c2d((Cout, Cin)),                                     # w_mid
            c2d((Cout, 1)),                                       # b_mid
            c2d((Cout, Cin)),                                     # w_b1
            c2d((Cout, 1)),                                       # b_b1
            c3d((4, HW, H2 * W2)),                                # pool sel L1
            c3d((4, H2 * W2, H4 * W4)),                           # pool sel L2
            c3d((4, H4 * W4, H8 * W8)),                           # pool sel L3
            c3d((Cin, H2 * W2, H2 * W2)),                         # folded 7x7 down1
            c2d((H4 * W4, H4 * W4)),                              # folded 5x5 down2
            c2d((H8 * W8, H8 * W8)),                              # folded 3x3 down3a
            c2d((H8 * W8, H8 * W8)),                              # folded 3x3 down3b
            c2d((H4 * W4, H4 * W4)),                              # folded 5x5 conv2
            c2d((H2 * W2, H2 * W2)),                              # folded 7x7 conv1
            c2d((H8 * W8, H4 * W4)),                              # upsample 8->4
            c2d((H4 * W4, H2 * W2)),                              # upsample 4->2
            c2d((H2 * W2, HW)),                                   # upsample 2->1
            pl.BlockSpec(memory_space=pltpu.MemorySpace.SMEM),    # conv biases
        ],
        out_specs=pl.BlockSpec((bblk, Cout, HW), lambda g: (g, 0, 0)),
        compiler_params=pltpu.CompilerParams(
            dimension_semantics=("parallel",),
            vmem_limit_bytes=32 * 1024 * 1024,
        ),
    )(xf, p["w_mid"].astype(jnp.float32), b_mid, p["w_b1"].astype(jnp.float32), b_b1,
      jnp.asarray(pool1), jnp.asarray(pool2), jnp.asarray(pool3),
      m_d1, m_d2, m_d3a, m_d3b, m_c2, m_c1,
      jnp.asarray(u3), jnp.asarray(u2), jnp.asarray(u1), cbias)

    return out.reshape(B, Cout, H, W)


# ---------------------------------------------------------------------------
# Parameter init (BN folded into conv weight/bias, deterministic)
# ---------------------------------------------------------------------------
def init_params(key, in_ch, out_ch):
    ks = jax.random.split(key, 16)

    def rnd(k, shape, scale):
        return scale * jax.random.normal(k, shape, jnp.float32)

    return {
        "w_mid": rnd(ks[0], (out_ch, in_ch), 0.3), "b_mid": rnd(ks[1], (out_ch,), 0.1),
        "w_b1":  rnd(ks[2], (out_ch, in_ch), 0.3), "b_b1":  rnd(ks[3], (out_ch,), 0.1),
        "w_d1":  rnd(ks[4], (1, in_ch, 7, 7), 0.1), "b_d1":  rnd(ks[5], (1,), 0.1),
        "w_d2":  rnd(ks[6], (1, 1, 5, 5), 0.2),     "b_d2":  rnd(ks[7], (1,), 0.1),
        "w_d3a": rnd(ks[8], (1, 1, 3, 3), 0.3),     "b_d3a": rnd(ks[9], (1,), 0.1),
        "w_d3b": rnd(ks[10], (1, 1, 3, 3), 0.3),    "b_d3b": rnd(ks[11], (1,), 0.1),
        "w_c2":  rnd(ks[12], (1, 1, 5, 5), 0.2),    "b_c2":  rnd(ks[13], (1,), 0.1),
        "w_c1":  rnd(ks[14], (1, 1, 7, 7), 0.1),    "b_c1":  rnd(ks[15], (1,), 0.1),
    }


if __name__ == "__main__":
    B, in_ch, out_ch, H, W = 4, 4, 4, 16, 16      # exercises bblk=2 and a 2-step grid

    key = jax.random.PRNGKey(0)
    kx, kp = jax.random.split(key)
    x = jax.random.normal(kx, (B, in_ch, H, W), jnp.float32)
    params = init_params(kp, in_ch, out_ch)

    out = jax.jit(fpa_forward)(x, params)
    out = jax.block_until_ready(out)

    assert out.shape == (B, out_ch, H, W), out.shape
    assert bool(jnp.all(jnp.isfinite(out)))
    print("KERNEL_OK")
</pallas_src>

<mosaic_0001>
module attributes {stable_mosaic.version = 11 : i64} {
  func.func @kernel(%arg0: i32, %arg1: memref<2x4x256xf32, #tpu.memory_space<vmem>>, %arg2: memref<4x4xf32, #tpu.memory_space<vmem>>, %arg3: memref<4x1xf32, #tpu.memory_space<vmem>>, %arg4: memref<4x4xf32, #tpu.memory_space<vmem>>, %arg5: memref<4x1xf32, #tpu.memory_space<vmem>>, %arg6: memref<4x256x64xf32, #tpu.memory_space<vmem>>, %arg7: memref<4x64x16xf32, #tpu.memory_space<vmem>>, %arg8: memref<4x16x4xf32, #tpu.memory_space<vmem>>, %arg9: memref<4x64x64xf32, #tpu.memory_space<vmem>>, %arg10: memref<16x16xf32, #tpu.memory_space<vmem>>, %arg11: memref<4x4xf32, #tpu.memory_space<vmem>>, %arg12: memref<4x4xf32, #tpu.memory_space<vmem>>, %arg13: memref<16x16xf32, #tpu.memory_space<vmem>>, %arg14: memref<64x64xf32, #tpu.memory_space<vmem>>, %arg15: memref<4x16xf32, #tpu.memory_space<vmem>>, %arg16: memref<16x64xf32, #tpu.memory_space<vmem>>, %arg17: memref<64x256xf32, #tpu.memory_space<vmem>>, %arg18: memref<6xf32, #tpu.memory_space<smem>>, %arg19: memref<2x4x256xf32, #tpu.memory_space<vmem>>) attributes {dimension_semantics = [#tpu.dimension_semantics<parallel>], iteration_bounds = array<i64: 2>, scalar_prefetch = 0 : i64, scratch_operands = 0 : i64, tpu.core_type = #tpu.core_type<tc>, window_params = [{transform_indices = @transform_0, window_bounds = array<i64: 2, 4, 256>}, {pipeline_mode = #tpu.pipeline_mode<synchronous>, transform_indices = @transform_1, window_bounds = array<i64: 4, 4>}, {pipeline_mode = #tpu.pipeline_mode<synchronous>, transform_indices = @transform_2, window_bounds = array<i64: 4, 1>}, {pipeline_mode = #tpu.pipeline_mode<synchronous>, transform_indices = @transform_3, window_bounds = array<i64: 4, 4>}, {pipeline_mode = #tpu.pipeline_mode<synchronous>, transform_indices = @transform_4, window_bounds = array<i64: 4, 1>}, {pipeline_mode = #tpu.pipeline_mode<synchronous>, transform_indices = @transform_5, window_bounds = array<i64: 4, 256, 64>}, {pipeline_mode = #tpu.pipeline_mode<synchronous>, transform_indices = @transform_6, window_bounds = array<i64: 4, 64, 16>}, {pipeline_mode = #tpu.pipeline_mode<synchronous>, transform_indices = @transform_7, window_bounds = array<i64: 4, 16, 4>}, {pipeline_mode = #tpu.pipeline_mode<synchronous>, transform_indices = @transform_8, window_bounds = array<i64: 4, 64, 64>}, {pipeline_mode = #tpu.pipeline_mode<synchronous>, transform_indices = @transform_9, window_bounds = array<i64: 16, 16>}, {pipeline_mode = #tpu.pipeline_mode<synchronous>, transform_indices = @transform_10, window_bounds = array<i64: 4, 4>}, {pipeline_mode = #tpu.pipeline_mode<synchronous>, transform_indices = @transform_11, window_bounds = array<i64: 4, 4>}, {pipeline_mode = #tpu.pipeline_mode<synchronous>, transform_indices = @transform_12, window_bounds = array<i64: 16, 16>}, {pipeline_mode = #tpu.pipeline_mode<synchronous>, transform_indices = @transform_13, window_bounds = array<i64: 64, 64>}, {pipeline_mode = #tpu.pipeline_mode<synchronous>, transform_indices = @transform_14, window_bounds = array<i64: 4, 16>}, {pipeline_mode = #tpu.pipeline_mode<synchronous>, transform_indices = @transform_15, window_bounds = array<i64: 16, 64>}, {pipeline_mode = #tpu.pipeline_mode<synchronous>, transform_indices = @transform_16, window_bounds = array<i64: 64, 256>}, {transform_indices = @transform_17, window_bounds = array<i64: 6>}, {transform_indices = @transform_18, window_bounds = array<i64: 2, 4, 256>}]} {
    %cst = arith.constant 3.906250e-03 : f32
    %0 = vector.broadcast %cst : f32 to vector<256x1xf32>
    %c0 = arith.constant 0 : index
    %c0_0 = arith.constant 0 : index
    %1 = vector.load %arg2[%c0, %c0_0] : memref<4x4xf32, #tpu.memory_space<vmem>>, vector<4x4xf32>
    %c0_1 = arith.constant 0 : index
    %c0_2 = arith.constant 0 : index
    %2 = vector.load %arg4[%c0_1, %c0_2] : memref<4x4xf32, #tpu.memory_space<vmem>>, vector<4x4xf32>
    %c0_3 = arith.constant 0 : index
    %c0_4 = arith.constant 0 : index
    %3 = vector.load %arg3[%c0_3, %c0_4] : memref<4x1xf32, #tpu.memory_space<vmem>>, vector<4x1xf32>
    %c0_5 = arith.constant 0 : index
    %c0_6 = arith.constant 0 : index
    %4 = vector.load %arg5[%c0_5, %c0_6] : memref<4x1xf32, #tpu.memory_space<vmem>>, vector<4x1xf32>
    %c0_7 = arith.constant 0 : index
    %c0_8 = arith.constant 0 : index
    %c0_9 = arith.constant 0 : index
    %5 = vector.load %arg1[%c0_7, %c0_8, %c0_9] : memref<2x4x256xf32, #tpu.memory_space<vmem>>, vector<1x4x256xf32>
    %6 = vector.shape_cast %5 : vector<1x4x256xf32> to vector<4x256xf32>
    %cst_10 = arith.constant dense<0.000000e+00> : vector<4x256xf32>
    %7 = tpu.matmul %1, %6, %cst_10 {dimension_numbers = #tpu.dot_dimension_numbers<[1], [0], [0], [1], [0, 0, 1, 1], [], []>} : vector<4x4xf32>, vector<4x256xf32>, vector<4x256xf32> -> vector<4x256xf32>
    %8 = vector.broadcast %3 : vector<4x1xf32> to vector<4x256xf32>
    %9 = arith.addf %7, %8 : vector<4x256xf32>
    %cst_11 = arith.constant 0.000000e+00 : f32
    %10 = vector.broadcast %cst_11 : f32 to vector<4x256xf32>
    %11 = arith.maximumf %9, %10 : vector<4x256xf32>
    %cst_12 = arith.constant dense<0.000000e+00> : vector<4x1xf32>
    %12 = tpu.matmul %6, %0, %cst_12 {dimension_numbers = #tpu.dot_dimension_numbers<[1], [0], [0], [1], [0, 0, 1, 1], [], []>} : vector<4x256xf32>, vector<256x1xf32>, vector<4x1xf32> -> vector<4x1xf32>
    %cst_13 = arith.constant dense<0.000000e+00> : vector<4x1xf32>
    %13 = tpu.matmul %2, %12, %cst_13 {dimension_numbers = #tpu.dot_dimension_numbers<[1], [0], [0], [1], [0, 0, 1, 1], [], []>} : vector<4x4xf32>, vector<4x1xf32>, vector<4x1xf32> -> vector<4x1xf32>
    %14 = arith.addf %13, %4 : vector<4x1xf32>
    %cst_14 = arith.constant 0.000000e+00 : f32
    %15 = vector.broadcast %cst_14 : f32 to vector<4x1xf32>
    %16 = arith.maximumf %14, %15 : vector<4x1xf32>
    %c0_15 = arith.constant 0 : index
    %c0_16 = arith.constant 0 : index
    %c0_17 = arith.constant 0 : index
    %17 = vector.load %arg6[%c0_15, %c0_16, %c0_17] : memref<4x256x64xf32, #tpu.memory_space<vmem>>, vector<1x256x64xf32>
    %18 = vector.shape_cast %17 : vector<1x256x64xf32> to vector<256x64xf32>
    %cst_18 = arith.constant dense<0.000000e+00> : vector<4x64xf32>
    %19 = tpu.matmul %6, %18, %cst_18 {dimension_numbers = #tpu.dot_dimension_numbers<[1], [0], [0], [1], [0, 0, 1, 1], [], []>} : vector<4x256xf32>, vector<256x64xf32>, vector<4x64xf32> -> vector<4x64xf32>
    %c1 = arith.constant 1 : index
    %c0_19 = arith.constant 0 : index
    %c0_20 = arith.constant 0 : index
    %20 = vector.load %arg6[%c1, %c0_19, %c0_20] : memref<4x256x64xf32, #tpu.memory_space<vmem>>, vector<1x256x64xf32>
    %21 = vector.shape_cast %20 : vector<1x256x64xf32> to vector<256x64xf32>
    %cst_21 = arith.constant dense<0.000000e+00> : vector<4x64xf32>
    %22 = tpu.matmul %6, %21, %cst_21 {dimension_numbers = #tpu.dot_dimension_numbers<[1], [0], [0], [1], [0, 0, 1, 1], [], []>} : vector<4x256xf32>, vector<256x64xf32>, vector<4x64xf32> -> vector<4x64xf32>
    %23 = arith.maximumf %19, %22 : vector<4x64xf32>
    %c2 = arith.constant 2 : index
    %c0_22 = arith.constant 0 : index
    %c0_23 = arith.constant 0 : index
    %24 = vector.load %arg6[%c2, %c0_22, %c0_23] : memref<4x256x64xf32, #tpu.memory_space<vmem>>, vector<1x256x64xf32>
    %25 = vector.shape_cast %24 : vector<1x256x64xf32> to vector<256x64xf32>
    %cst_24 = arith.constant dense<0.000000e+00> : vector<4x64xf32>
    %26 = tpu.matmul %6, %25, %cst_24 {dimension_numbers = #tpu.dot_dimension_numbers<[1], [0], [0], [1], [0, 0, 1, 1], [], []>} : vector<4x256xf32>, vector<256x64xf32>, vector<4x64xf32> -> vector<4x64xf32>
    %27 = arith.maximumf %23, %26 : vector<4x64xf32>
    %c3 = arith.constant 3 : index
    %c0_25 = arith.constant 0 : index
    %c0_26 = arith.constant 0 : index
    %28 = vector.load %arg6[%c3, %c0_25, %c0_26] : memref<4x256x64xf32, #tpu.memory_space<vmem>>, vector<1x256x64xf32>
    %29 = vector.shape_cast %28 : vector<1x256x64xf32> to vector<256x64xf32>
    %cst_27 = arith.constant dense<0.000000e+00> : vector<4x64xf32>
    %30 = tpu.matmul %6, %29, %cst_27 {dimension_numbers = #tpu.dot_dimension_numbers<[1], [0], [0], [1], [0, 0, 1, 1], [], []>} : vector<4x256xf32>, vector<256x64xf32>, vector<4x64xf32> -> vector<4x64xf32>
    %31 = arith.maximumf %27, %30 : vector<4x64xf32>
    %32 = vector.extract_strided_slice %31 {offsets = [0, 0], sizes = [1, 64], strides = [1, 1]} : vector<4x64xf32> to vector<1x64xf32>
    %c0_28 = arith.constant 0 : index
    %c0_29 = arith.constant 0 : index
    %c0_30 = arith.constant 0 : index
    %33 = vector.load %arg9[%c0_28, %c0_29, %c0_30] : memref<4x64x64xf32, #tpu.memory_space<vmem>>, vector<1x64x64xf32>
    %34 = vector.shape_cast %33 : vector<1x64x64xf32> to vector<64x64xf32>
    %cst_31 = arith.constant dense<0.000000e+00> : vector<1x64xf32>
    %35 = tpu.matmul %32, %34, %cst_31 {dimension_numbers = #tpu.dot_dimension_numbers<[1], [0], [0], [1], [0, 0, 1, 1], [], []>} : vector<1x64xf32>, vector<64x64xf32>, vector<1x64xf32> -> vector<1x64xf32>
    %36 = vector.extract_strided_slice %31 {offsets = [1, 0], sizes = [1, 64], strides = [1, 1]} : vector<4x64xf32> to vector<1x64xf32>
    %c1_32 = arith.constant 1 : index
    %c0_33 = arith.constant 0 : index
    %c0_34 = arith.constant 0 : index
    %37 = vector.load %arg9[%c1_32, %c0_33, %c0_34] : memref<4x64x64xf32, #tpu.memory_space<vmem>>, vector<1x64x64xf32>
    %38 = vector.shape_cast %37 : vector<1x64x64xf32> to vector<64x64xf32>
    %cst_35 = arith.constant dense<0.000000e+00> : vector<1x64xf32>
    %39 = tpu.matmul %36, %38, %cst_35 {dimension_numbers = #tpu.dot_dimension_numbers<[1], [0], [0], [1], [0, 0, 1, 1], [], []>} : vector<1x64xf32>, vector<64x64xf32>, vector<1x64xf32> -> vector<1x64xf32>
    %40 = arith.addf %35, %39 : vector<1x64xf32>
    %41 = vector.extract_strided_slice %31 {offsets = [2, 0], sizes = [1, 64], strides = [1, 1]} : vector<4x64xf32> to vector<1x64xf32>
    %c2_36 = arith.constant 2 : index
    %c0_37 = arith.constant 0 : index
    %c0_38 = arith.constant 0 : index
    %42 = vector.load %arg9[%c2_36, %c0_37, %c0_38] : memref<4x64x64xf32, #tpu.memory_space<vmem>>, vector<1x64x64xf32>
    %43 = vector.shape_cast %42 : vector<1x64x64xf32> to vector<64x64xf32>
    %cst_39 = arith.constant dense<0.000000e+00> : vector<1x64xf32>
    %44 = tpu.matmul %41, %43, %cst_39 {dimension_numbers = #tpu.dot_dimension_numbers<[1], [0], [0], [1], [0, 0, 1, 1], [], []>} : vector<1x64xf32>, vector<64x64xf32>, vector<1x64xf32> -> vector<1x64xf32>
    %45 = arith.addf %40, %44 : vector<1x64xf32>
    %46 = vector.extract_strided_slice %31 {offsets = [3, 0], sizes = [1, 64], strides = [1, 1]} : vector<4x64xf32> to vector<1x64xf32>
    %c3_40 = arith.constant 3 : index
    %c0_41 = arith.constant 0 : index
    %c0_42 = arith.constant 0 : index
    %47 = vector.load %arg9[%c3_40, %c0_41, %c0_42] : memref<4x64x64xf32, #tpu.memory_space<vmem>>, vector<1x64x64xf32>
    %48 = vector.shape_cast %47 : vector<1x64x64xf32> to vector<64x64xf32>
    %cst_43 = arith.constant dense<0.000000e+00> : vector<1x64xf32>
    %49 = tpu.matmul %46, %48, %cst_43 {dimension_numbers = #tpu.dot_dimension_numbers<[1], [0], [0], [1], [0, 0, 1, 1], [], []>} : vector<1x64xf32>, vector<64x64xf32>, vector<1x64xf32> -> vector<1x64xf32>
    %50 = arith.addf %45, %49 : vector<1x64xf32>
    %c0_44 = arith.constant 0 : index
    %51 = memref.load %arg18[%c0_44] : memref<6xf32, #tpu.memory_space<smem>>
    %52 = vector.broadcast %51 : f32 to vector<1x64xf32>
    %53 = arith.addf %50, %52 : vector<1x64xf32>
    %cst_45 = arith.constant 0.000000e+00 : f32
    %54 = vector.broadcast %cst_45 : f32 to vector<1x64xf32>
    %55 = arith.maximumf %53, %54 : vector<1x64xf32>
    %c0_46 = arith.constant 0 : index
    %c0_47 = arith.constant 0 : index
    %c0_48 = arith.constant 0 : index
    %56 = vector.load %arg7[%c0_46, %c0_47, %c0_48] : memref<4x64x16xf32, #tpu.memory_space<vmem>>, vector<1x64x16xf32>
    %57 = vector.shape_cast %56 : vector<1x64x16xf32> to vector<64x16xf32>
    %cst_49 = arith.constant dense<0.000000e+00> : vector<1x16xf32>
    %58 = tpu.matmul %55, %57, %cst_49 {dimension_numbers = #tpu.dot_dimension_numbers<[1], [0], [0], [1], [0, 0, 1, 1], [], []>} : vector<1x64xf32>, vector<64x16xf32>, vector<1x16xf32> -> vector<1x16xf32>
    %c1_50 = arith.constant 1 : index
    %c0_51 = arith.constant 0 : index
    %c0_52 = arith.constant 0 : index
    %59 = vector.load %arg7[%c1_50, %c0_51, %c0_52] : memref<4x64x16xf32, #tpu.memory_space<vmem>>, vector<1x64x16xf32>
    %60 = vector.shape_cast %59 : vector<1x64x16xf32> to vector<64x16xf32>
    %cst_53 = arith.constant dense<0.000000e+00> : vector<1x16xf32>
    %61 = tpu.matmul %55, %60, %cst_53 {dimension_numbers = #tpu.dot_dimension_numbers<[1], [0], [0], [1], [0, 0, 1, 1], [], []>} : vector<1x64xf32>, vector<64x16xf32>, vector<1x16xf32> -> vector<1x16xf32>
    %62 = arith.maximumf %58, %61 : vector<1x16xf32>
    %c2_54 = arith.constant 2 : index
    %c0_55 = arith.constant 0 : index
    %c0_56 = arith.constant 0 : index
    %63 = vector.load %arg7[%c2_54, %c0_55, %c0_56] : memref<4x64x16xf32, #tpu.memory_space<vmem>>, vector<1x64x16xf32>
    %64 = vector.shape_cast %63 : vector<1x64x16xf32> to vector<64x16xf32>
    %cst_57 = arith.constant dense<0.000000e+00> : vector<1x16xf32>
    %65 = tpu.matmul %55, %64, %cst_57 {dimension_numbers = #tpu.dot_dimension_numbers<[1], [0], [0], [1], [0, 0, 1, 1], [], []>} : vector<1x64xf32>, vector<64x16xf32>, vector<1x16xf32> -> vector<1x16xf32>
    %66 = arith.maximumf %62, %65 : vector<1x16xf32>
    %c3_58 = arith.constant 3 : index
    %c0_59 = arith.constant 0 : index
    %c0_60 = arith.constant 0 : index
    %67 = vector.load %arg7[%c3_58, %c0_59, %c0_60] : memref<4x64x16xf32, #tpu.memory_space<vmem>>, vector<1x64x16xf32>
    %68 = vector.shape_cast %67 : vector<1x64x16xf32> to vector<64x16xf32>
    %cst_61 = arith.constant dense<0.000000e+00> : vector<1x16xf32>
    %69 = tpu.matmul %55, %68, %cst_61 {dimension_numbers = #tpu.dot_dimension_numbers<[1], [0], [0], [1], [0, 0, 1, 1], [], []>} : vector<1x64xf32>, vector<64x16xf32>, vector<1x16xf32> -> vector<1x16xf32>
    %70 = arith.maximumf %66, %69 : vector<1x16xf32>
    %c0_62 = arith.constant 0 : index
    %c0_63 = arith.constant 0 : index
    %71 = vector.load %arg10[%c0_62, %c0_63] : memref<16x16xf32, #tpu.memory_space<vmem>>, vector<16x16xf32>
    %cst_64 = arith.constant dense<0.000000e+00> : vector<1x16xf32>
    %72 = tpu.matmul %70, %71, %cst_64 {dimension_numbers = #tpu.dot_dimension_numbers<[1], [0], [0], [1], [0, 0, 1, 1], [], []>} : vector<1x16xf32>, vector<16x16xf32>, vector<1x16xf32> -> vector<1x16xf32>
    %c1_65 = arith.constant 1 : index
    %73 = memref.load %arg18[%c1_65] : memref<6xf32, #tpu.memory_space<smem>>
    %74 = vector.broadcast %73 : f32 to vector<1x16xf32>
    %75 = arith.addf %72, %74 : vector<1x16xf32>
    %cst_66 = arith.constant 0.000000e+00 : f32
    %76 = vector.broadcast %cst_66 : f32 to vector<1x16xf32>
    %77 = arith.maximumf %75, %76 : vector<1x16xf32>
    %c0_67 = arith.constant 0 : index
    %c0_68 = arith.constant 0 : index
    %c0_69 = arith.constant 0 : index
    %78 = vector.load %arg8[%c0_67, %c0_68, %c0_69] : memref<4x16x4xf32, #tpu.memory_space<vmem>>, vector<1x16x4xf32>
    %79 = vector.shape_cast %78 : vector<1x16x4xf32> to vector<16x4xf32>
    %cst_70 = arith.constant dense<0.000000e+00> : vector<1x4xf32>
    %80 = tpu.matmul %77, %79, %cst_70 {dimension_numbers = #tpu.dot_dimension_numbers<[1], [0], [0], [1], [0, 0, 1, 1], [], []>} : vector<1x16xf32>, vector<16x4xf32>, vector<1x4xf32> -> vector<1x4xf32>
    %c1_71 = arith.constant 1 : index
    %c0_72 = arith.constant 0 : index
    %c0_73 = arith.constant 0 : index
    %81 = vector.load %arg8[%c1_71, %c0_72, %c0_73] : memref<4x16x4xf32, #tpu.memory_space<vmem>>, vector<1x16x4xf32>
    %82 = vector.shape_cast %81 : vector<1x16x4xf32> to vector<16x4xf32>
    %cst_74 = arith.constant dense<0.000000e+00> : vector<1x4xf32>
    %83 = tpu.matmul %77, %82, %cst_74 {dimension_numbers = #tpu.dot_dimension_numbers<[1], [0], [0], [1], [0, 0, 1, 1], [], []>} : vector<1x16xf32>, vector<16x4xf32>, vector<1x4xf32> -> vector<1x4xf32>
    %84 = arith.maximumf %80, %83 : vector<1x4xf32>
    %c2_75 = arith.constant 2 : index
    %c0_76 = arith.constant 0 : index
    %c0_77 = arith.constant 0 : index
    %85 = vector.load %arg8[%c2_75, %c0_76, %c0_77] : memref<4x16x4xf32, #tpu.memory_space<vmem>>, vector<1x16x4xf32>
    %86 = vector.shape_cast %85 : vector<1x16x4xf32> to vector<16x4xf32>
    %cst_78 = arith.constant dense<0.000000e+00> : vector<1x4xf32>
    %87 = tpu.matmul %77, %86, %cst_78 {dimension_numbers = #tpu.dot_dimension_numbers<[1], [0], [0], [1], [0, 0, 1, 1], [], []>} : vector<1x16xf32>, vector<16x4xf32>, vector<1x4xf32> -> vector<1x4xf32>
    %88 = arith.maximumf %84, %87 : vector<1x4xf32>
    %c3_79 = arith.constant 3 : index
    %c0_80 = arith.constant 0 : index
    %c0_81 = arith.constant 0 : index
    %89 = vector.load %arg8[%c3_79, %c0_80, %c0_81] : memref<4x16x4xf32, #tpu.memory_space<vmem>>, vector<1x16x4xf32>
    %90 = vector.shape_cast %89 : vector<1x16x4xf32> to vector<16x4xf32>
    %cst_82 = arith.constant dense<0.000000e+00> : vector<1x4xf32>
    %91 = tpu.matmul %77, %90, %cst_82 {dimension_numbers = #tpu.dot_dimension_numbers<[1], [0], [0], [1], [0, 0, 1, 1], [], []>} : vector<1x16xf32>, vector<16x4xf32>, vector<1x4xf32> -> vector<1x4xf32>
    %92 = arith.maximumf %88, %91 : vector<1x4xf32>
    %c0_83 = arith.constant 0 : index
    %c0_84 = arith.constant 0 : index
    %93 = vector.load %arg11[%c0_83, %c0_84] : memref<4x4xf32, #tpu.memory_space<vmem>>, vector<4x4xf32>
    %cst_85 = arith.constant dense<0.000000e+00> : vector<1x4xf32>
    %94 = tpu.matmul %92, %93, %cst_85 {dimension_numbers = #tpu.dot_dimension_numbers<[1], [0], [0], [1], [0, 0, 1, 1], [], []>} : vector<1x4xf32>, vector<4x4xf32>, vector<1x4xf32> -> vector<1x4xf32>
    %c2_86 = arith.constant 2 : index
    %95 = memref.load %arg18[%c2_86] : memref<6xf32, #tpu.memory_space<smem>>
    %96 = vector.broadcast %95 : f32 to vector<1x4xf32>
    %97 = arith.addf %94, %96 : vector<1x4xf32>
    %cst_87 = arith.constant 0.000000e+00 : f32
    %98 = vector.broadcast %cst_87 : f32 to vector<1x4xf32>
    %99 = arith.maximumf %97, %98 : vector<1x4xf32>
    %c0_88 = arith.constant 0 : index
    %c0_89 = arith.constant 0 : index
    %100 = vector.load %arg12[%c0_88, %c0_89] : memref<4x4xf32, #tpu.memory_space<vmem>>, vector<4x4xf32>
    %cst_90 = arith.constant dense<0.000000e+00> : vector<1x4xf32>
    %101 = tpu.matmul %99, %100, %cst_90 {dimension_numbers = #tpu.dot_dimension_numbers<[1], [0], [0], [1], [0, 0, 1, 1], [], []>} : vector<1x4xf32>, vector<4x4xf32>, vector<1x4xf32> -> vector<1x4xf32>
    %c3_91 = arith.constant 3 : index
    %102 = memref.load %arg18[%c3_91] : memref<6xf32, #tpu.memory_space<smem>>
    %103 = vector.broadcast %102 : f32 to vector<1x4xf32>
    %104 = arith.addf %101, %103 : vector<1x4xf32>
    %cst_92 = arith.constant 0.000000e+00 : f32
    %105 = vector.broadcast %cst_92 : f32 to vector<1x4xf32>
    %106 = arith.maximumf %104, %105 : vector<1x4xf32>
    %c0_93 = arith.constant 0 : index
    %c0_94 = arith.constant 0 : index
    %107 = vector.load %arg13[%c0_93, %c0_94] : memref<16x16xf32, #tpu.memory_space<vmem>>, vector<16x16xf32>
    %cst_95 = arith.constant dense<0.000000e+00> : vector<1x16xf32>
    %108 = tpu.matmul %77, %107, %cst_95 {dimension_numbers = #tpu.dot_dimension_numbers<[1], [0], [0], [1], [0, 0, 1, 1], [], []>} : vector<1x16xf32>, vector<16x16xf32>, vector<1x16xf32> -> vector<1x16xf32>
    %c4 = arith.constant 4 : index
    %109 = memref.load %arg18[%c4] : memref<6xf32, #tpu.memory_space<smem>>
    %110 = vector.broadcast %109 : f32 to vector<1x16xf32>
    %111 = arith.addf %108, %110 : vector<1x16xf32>
    %cst_96 = arith.constant 0.000000e+00 : f32
    %112 = vector.broadcast %cst_96 : f32 to vector<1x16xf32>
    %113 = arith.maximumf %111, %112 : vector<1x16xf32>
    %c0_97 = arith.constant 0 : index
    %c0_98 = arith.constant 0 : index
    %114 = vector.load %arg14[%c0_97, %c0_98] : memref<64x64xf32, #tpu.memory_space<vmem>>, vector<64x64xf32>
    %cst_99 = arith.constant dense<0.000000e+00> : vector<1x64xf32>
    %115 = tpu.matmul %55, %114, %cst_99 {dimension_numbers = #tpu.dot_dimension_numbers<[1], [0], [0], [1], [0, 0, 1, 1], [], []>} : vector<1x64xf32>, vector<64x64xf32>, vector<1x64xf32> -> vector<1x64xf32>
    %c5 = arith.constant 5 : index
    %116 = memref.load %arg18[%c5] : memref<6xf32, #tpu.memory_space<smem>>
    %117 = vector.broadcast %116 : f32 to vector<1x64xf32>
    %118 = arith.addf %115, %117 : vector<1x64xf32>
    %cst_100 = arith.constant 0.000000e+00 : f32
    %119 = vector.broadcast %cst_100 : f32 to vector<1x64xf32>
    %120 = arith.maximumf %118, %119 : vector<1x64xf32>
    %c0_101 = arith.constant 0 : index
    %c0_102 = arith.constant 0 : index
    %121 = vector.load %arg15[%c0_101, %c0_102] : memref<4x16xf32, #tpu.memory_space<vmem>>, vector<4x16xf32>
    %cst_103 = arith.constant dense<0.000000e+00> : vector<1x16xf32>
    %122 = tpu.matmul %106, %121, %cst_103 {dimension_numbers = #tpu.dot_dimension_numbers<[1], [0], [0], [1], [0, 0, 1, 1], [], []>} : vector<1x4xf32>, vector<4x16xf32>, vector<1x16xf32> -> vector<1x16xf32>
    %123 = arith.addf %113, %122 : vector<1x16xf32>
    %c0_104 = arith.constant 0 : index
    %c0_105 = arith.constant 0 : index
    %124 = vector.load %arg16[%c0_104, %c0_105] : memref<16x64xf32, #tpu.memory_space<vmem>>, vector<16x64xf32>
    %cst_106 = arith.constant dense<0.000000e+00> : vector<1x64xf32>
    %125 = tpu.matmul %123, %124, %cst_106 {dimension_numbers = #tpu.dot_dimension_numbers<[1], [0], [0], [1], [0, 0, 1, 1], [], []>} : vector<1x16xf32>, vector<16x64xf32>, vector<1x64xf32> -> vector<1x64xf32>
    %126 = arith.addf %120, %125 : vector<1x64xf32>
    %c0_107 = arith.constant 0 : index
    %c0_108 = arith.constant 0 : index
    %127 = vector.load %arg17[%c0_107, %c0_108] : memref<64x256xf32, #tpu.memory_space<vmem>>, vector<64x256xf32>
    %cst_109 = arith.constant dense<0.000000e+00> : vector<1x256xf32>
    %128 = tpu.matmul %126, %127, %cst_109 {dimension_numbers = #tpu.dot_dimension_numbers<[1], [0], [0], [1], [0, 0, 1, 1], [], []>} : vector<1x64xf32>, vector<64x256xf32>, vector<1x256xf32> -> vector<1x256xf32>
    %129 = vector.broadcast %128 : vector<1x256xf32> to vector<4x256xf32>
    %130 = arith.mulf %129, %11 : vector<4x256xf32>
    %131 = vector.broadcast %16 : vector<4x1xf32> to vector<4x256xf32>
    %132 = arith.addf %130, %131 : vector<4x256xf32>
    %c0_110 = arith.constant 0 : index
    %c0_111 = arith.constant 0 : index
    %c0_112 = arith.constant 0 : index
    %133 = vector.load %arg19[%c0_110, %c0_111, %c0_112] : memref<2x4x256xf32, #tpu.memory_space<vmem>>, vector<1x4x256xf32>
    %134 = vector.shape_cast %133 : vector<1x4x256xf32> to vector<4x256xf32>
    %135 = vector.shape_cast %132 : vector<4x256xf32> to vector<1x4x256xf32>
    tpu.vector_store %arg19[%c0_110, %c0_111, %c0_112], %135 {strides = array<i32>} : memref<2x4x256xf32, #tpu.memory_space<vmem>>, vector<1x4x256xf32>,
    %c1_113 = arith.constant 1 : index
    %c0_114 = arith.constant 0 : index
    %c0_115 = arith.constant 0 : index
    %136 = vector.load %arg1[%c1_113, %c0_114, %c0_115] : memref<2x4x256xf32, #tpu.memory_space<vmem>>, vector<1x4x256xf32>
    %137 = vector.shape_cast %136 : vector<1x4x256xf32> to vector<4x256xf32>
    %cst_116 = arith.constant dense<0.000000e+00> : vector<4x256xf32>
    %138 = tpu.matmul %1, %137, %cst_116 {dimension_numbers = #tpu.dot_dimension_numbers<[1], [0], [0], [1], [0, 0, 1, 1], [], []>} : vector<4x4xf32>, vector<4x256xf32>, vector<4x256xf32> -> vector<4x256xf32>
    %139 = vector.broadcast %3 : vector<4x1xf32> to vector<4x256xf32>
    %140 = arith.addf %138, %139 : vector<4x256xf32>
    %cst_117 = arith.constant 0.000000e+00 : f32
    %141 = vector.broadcast %cst_117 : f32 to vector<4x256xf32>
    %142 = arith.maximumf %140, %141 : vector<4x256xf32>
    %cst_118 = arith.constant dense<0.000000e+00> : vector<4x1xf32>
    %143 = tpu.matmul %137, %0, %cst_118 {dimension_numbers = #tpu.dot_dimension_numbers<[1], [0], [0], [1], [0, 0, 1, 1], [], []>} : vector<4x256xf32>, vector<256x1xf32>, vector<4x1xf32> -> vector<4x1xf32>
    %cst_119 = arith.constant dense<0.000000e+00> : vector<4x1xf32>
    %144 = tpu.matmul %2, %143, %cst_119 {dimension_numbers = #tpu.dot_dimension_numbers<[1], [0], [0], [1], [0, 0, 1, 1], [], []>} : vector<4x4xf32>, vector<4x1xf32>, vector<4x1xf32> -> vector<4x1xf32>
    %145 = arith.addf %144, %4 : vector<4x1xf32>
    %cst_120 = arith.constant 0.000000e+00 : f32
    %146 = vector.broadcast %cst_120 : f32 to vector<4x1xf32>
    %147 = arith.maximumf %145, %146 : vector<4x1xf32>
    %c0_121 = arith.constant 0 : index
    %c0_122 = arith.constant 0 : index
    %c0_123 = arith.constant 0 : index
    %148 = vector.load %arg6[%c0_121, %c0_122, %c0_123] : memref<4x256x64xf32, #tpu.memory_space<vmem>>, vector<1x256x64xf32>
    %149 = vector.shape_cast %148 : vector<1x256x64xf32> to vector<256x64xf32>
    %cst_124 = arith.constant dense<0.000000e+00> : vector<4x64xf32>
    %150 = tpu.matmul %137, %149, %cst_124 {dimension_numbers = #tpu.dot_dimension_numbers<[1], [0], [0], [1], [0, 0, 1, 1], [], []>} : vector<4x256xf32>, vector<256x64xf32>, vector<4x64xf32> -> vector<4x64xf32>
    %c1_125 = arith.constant 1 : index
    %c0_126 = arith.constant 0 : index
    %c0_127 = arith.constant 0 : index
    %151 = vector.load %arg6[%c1_125, %c0_126, %c0_127] : memref<4x256x64xf32, #tpu.memory_space<vmem>>, vector<1x256x64xf32>
    %152 = vector.shape_cast %151 : vector<1x256x64xf32> to vector<256x64xf32>
    %cst_128 = arith.constant dense<0.000000e+00> : vector<4x64xf32>
    %153 = tpu.matmul %137, %152, %cst_128 {dimension_numbers = #tpu.dot_dimension_numbers<[1], [0], [0], [1], [0, 0, 1, 1], [], []>} : vector<4x256xf32>, vector<256x64xf32>, vector<4x64xf32> -> vector<4x64xf32>
    %154 = arith.maximumf %150, %153 : vector<4x64xf32>
    %c2_129 = arith.constant 2 : index
    %c0_130 = arith.constant 0 : index
    %c0_131 = arith.constant 0 : index
    %155 = vector.load %arg6[%c2_129, %c0_130, %c0_131] : memref<4x256x64xf32, #tpu.memory_space<vmem>>, vector<1x256x64xf32>
    %156 = vector.shape_cast %155 : vector<1x256x64xf32> to vector<256x64xf32>
    %cst_132 = arith.constant dense<0.000000e+00> : vector<4x64xf32>
    %157 = tpu.matmul %137, %156, %cst_132 {dimension_numbers = #tpu.dot_dimension_numbers<[1], [0], [0], [1], [0, 0, 1, 1], [], []>} : vector<4x256xf32>, vector<256x64xf32>, vector<4x64xf32> -> vector<4x64xf32>
    %158 = arith.maximumf %154, %157 : vector<4x64xf32>
    %c3_133 = arith.constant 3 : index
    %c0_134 = arith.constant 0 : index
    %c0_135 = arith.constant 0 : index
    %159 = vector.load %arg6[%c3_133, %c0_134, %c0_135] : memref<4x256x64xf32, #tpu.memory_space<vmem>>, vector<1x256x64xf32>
    %160 = vector.shape_cast %159 : vector<1x256x64xf32> to vector<256x64xf32>
    %cst_136 = arith.constant dense<0.000000e+00> : vector<4x64xf32>
    %161 = tpu.matmul %137, %160, %cst_136 {dimension_numbers = #tpu.dot_dimension_numbers<[1], [0], [0], [1], [0, 0, 1, 1], [], []>} : vector<4x256xf32>, vector<256x64xf32>, vector<4x64xf32> -> vector<4x64xf32>
    %162 = arith.maximumf %158, %161 : vector<4x64xf32>
    %163 = vector.extract_strided_slice %162 {offsets = [0, 0], sizes = [1, 64], strides = [1, 1]} : vector<4x64xf32> to vector<1x64xf32>
    %c0_137 = arith.constant 0 : index
    %c0_138 = arith.constant 0 : index
    %c0_139 = arith.constant 0 : index
    %164 = vector.load %arg9[%c0_137, %c0_138, %c0_139] : memref<4x64x64xf32, #tpu.memory_space<vmem>>, vector<1x64x64xf32>
    %165 = vector.shape_cast %164 : vector<1x64x64xf32> to vector<64x64xf32>
    %cst_140 = arith.constant dense<0.000000e+00> : vector<1x64xf32>
    %166 = tpu.matmul %163, %165, %cst_140 {dimension_numbers = #tpu.dot_dimension_numbers<[1], [0], [0], [1], [0, 0, 1, 1], [], []>} : vector<1x64xf32>, vector<64x64xf32>, vector<1x64xf32> -> vector<1x64xf32>
    %167 = vector.extract_strided_slice %162 {offsets = [1, 0], sizes = [1, 64], strides = [1, 1]} : vector<4x64xf32> to vector<1x64xf32>
    %c1_141 = arith.constant 1 : index
    %c0_142 = arith.constant 0 : index
    %c0_143 = arith.constant 0 : index
    %168 = vector.load %arg9[%c1_141, %c0_142, %c0_143] : memref<4x64x64xf32, #tpu.memory_space<vmem>>, vector<1x64x64xf32>
    %169 = vector.shape_cast %168 : vector<1x64x64xf32> to vector<64x64xf32>
    %cst_144 = arith.constant dense<0.000000e+00> : vector<1x64xf32>
    %170 = tpu.matmul %167, %169, %cst_144 {dimension_numbers = #tpu.dot_dimension_numbers<[1], [0], [0], [1], [0, 0, 1, 1], [], []>} : vector<1x64xf32>, vector<64x64xf32>, vector<1x64xf32> -> vector<1x64xf32>
    %171 = arith.addf %166, %170 : vector<1x64xf32>
    %172 = vector.extract_strided_slice %162 {offsets = [2, 0], sizes = [1, 64], strides = [1, 1]} : vector<4x64xf32> to vector<1x64xf32>
    %c2_145 = arith.constant 2 : index
    %c0_146 = arith.constant 0 : index
    %c0_147 = arith.constant 0 : index
    %173 = vector.load %arg9[%c2_145, %c0_146, %c0_147] : memref<4x64x64xf32, #tpu.memory_space<vmem>>, vector<1x64x64xf32>
    %174 = vector.shape_cast %173 : vector<1x64x64xf32> to vector<64x64xf32>
    %cst_148 = arith.constant dense<0.000000e+00> : vector<1x64xf32>
    %175 = tpu.matmul %172, %174, %cst_148 {dimension_numbers = #tpu.dot_dimension_numbers<[1], [0], [0], [1], [0, 0, 1, 1], [], []>} : vector<1x64xf32>, vector<64x64xf32>, vector<1x64xf32> -> vector<1x64xf32>
    %176 = arith.addf %171, %175 : vector<1x64xf32>
    %177 = vector.extract_strided_slice %162 {offsets = [3, 0], sizes = [1, 64], strides = [1, 1]} : vector<4x64xf32> to vector<1x64xf32>
    %c3_149 = arith.constant 3 : index
    %c0_150 = arith.constant 0 : index
    %c0_151 = arith.constant 0 : index
    %178 = vector.load %arg9[%c3_149, %c0_150, %c0_151] : memref<4x64x64xf32, #tpu.memory_space<vmem>>, vector<1x64x64xf32>
    %179 = vector.shape_cast %178 : vector<1x64x64xf32> to vector<64x64xf32>
    %cst_152 = arith.constant dense<0.000000e+00> : vector<1x64xf32>
    %180 = tpu.matmul %177, %179, %cst_152 {dimension_numbers = #tpu.dot_dimension_numbers<[1], [0], [0], [1], [0, 0, 1, 1], [], []>} : vector<1x64xf32>, vector<64x64xf32>, vector<1x64xf32> -> vector<1x64xf32>
    %181 = arith.addf %176, %180 : vector<1x64xf32>
    %c0_153 = arith.constant 0 : index
    %182 = memref.load %arg18[%c0_153] : memref<6xf32, #tpu.memory_space<smem>>
    %183 = vector.broadcast %182 : f32 to vector<1x64xf32>
    %184 = arith.addf %181, %183 : vector<1x64xf32>
    %cst_154 = arith.constant 0.000000e+00 : f32
    %185 = vector.broadcast %cst_154 : f32 to vector<1x64xf32>
    %186 = arith.maximumf %184, %185 : vector<1x64xf32>
    %c0_155 = arith.constant 0 : index
    %c0_156 = arith.constant 0 : index
    %c0_157 = arith.constant 0 : index
    %187 = vector.load %arg7[%c0_155, %c0_156, %c0_157] : memref<4x64x16xf32, #tpu.memory_space<vmem>>, vector<1x64x16xf32>
    %188 = vector.shape_cast %187 : vector<1x64x16xf32> to vector<64x16xf32>
    %cst_158 = arith.constant dense<0.000000e+00> : vector<1x16xf32>
    %189 = tpu.matmul %186, %188, %cst_158 {dimension_numbers = #tpu.dot_dimension_numbers<[1], [0], [0], [1], [0, 0, 1, 1], [], []>} : vector<1x64xf32>, vector<64x16xf32>, vector<1x16xf32> -> vector<1x16xf32>
    %c1_159 = arith.constant 1 : index
    %c0_160 = arith.constant 0 : index
    %c0_161 = arith.constant 0 : index
    %190 = vector.load %arg7[%c1_159, %c0_160, %c0_161] : memref<4x64x16xf32, #tpu.memory_space<vmem>>, vector<1x64x16xf32>
    %191 = vector.shape_cast %190 : vector<1x64x16xf32> to vector<64x16xf32>
    %cst_162 = arith.constant dense<0.000000e+00> : vector<1x16xf32>
    %192 = tpu.matmul %186, %191, %cst_162 {dimension_numbers = #tpu.dot_dimension_numbers<[1], [0], [0], [1], [0, 0, 1, 1], [], []>} : vector<1x64xf32>, vector<64x16xf32>, vector<1x16xf32> -> vector<1x16xf32>
    %193 = arith.maximumf %189, %192 : vector<1x16xf32>
    %c2_163 = arith.constant 2 : index
    %c0_164 = arith.constant 0 : index
    %c0_165 = arith.constant 0 : index
    %194 = vector.load %arg7[%c2_163, %c0_164, %c0_165] : memref<4x64x16xf32, #tpu.memory_space<vmem>>, vector<1x64x16xf32>
    %195 = vector.shape_cast %194 : vector<1x64x16xf32> to vector<64x16xf32>
    %cst_166 = arith.constant dense<0.000000e+00> : vector<1x16xf32>
    %196 = tpu.matmul %186, %195, %cst_166 {dimension_numbers = #tpu.dot_dimension_numbers<[1], [0], [0], [1], [0, 0, 1, 1], [], []>} : vector<1x64xf32>, vector<64x16xf32>, vector<1x16xf32> -> vector<1x16xf32>
    %197 = arith.maximumf %193, %196 : vector<1x16xf32>
    %c3_167 = arith.constant 3 : index
    %c0_168 = arith.constant 0 : index
    %c0_169 = arith.constant 0 : index
    %198 = vector.load %arg7[%c3_167, %c0_168, %c0_169] : memref<4x64x16xf32, #tpu.memory_space<vmem>>, vector<1x64x16xf32>
    %199 = vector.shape_cast %198 : vector<1x64x16xf32> to vector<64x16xf32>
    %cst_170 = arith.constant dense<0.000000e+00> : vector<1x16xf32>
    %200 = tpu.matmul %186, %199, %cst_170 {dimension_numbers = #tpu.dot_dimension_numbers<[1], [0], [0], [1], [0, 0, 1, 1], [], []>} : vector<1x64xf32>, vector<64x16xf32>, vector<1x16xf32> -> vector<1x16xf32>
    %201 = arith.maximumf %197, %200 : vector<1x16xf32>
    %c0_171 = arith.constant 0 : index
    %c0_172 = arith.constant 0 : index
    %202 = vector.load %arg10[%c0_171, %c0_172] : memref<16x16xf32, #tpu.memory_space<vmem>>, vector<16x16xf32>
    %cst_173 = arith.constant dense<0.000000e+00> : vector<1x16xf32>
    %203 = tpu.matmul %201, %202, %cst_173 {dimension_numbers = #tpu.dot_dimension_numbers<[1], [0], [0], [1], [0, 0, 1, 1], [], []>} : vector<1x16xf32>, vector<16x16xf32>, vector<1x16xf32> -> vector<1x16xf32>
    %c1_174 = arith.constant 1 : index
    %204 = memref.load %arg18[%c1_174] : memref<6xf32, #tpu.memory_space<smem>>
    %205 = vector.broadcast %204 : f32 to vector<1x16xf32>
    %206 = arith.addf %203, %205 : vector<1x16xf32>
    %cst_175 = arith.constant 0.000000e+00 : f32
    %207 = vector.broadcast %cst_175 : f32 to vector<1x16xf32>
    %208 = arith.maximumf %206, %207 : vector<1x16xf32>
    %c0_176 = arith.constant 0 : index
    %c0_177 = arith.constant 0 : index
    %c0_178 = arith.constant 0 : index
    %209 = vector.load %arg8[%c0_176, %c0_177, %c0_178] : memref<4x16x4xf32, #tpu.memory_space<vmem>>, vector<1x16x4xf32>
    %210 = vector.shape_cast %209 : vector<1x16x4xf32> to vector<16x4xf32>
    %cst_179 = arith.constant dense<0.000000e+00> : vector<1x4xf32>
    %211 = tpu.matmul %208, %210, %cst_179 {dimension_numbers = #tpu.dot_dimension_numbers<[1], [0], [0], [1], [0, 0, 1, 1], [], []>} : vector<1x16xf32>, vector<16x4xf32>, vector<1x4xf32> -> vector<1x4xf32>
    %c1_180 = arith.constant 1 : index
    %c0_181 = arith.constant 0 : index
    %c0_182 = arith.constant 0 : index
    %212 = vector.load %arg8[%c1_180, %c0_181, %c0_182] : memref<4x16x4xf32, #tpu.memory_space<vmem>>, vector<1x16x4xf32>
    %213 = vector.shape_cast %212 : vector<1x16x4xf32> to vector<16x4xf32>
    %cst_183 = arith.constant dense<0.000000e+00> : vector<1x4xf32>
    %214 = tpu.matmul %208, %213, %cst_183 {dimension_numbers = #tpu.dot_dimension_numbers<[1], [0], [0], [1], [0, 0, 1, 1], [], []>} : vector<1x16xf32>, vector<16x4xf32>, vector<1x4xf32> -> vector<1x4xf32>
    %215 = arith.maximumf %211, %214 : vector<1x4xf32>
    %c2_184 = arith.constant 2 : index
    %c0_185 = arith.constant 0 : index
    %c0_186 = arith.constant 0 : index
    %216 = vector.load %arg8[%c2_184, %c0_185, %c0_186] : memref<4x16x4xf32, #tpu.memory_space<vmem>>, vector<1x16x4xf32>
    %217 = vector.shape_cast %216 : vector<1x16x4xf32> to vector<16x4xf32>
    %cst_187 = arith.constant dense<0.000000e+00> : vector<1x4xf32>
    %218 = tpu.matmul %208, %217, %cst_187 {dimension_numbers = #tpu.dot_dimension_numbers<[1], [0], [0], [1], [0, 0, 1, 1], [], []>} : vector<1x16xf32>, vector<16x4xf32>, vector<1x4xf32> -> vector<1x4xf32>
    %219 = arith.maximumf %215, %218 : vector<1x4xf32>
    %c3_188 = arith.constant 3 : index
    %c0_189 = arith.constant 0 : index
    %c0_190 = arith.constant 0 : index
    %220 = vector.load %arg8[%c3_188, %c0_189, %c0_190] : memref<4x16x4xf32, #tpu.memory_space<vmem>>, vector<1x16x4xf32>
    %221 = vector.shape_cast %220 : vector<1x16x4xf32> to vector<16x4xf32>
    %cst_191 = arith.constant dense<0.000000e+00> : vector<1x4xf32>
    %222 = tpu.matmul %208, %221, %cst_191 {dimension_numbers = #tpu.dot_dimension_numbers<[1], [0], [0], [1], [0, 0, 1, 1], [], []>} : vector<1x16xf32>, vector<16x4xf32>, vector<1x4xf32> -> vector<1x4xf32>
    %223 = arith.maximumf %219, %222 : vector<1x4xf32>
    %c0_192 = arith.constant 0 : index
    %c0_193 = arith.constant 0 : index
    %224 = vector.load %arg11[%c0_192, %c0_193] : memref<4x4xf32, #tpu.memory_space<vmem>>, vector<4x4xf32>
    %cst_194 = arith.constant dense<0.000000e+00> : vector<1x4xf32>
    %225 = tpu.matmul %223, %224, %cst_194 {dimension_numbers = #tpu.dot_dimension_numbers<[1], [0], [0], [1], [0, 0, 1, 1], [], []>} : vector<1x4xf32>, vector<4x4xf32>, vector<1x4xf32> -> vector<1x4xf32>
    %c2_195 = arith.constant 2 : index
    %226 = memref.load %arg18[%c2_195] : memref<6xf32, #tpu.memory_space<smem>>
    %227 = vector.broadcast %226 : f32 to vector<1x4xf32>
    %228 = arith.addf %225, %227 : vector<1x4xf32>
    %cst_196 = arith.constant 0.000000e+00 : f32
    %229 = vector.broadcast %cst_196 : f32 to vector<1x4xf32>
    %230 = arith.maximumf %228, %229 : vector<1x4xf32>
    %c0_197 = arith.constant 0 : index
    %c0_198 = arith.constant 0 : index
    %231 = vector.load %arg12[%c0_197, %c0_198] : memref<4x4xf32, #tpu.memory_space<vmem>>, vector<4x4xf32>
    %cst_199 = arith.constant dense<0.000000e+00> : vector<1x4xf32>
    %232 = tpu.matmul %230, %231, %cst_199 {dimension_numbers = #tpu.dot_dimension_numbers<[1], [0], [0], [1], [0, 0, 1, 1], [], []>} : vector<1x4xf32>, vector<4x4xf32>, vector<1x4xf32> -> vector<1x4xf32>
    %c3_200 = arith.constant 3 : index
    %233 = memref.load %arg18[%c3_200] : memref<6xf32, #tpu.memory_space<smem>>
    %234 = vector.broadcast %233 : f32 to vector<1x4xf32>
    %235 = arith.addf %232, %234 : vector<1x4xf32>
    %cst_201 = arith.constant 0.000000e+00 : f32
    %236 = vector.broadcast %cst_201 : f32 to vector<1x4xf32>
    %237 = arith.maximumf %235, %236 : vector<1x4xf32>
    %c0_202 = arith.constant 0 : index
    %c0_203 = arith.constant 0 : index
    %238 = vector.load %arg13[%c0_202, %c0_203] : memref<16x16xf32, #tpu.memory_space<vmem>>, vector<16x16xf32>
    %cst_204 = arith.constant dense<0.000000e+00> : vector<1x16xf32>
    %239 = tpu.matmul %208, %238, %cst_204 {dimension_numbers = #tpu.dot_dimension_numbers<[1], [0], [0], [1], [0, 0, 1, 1], [], []>} : vector<1x16xf32>, vector<16x16xf32>, vector<1x16xf32> -> vector<1x16xf32>
    %c4_205 = arith.constant 4 : index
    %240 = memref.load %arg18[%c4_205] : memref<6xf32, #tpu.memory_space<smem>>
    %241 = vector.broadcast %240 : f32 to vector<1x16xf32>
    %242 = arith.addf %239, %241 : vector<1x16xf32>
    %cst_206 = arith.constant 0.000000e+00 : f32
    %243 = vector.broadcast %cst_206 : f32 to vector<1x16xf32>
    %244 = arith.maximumf %242, %243 : vector<1x16xf32>
    %c0_207 = arith.constant 0 : index
    %c0_208 = arith.constant 0 : index
    %245 = vector.load %arg14[%c0_207, %c0_208] : memref<64x64xf32, #tpu.memory_space<vmem>>, vector<64x64xf32>
    %cst_209 = arith.constant dense<0.000000e+00> : vector<1x64xf32>
    %246 = tpu.matmul %186, %245, %cst_209 {dimension_numbers = #tpu.dot_dimension_numbers<[1], [0], [0], [1], [0, 0, 1, 1], [], []>} : vector<1x64xf32>, vector<64x64xf32>, vector<1x64xf32> -> vector<1x64xf32>
    %c5_210 = arith.constant 5 : index
    %247 = memref.load %arg18[%c5_210] : memref<6xf32, #tpu.memory_space<smem>>
    %248 = vector.broadcast %247 : f32 to vector<1x64xf32>
    %249 = arith.addf %246, %248 : vector<1x64xf32>
    %cst_211 = arith.constant 0.000000e+00 : f32
    %250 = vector.broadcast %cst_211 : f32 to vector<1x64xf32>
    %251 = arith.maximumf %249, %250 : vector<1x64xf32>
    %c0_212 = arith.constant 0 : index
    %c0_213 = arith.constant 0 : index
    %252 = vector.load %arg15[%c0_212, %c0_213] : memref<4x16xf32, #tpu.memory_space<vmem>>, vector<4x16xf32>
    %cst_214 = arith.constant dense<0.000000e+00> : vector<1x16xf32>
    %253 = tpu.matmul %237, %252, %cst_214 {dimension_numbers = #tpu.dot_dimension_numbers<[1], [0], [0], [1], [0, 0, 1, 1], [], []>} : vector<1x4xf32>, vector<4x16xf32>, vector<1x16xf32> -> vector<1x16xf32>
    %254 = arith.addf %244, %253 : vector<1x16xf32>
    %c0_215 = arith.constant 0 : index
    %c0_216 = arith.constant 0 : index
    %255 = vector.load %arg16[%c0_215, %c0_216] : memref<16x64xf32, #tpu.memory_space<vmem>>, vector<16x64xf32>
    %cst_217 = arith.constant dense<0.000000e+00> : vector<1x64xf32>
    %256 = tpu.matmul %254, %255, %cst_217 {dimension_numbers = #tpu.dot_dimension_numbers<[1], [0], [0], [1], [0, 0, 1, 1], [], []>} : vector<1x16xf32>, vector<16x64xf32>, vector<1x64xf32> -> vector<1x64xf32>
    %257 = arith.addf %251, %256 : vector<1x64xf32>
    %c0_218 = arith.constant 0 : index
    %c0_219 = arith.constant 0 : index
    %258 = vector.load %arg17[%c0_218, %c0_219] : memref<64x256xf32, #tpu.memory_space<vmem>>, vector<64x256xf32>
    %cst_220 = arith.constant dense<0.000000e+00> : vector<1x256xf32>
    %259 = tpu.matmul %257, %258, %cst_220 {dimension_numbers = #tpu.dot_dimension_numbers<[1], [0], [0], [1], [0, 0, 1, 1], [], []>} : vector<1x64xf32>, vector<64x256xf32>, vector<1x256xf32> -> vector<1x256xf32>
    %260 = vector.broadcast %259 : vector<1x256xf32> to vector<4x256xf32>
    %261 = arith.mulf %260, %142 : vector<4x256xf32>
    %262 = vector.broadcast %147 : vector<4x1xf32> to vector<4x256xf32>
    %263 = arith.addf %261, %262 : vector<4x256xf32>
    %c1_221 = arith.constant 1 : index
    %c0_222 = arith.constant 0 : index
    %c0_223 = arith.constant 0 : index
    %264 = vector.load %arg19[%c1_221, %c0_222, %c0_223] : memref<2x4x256xf32, #tpu.memory_space<vmem>>, vector<1x4x256xf32>
    %265 = vector.shape_cast %264 : vector<1x4x256xf32> to vector<4x256xf32>
    %266 = vector.shape_cast %263 : vector<4x256xf32> to vector<1x4x256xf32>
    tpu.vector_store %arg19[%c1_221, %c0_222, %c0_223], %266 {strides = array<i32>} : memref<2x4x256xf32, #tpu.memory_space<vmem>>, vector<1x4x256xf32>,
    return
  }
  func.func @transform_0(%arg0: i32) -> (i32, i32, i32) {
    %c0_i32 = arith.constant 0 : i32
    %c0_i32_0 = arith.constant 0 : i32
    %c0_i32_1 = arith.constant 0 : i32
    return %arg0, %c0_i32, %c0_i32_0 : i32, i32, i32
  }
  func.func @transform_1(%arg0: i32) -> (i32, i32) {
    %c0_i32 = arith.constant 0 : i32
    %c0_i32_0 = arith.constant 0 : i32
    %c0_i32_1 = arith.constant 0 : i32
    return %c0_i32, %c0_i32_0 : i32, i32
  }
  func.func @transform_2(%arg0: i32) -> (i32, i32) {
    %c0_i32 = arith.constant 0 : i32
    %c0_i32_0 = arith.constant 0 : i32
    %c0_i32_1 = arith.constant 0 : i32
    return %c0_i32, %c0_i32_0 : i32, i32
  }
  func.func @transform_3(%arg0: i32) -> (i32, i32) {
    %c0_i32 = arith.constant 0 : i32
    %c0_i32_0 = arith.constant 0 : i32
    %c0_i32_1 = arith.constant 0 : i32
    return %c0_i32, %c0_i32_0 : i32, i32
  }
  func.func @transform_4(%arg0: i32) -> (i32, i32) {
    %c0_i32 = arith.constant 0 : i32
    %c0_i32_0 = arith.constant 0 : i32
    %c0_i32_1 = arith.constant 0 : i32
    return %c0_i32, %c0_i32_0 : i32, i32
  }
  func.func @transform_5(%arg0: i32) -> (i32, i32, i32) {
    %c0_i32 = arith.constant 0 : i32
    %c0_i32_0 = arith.constant 0 : i32
    %c0_i32_1 = arith.constant 0 : i32
    %c0_i32_2 = arith.constant 0 : i32
    return %c0_i32, %c0_i32_0, %c0_i32_1 : i32, i32, i32
  }
  func.func @transform_6(%arg0: i32) -> (i32, i32, i32) {
    %c0_i32 = arith.constant 0 : i32
    %c0_i32_0 = arith.constant 0 : i32
    %c0_i32_1 = arith.constant 0 : i32
    %c0_i32_2 = arith.constant 0 : i32
    return %c0_i32, %c0_i32_0, %c0_i32_1 : i32, i32, i32
  }
  func.func @transform_7(%arg0: i32) -> (i32, i32, i32) {
    %c0_i32 = arith.constant 0 : i32
    %c0_i32_0 = arith.constant 0 : i32
    %c0_i32_1 = arith.constant 0 : i32
    %c0_i32_2 = arith.constant 0 : i32
    return %c0_i32, %c0_i32_0, %c0_i32_1 : i32, i32, i32
  }
  func.func @transform_8(%arg0: i32) -> (i32, i32, i32) {
    %c0_i32 = arith.constant 0 : i32
    %c0_i32_0 = arith.constant 0 : i32
    %c0_i32_1 = arith.constant 0 : i32
    %c0_i32_2 = arith.constant 0 : i32
    return %c0_i32, %c0_i32_0, %c0_i32_1 : i32, i32, i32
  }
  func.func @transform_9(%arg0: i32) -> (i32, i32) {
    %c0_i32 = arith.constant 0 : i32
    %c0_i32_0 = arith.constant 0 : i32
    %c0_i32_1 = arith.constant 0 : i32
    return %c0_i32, %c0_i32_0 : i32, i32
  }
  func.func @transform_10(%arg0: i32) -> (i32, i32) {
    %c0_i32 = arith.constant 0 : i32
    %c0_i32_0 = arith.constant 0 : i32
    %c0_i32_1 = arith.constant 0 : i32
    return %c0_i32, %c0_i32_0 : i32, i32
  }
  func.func @transform_11(%arg0: i32) -> (i32, i32) {
    %c0_i32 = arith.constant 0 : i32
    %c0_i32_0 = arith.constant 0 : i32
    %c0_i32_1 = arith.constant 0 : i32
    return %c0_i32, %c0_i32_0 : i32, i32
  }
  func.func @transform_12(%arg0: i32) -> (i32, i32) {
    %c0_i32 = arith.constant 0 : i32
    %c0_i32_0 = arith.constant 0 : i32
    %c0_i32_1 = arith.constant 0 : i32
    return %c0_i32, %c0_i32_0 : i32, i32
  }
  func.func @transform_13(%arg0: i32) -> (i32, i32) {
    %c0_i32 = arith.constant 0 : i32
    %c0_i32_0 = arith.constant 0 : i32
    %c0_i32_1 = arith.constant 0 : i32
    return %c0_i32, %c0_i32_0 : i32, i32
  }
  func.func @transform_14(%arg0: i32) -> (i32, i32) {
    %c0_i32 = arith.constant 0 : i32
    %c0_i32_0 = arith.constant 0 : i32
    %c0_i32_1 = arith.constant 0 : i32
    return %c0_i32, %c0_i32_0 : i32, i32
  }
  func.func @transform_15(%arg0: i32) -> (i32, i32) {
    %c0_i32 = arith.constant 0 : i32
    %c0_i32_0 = arith.constant 0 : i32
    %c0_i32_1 = arith.constant 0 : i32
    return %c0_i32, %c0_i32_0 : i32, i32
  }
  func.func @transform_16(%arg0: i32) -> (i32, i32) {
    %c0_i32 = arith.constant 0 : i32
    %c0_i32_0 = arith.constant 0 : i32
    %c0_i32_1 = arith.constant 0 : i32
    return %c0_i32, %c0_i32_0 : i32, i32
  }
  func.func @transform_17(%arg0: i32) -> i32 {
    %c0_i32 = arith.constant 0 : i32
    %c0_i32_0 = arith.constant 0 : i32
    return %c0_i32 : i32
  }
  func.func @transform_18(%arg0: i32) -> (i32, i32, i32) {
    %c0_i32 = arith.constant 0 : i32
    %c0_i32_0 = arith.constant 0 : i32
    %c0_i32_1 = arith.constant 0 : i32
    return %arg0, %c0_i32, %c0_i32_0 : i32, i32, i32
  }
}

</mosaic_0001>

<llo_original>
// kernel: fpa_forward.1
$region0: #{fpa_forward.1}
  #allocation0 [shape = 'u32[]', space=smem, size = 0x4, offset = 0x4, fixed_abs, tag = 'smem constant byte address 0x4 - core index']
  #allocation1 [shape = 'u32[72,128]{1,0:T(1,128)}', space=vmem, size = 0x9000, scoped, tag = 'internal scratch']
  %s0 = inlined_call_operand.vmem [shape: f32[4,4,256], index: 0, kind: input, shape index: {}]
  %s1 = inlined_call_operand.vmem [shape: f32[4,4], index: 1, kind: input, shape index: {}]
  %s2 = inlined_call_operand.vmem [shape: f32[4,1], index: 2, kind: input, shape index: {}]
  %s3 = inlined_call_operand.vmem [shape: f32[4,4], index: 3, kind: input, shape index: {}]
  %s4 = inlined_call_operand.vmem [shape: f32[4,1], index: 4, kind: input, shape index: {}]
  %s5 = inlined_call_operand.vmem [shape: f32[4,256,64], index: 5, kind: input, shape index: {}]
  %s6 = inlined_call_operand.vmem [shape: f32[4,64,16], index: 6, kind: input, shape index: {}]
  %s7 = inlined_call_operand.vmem [shape: f32[4,16,4], index: 7, kind: input, shape index: {}]
  %s8 = inlined_call_operand.vmem [shape: f32[4,64,64], index: 8, kind: input, shape index: {}]
  %s9 = inlined_call_operand.vmem [shape: f32[16,16], index: 9, kind: input, shape index: {}]
  %s10 = inlined_call_operand.vmem [shape: f32[4,4], index: 10, kind: input, shape index: {}]
  %s11 = inlined_call_operand.vmem [shape: f32[4,4], index: 11, kind: input, shape index: {}]
  %s12 = inlined_call_operand.vmem [shape: f32[16,16], index: 12, kind: input, shape index: {}]
  %s13 = inlined_call_operand.vmem [shape: f32[64,64], index: 13, kind: input, shape index: {}]
  %s14 = inlined_call_operand.vmem [shape: f32[4,16], index: 14, kind: input, shape index: {}]
  %s15 = inlined_call_operand.vmem [shape: f32[16,64], index: 15, kind: input, shape index: {}]
  %s16 = inlined_call_operand.vmem [shape: f32[64,256], index: 16, kind: input, shape index: {}]
  %s17 = inlined_call_operand.vmem [shape: f32[6], index: 17, kind: input, shape index: {}]
  %s18 = inlined_call_operand.vmem [shape: f32[4,4,256], index: 18, kind: output, shape index: {}]
  %s19 = sld [smem:[#allocation0]]
  $region109: #{fpa_forward.1} parent=0
    _
  %s21 = ssub.s32 1, %s19
  %s22 = scalar_select 0, %s21, %s19
  $region1: #{fpa_forward.1} parent=0
    #allocation2 [shape = 'u8[512]{0}', space=smem, size = 0x200, scoped, tag = 'input window, operand 17, single buffered']
    #allocation3 [shape = 's32[2]{0}', space=sflag, size = 0x8, scoped, tag = 'scoped memory for fpa_forward.1']
    %23 = vsyncpa [#allocation3], 0
    loop: start=0, step=1, limit=4
    $region2: #{fpa_forward.1} parent=1 // loop_pre_header
      _
    $region3: #{fpa_forward.1} parent=1 // loop_header
      %s25 = sphi 0, %s29
      %p26 = scmp.ge.s32.totalorder %s25, 4
      %s35 = sphi 0, %s37
      %s38 = sphi 0, %s35
      %s39 = sphi 0, %s38
      %s55 = sphi 0, %s39
      %s59 = sphi 0, %s59
      %s61 = sphi 0, %s59
      %s62 = sphi 0, %s61
      %s76 = sphi 0, %s62
      %s80 = sphi 0, %s80
      %s82 = sphi 0, %s80
      %s83 = sphi 0, %s82
      %s97 = sphi 0, %s83
      %s101 = sphi 0, %s101
      %s103 = sphi 0, %s101
      %s104 = sphi 0, %s103
      %s118 = sphi 0, %s104
      %s122 = sphi 0, %s122
      %s124 = sphi 0, %s122
      %s125 = sphi 0, %s124
      %s139 = sphi 0, %s125
      %s143 = sphi 0, %s143
      %s145 = sphi 0, %s143
      %s146 = sphi 0, %s145
      %s160 = sphi 0, %s146
      %s164 = sphi 0, %s164
      %s166 = sphi 0, %s164
      %s167 = sphi 0, %s166
      %s181 = sphi 0, %s167
      %s185 = sphi 0, %s185
      %s187 = sphi 0, %s185
      %s188 = sphi 0, %s187
      %s202 = sphi 0, %s188
      %s206 = sphi 0, %s206
      %s208 = sphi 0, %s206
      %s209 = sphi 0, %s208
      %s223 = sphi 0, %s209
      %s227 = sphi 0, %s227
      %s229 = sphi 0, %s227
      %s230 = sphi 0, %s229
      %s244 = sphi 0, %s230
      %s248 = sphi 0, %s248
      %s250 = sphi 0, %s248
      %s251 = sphi 0, %s250
      %s265 = sphi 0, %s251
      %s269 = sphi 0, %s269
      %s271 = sphi 0, %s269
      %s272 = sphi 0, %s271
      %s286 = sphi 0, %s272
      %s290 = sphi 0, %s290
      %s292 = sphi 0, %s290
      %s293 = sphi 0, %s292
      %s307 = sphi 0, %s293
      %s311 = sphi 0, %s311
      %s313 = sphi 0, %s311
      %s314 = sphi 0, %s313
      %s328 = sphi 0, %s314
      %s332 = sphi 0, %s332
      %s334 = sphi 0, %s332
      %s335 = sphi 0, %s334
      %s349 = sphi 0, %s335
      %s353 = sphi 0, %s353
      %s355 = sphi 0, %s353
      %s356 = sphi 0, %s355
      %s370 = sphi 0, %s356
      %s374 = sphi 0, %s374
      %s376 = sphi 0, %s374
      %s377 = sphi 0, %s376
      %s391 = sphi 0, %s377
      %s395 = sphi 0, %s395
      %s397 = sphi 0, %s395
      %s398 = sphi 0, %s397
      %s412 = sphi 0, %s398
      %s418 = sphi 0, %s420
      %s421 = sphi 0, %s418
      %s422 = sphi 0, %s421
      %s438 = sphi 0, %s422
    $region4: #{fpa_forward.1} parent=1 // loop_header_branch
      %28 = sbr.rel (%p26) target = $region8
    $region5: #{fpa_forward.1} parent=1 // loop_body
      %s30 = ssub.s32 %s25, 1
      %s31 = ssub.s32 %s25, 2
      %s32 = sadd.s32 %s25, 1
      %s33 = ssub.s32 %s25, %s32
      %p34 = scmp.eq.s32.totalorder %s33, 0
      %s36 = sadd.s32 %s35, 1
      %s37 = scalar_select %p34, %s35, %s36
      %p40 = pneg %p34
      %p41 = scmp.eq.s32.totalorder %s25, 1
      %p42 = por %p40, %p41
      %p43 = scmp.ne.s32.totalorder %s35, %s38
      %p44 = scmp.eq.s32.totalorder %s25, 0
      %p45 = por %p43, %p44
      %p46 = scmp.ne.s32.totalorder %s35, %s38
      %p47 = scmp.eq.s32.totalorder %s30, 1
      %p48 = por %p46, %p47
      %p49 = scmp.ne.s32.totalorder %s38, %s39
      %p50 = scmp.eq.s32.totalorder %s30, 0
      %p51 = por %p49, %p50
      %p52 = scmp.ne.s32.totalorder %s38, %s39
      %p53 = scmp.eq.s32.totalorder %s31, 1
      %p54 = por %p52, %p53
      %p56 = scmp.ne.s32.totalorder %s39, %s55
      %p57 = scmp.eq.s32.totalorder %s31, 0
      %p58 = por %p56, %p57
      %s60 = sadd.s32 %s59, 1
      %p63 = scmp.eq.s32.totalorder %s25, 1
      %p64 = scmp.ne.s32.totalorder %s59, %s61
      %p65 = scmp.eq.s32.totalorder %s25, 0
      %p66 = por %p64, %p65
      %p67 = scmp.ne.s32.totalorder %s59, %s61
      %p68 = scmp.eq.s32.totalorder %s30, 1
      %p69 = por %p67, %p68
      %p70 = scmp.ne.s32.totalorder %s61, %s62
      %p71 = scmp.eq.s32.totalorder %s30, 0
      %p72 = por %p70, %p71
      %p73 = scmp.ne.s32.totalorder %s61, %s62
      %p74 = scmp.eq.s32.totalorder %s31, 1
      %p75 = por %p73, %p74
      %p77 = scmp.ne.s32.totalorder %s62, %s76
      %p78 = scmp.eq.s32.totalorder %s31, 0
      %p79 = por %p77, %p78
      %s81 = sadd.s32 %s80, 1
      %p84 = scmp.eq.s32.totalorder %s25, 1
      %p85 = scmp.ne.s32.totalorder %s80, %s82
      %p86 = scmp.eq.s32.totalorder %s25, 0
      %p87 = por %p85, %p86
      %p88 = scmp.ne.s32.totalorder %s80, %s82
      %p89 = scmp.eq.s32.totalorder %s30, 1
      %p90 = por %p88, %p89
      %p91 = scmp.ne.s32.totalorder %s82, %s83
      %p92 = scmp.eq.s32.totalorder %s30, 0
      %p93 = por %p91, %p92
      %p94 = scmp.ne.s32.totalorder %s82, %s83
      %p95 = scmp.eq.s32.totalorder %s31, 1
      %p96 = por %p94, %p95
      %p98 = scmp.ne.s32.totalorder %s83, %s97
      %p99 = scmp.eq.s32.totalorder %s31, 0
      %p100 = por %p98, %p99
      %s102 = sadd.s32 %s101, 1
      %p105 = scmp.eq.s32.totalorder %s25, 1
      %p106 = scmp.ne.s32.totalorder %s101, %s103
      %p107 = scmp.eq.s32.totalorder %s25, 0
      %p108 = por %p106, %p107
      %p109 = scmp.ne.s32.totalorder %s101, %s103
      %p110 = scmp.eq.s32.totalorder %s30, 1
      %p111 = por %p109, %p110
      %p112 = scmp.ne.s32.totalorder %s103, %s104
      %p113 = scmp.eq.s32.totalorder %s30, 0
      %p114 = por %p112, %p113
      %p115 = scmp.ne.s32.totalorder %s103, %s104
      %p116 = scmp.eq.s32.totalorder %s31, 1
      %p117 = por %p115, %p116
      %p119 = scmp.ne.s32.totalorder %s104, %s118
      %p120 = scmp.eq.s32.totalorder %s31, 0
      %p121 = por %p119, %p120
      %s123 = sadd.s32 %s122, 1
      %p126 = scmp.eq.s32.totalorder %s25, 1
      %p127 = scmp.ne.s32.totalorder %s122, %s124
      %p128 = scmp.eq.s32.totalorder %s25, 0
      %p129 = por %p127, %p128
      %p130 = scmp.ne.s32.totalorder %s122, %s124
      %p131 = scmp.eq.s32.totalorder %s30, 1
      %p132 = por %p130, %p131
      %p133 = scmp.ne.s32.totalorder %s124, %s125
      %p134 = scmp.eq.s32.totalorder %s30, 0
      %p135 = por %p133, %p134
      %p136 = scmp.ne.s32.totalorder %s124, %s125
      %p137 = scmp.eq.s32.totalorder %s31, 1
      %p138 = por %p136, %p137
      %p140 = scmp.ne.s32.totalorder %s125, %s139
      %p141 = scmp.eq.s32.totalorder %s31, 0
      %p142 = por %p140, %p141
      %s144 = sadd.s32 %s143, 1
      %p147 = scmp.eq.s32.totalorder %s25, 1
      %p148 = scmp.ne.s32.totalorder %s143, %s145
      %p149 = scmp.eq.s32.totalorder %s25, 0
      %p150 = por %p148, %p149
      %p151 = scmp.ne.s32.totalorder %s143, %s145
      %p152 = scmp.eq.s32.totalorder %s30, 1
      %p153 = por %p151, %p152
      %p154 = scmp.ne.s32.totalorder %s145, %s146
      %p155 = scmp.eq.s32.totalorder %s30, 0
      %p156 = por %p154, %p155
      %p157 = scmp.ne.s32.totalorder %s145, %s146
      %p158 = scmp.eq.s32.totalorder %s31, 1
      %p159 = por %p157, %p158
      %p161 = scmp.ne.s32.totalorder %s146, %s160
      %p162 = scmp.eq.s32.totalorder %s31, 0
      %p163 = por %p161, %p162
      %s165 = sadd.s32 %s164, 1
      %p168 = scmp.eq.s32.totalorder %s25, 1
      %p169 = scmp.ne.s32.totalorder %s164, %s166
      %p170 = scmp.eq.s32.totalorder %s25, 0
      %p171 = por %p169, %p170
      %p172 = scmp.ne.s32.totalorder %s164, %s166
      %p173 = scmp.eq.s32.totalorder %s30, 1
      %p174 = por %p172, %p173
      %p175 = scmp.ne.s32.totalorder %s166, %s167
      %p176 = scmp.eq.s32.totalorder %s30, 0
      %p177 = por %p175, %p176
      %p178 = scmp.ne.s32.totalorder %s166, %s167
      %p179 = scmp.eq.s32.totalorder %s31, 1
      %p180 = por %p178, %p179
      %p182 = scmp.ne.s32.totalorder %s167, %s181
      %p183 = scmp.eq.s32.totalorder %s31, 0
      %p184 = por %p182, %p183
      %s186 = sadd.s32 %s185, 1
      %p189 = scmp.eq.s32.totalorder %s25, 1
      %p190 = scmp.ne.s32.totalorder %s185, %s187
      %p191 = scmp.eq.s32.totalorder %s25, 0
      %p192 = por %p190, %p191
      %p193 = scmp.ne.s32.totalorder %s185, %s187
      %p194 = scmp.eq.s32.totalorder %s30, 1
      %p195 = por %p193, %p194
      %p196 = scmp.ne.s32.totalorder %s187, %s188
      %p197 = scmp.eq.s32.totalorder %s30, 0
      %p198 = por %p196, %p197
      %p199 = scmp.ne.s32.totalorder %s187, %s188
      %p200 = scmp.eq.s32.totalorder %s31, 1
      %p201 = por %p199, %p200
      %p203 = scmp.ne.s32.totalorder %s188, %s202
      %p204 = scmp.eq.s32.totalorder %s31, 0
      %p205 = por %p203, %p204
      %s207 = sadd.s32 %s206, 1
      %p210 = scmp.eq.s32.totalorder %s25, 1
      %p211 = scmp.ne.s32.totalorder %s206, %s208
      %p212 = scmp.eq.s32.totalorder %s25, 0
      %p213 = por %p211, %p212
      %p214 = scmp.ne.s32.totalorder %s206, %s208
      %p215 = scmp.eq.s32.totalorder %s30, 1
      %p216 = por %p214, %p215
      %p217 = scmp.ne.s32.totalorder %s208, %s209
      %p218 = scmp.eq.s32.totalorder %s30, 0
      %p219 = por %p217, %p218
      %p220 = scmp.ne.s32.totalorder %s208, %s209
      %p221 = scmp.eq.s32.totalorder %s31, 1
      %p222 = por %p220, %p221
      %p224 = scmp.ne.s32.totalorder %s209, %s223
      %p225 = scmp.eq.s32.totalorder %s31, 0
      %p226 = por %p224, %p225
      %s228 = sadd.s32 %s227, 1
      %p231 = scmp.eq.s32.totalorder %s25, 1
      %p232 = scmp.ne.s32.totalorder %s227, %s229
      %p233 = scmp.eq.s32.totalorder %s25, 0
      %p234 = por %p232, %p233
      %p235 = scmp.ne.s32.totalorder %s227, %s229
      %p236 = scmp.eq.s32.totalorder %s30, 1
      %p237 = por %p235, %p236
      %p238 = scmp.ne.s32.totalorder %s229, %s230
      %p239 = scmp.eq.s32.totalorder %s30, 0
      %p240 = por %p238, %p239
      %p241 = scmp.ne.s32.totalorder %s229, %s230
      %p242 = scmp.eq.s32.totalorder %s31, 1
      %p243 = por %p241, %p242
      %p245 = scmp.ne.s32.totalorder %s230, %s244
      %p246 = scmp.eq.s32.totalorder %s31, 0
      %p247 = por %p245, %p246
      %s249 = sadd.s32 %s248, 1
      %p252 = scmp.eq.s32.totalorder %s25, 1
      %p253 = scmp.ne.s32.totalorder %s248, %s250
      %p254 = scmp.eq.s32.totalorder %s25, 0
      %p255 = por %p253, %p254
      %p256 = scmp.ne.s32.totalorder %s248, %s250
      %p257 = scmp.eq.s32.totalorder %s30, 1
      %p258 = por %p256, %p257
      %p259 = scmp.ne.s32.totalorder %s250, %s251
      %p260 = scmp.eq.s32.totalorder %s30, 0
      %p261 = por %p259, %p260
      %p262 = scmp.ne.s32.totalorder %s250, %s251
      %p263 = scmp.eq.s32.totalorder %s31, 1
      %p264 = por %p262, %p263
      %p266 = scmp.ne.s32.totalorder %s251, %s265
      %p267 = scmp.eq.s32.totalorder %s31, 0
      %p268 = por %p266, %p267
      %s270 = sadd.s32 %s269, 1
      %p273 = scmp.eq.s32.totalorder %s25, 1
      %p274 = scmp.ne.s32.totalorder %s269, %s271
      %p275 = scmp.eq.s32.totalorder %s25, 0
      %p276 = por %p274, %p275
      %p277 = scmp.ne.s32.totalorder %s269, %s271
      %p278 = scmp.eq.s32.totalorder %s30, 1
      %p279 = por %p277, %p278
      %p280 = scmp.ne.s32.totalorder %s271, %s272
      %p281 = scmp.eq.s32.totalorder %s30, 0
      %p282 = por %p280, %p281
      %p283 = scmp.ne.s32.totalorder %s271, %s272
      %p284 = scmp.eq.s32.totalorder %s31, 1
      %p285 = por %p283, %p284
      %p287 = scmp.ne.s32.totalorder %s272, %s286
      %p288 = scmp.eq.s32.totalorder %s31, 0
      %p289 = por %p287, %p288
      %s291 = sadd.s32 %s290, 1
      %p294 = scmp.eq.s32.totalorder %s25, 1
      %p295 = scmp.ne.s32.totalorder %s290, %s292
      %p296 = scmp.eq.s32.totalorder %s25, 0
      %p297 = por %p295, %p296
      %p298 = scmp.ne.s32.totalorder %s290, %s292
      %p299 = scmp.eq.s32.totalorder %s30, 1
      %p300 = por %p298, %p299
      %p301 = scmp.ne.s32.totalorder %s292, %s293
      %p302 = scmp.eq.s32.totalorder %s30, 0
      %p303 = por %p301, %p302
      %p304 = scmp.ne.s32.totalorder %s292, %s293
      %p305 = scmp.eq.s32.totalorder %s31, 1
      %p306 = por %p304, %p305
      %p308 = scmp.ne.s32.totalorder %s293, %s307
      %p309 = scmp.eq.s32.totalorder %s31, 0
      %p310 = por %p308, %p309
      %s312 = sadd.s32 %s311, 1
      %p315 = scmp.eq.s32.totalorder %s25, 1
      %p316 = scmp.ne.s32.totalorder %s311, %s313
      %p317 = scmp.eq.s32.totalorder %s25, 0
      %p318 = por %p316, %p317
      %p319 = scmp.ne.s32.totalorder %s311, %s313
      %p320 = scmp.eq.s32.totalorder %s30, 1
      %p321 = por %p319, %p320
      %p322 = scmp.ne.s32.totalorder %s313, %s314
      %p323 = scmp.eq.s32.totalorder %s30, 0
      %p324 = por %p322, %p323
      %p325 = scmp.ne.s32.totalorder %s313, %s314
      %p326 = scmp.eq.s32.totalorder %s31, 1
      %p327 = por %p325, %p326
      %p329 = scmp.ne.s32.totalorder %s314, %s328
      %p330 = scmp.eq.s32.totalorder %s31, 0
      %p331 = por %p329, %p330
      %s333 = sadd.s32 %s332, 1
      %p336 = scmp.eq.s32.totalorder %s25, 1
      %p337 = scmp.ne.s32.totalorder %s332, %s334
      %p338 = scmp.eq.s32.totalorder %s25, 0
      %p339 = por %p337, %p338
      %p340 = scmp.ne.s32.totalorder %s332, %s334
      %p341 = scmp.eq.s32.totalorder %s30, 1
      %p342 = por %p340, %p341
      %p343 = scmp.ne.s32.totalorder %s334, %s335
      %p344 = scmp.eq.s32.totalorder %s30, 0
      %p345 = por %p343, %p344
      %p346 = scmp.ne.s32.totalorder %s334, %s335
      %p347 = scmp.eq.s32.totalorder %s31, 1
      %p348 = por %p346, %p347
      %p350 = scmp.ne.s32.totalorder %s335, %s349
      %p351 = scmp.eq.s32.totalorder %s31, 0
      %p352 = por %p350, %p351
      %s354 = sadd.s32 %s353, 1
      %p357 = scmp.eq.s32.totalorder %s25, 1
      %p358 = scmp.ne.s32.totalorder %s353, %s355
      %p359 = scmp.eq.s32.totalorder %s25, 0
      %p360 = por %p358, %p359
      %p361 = scmp.ne.s32.totalorder %s353, %s355
      %p362 = scmp.eq.s32.totalorder %s30, 1
      %p363 = por %p361, %p362
      %p364 = scmp.ne.s32.totalorder %s355, %s356
      %p365 = scmp.eq.s32.totalorder %s30, 0
      %p366 = por %p364, %p365
      %p367 = scmp.ne.s32.totalorder %s355, %s356
      %p368 = scmp.eq.s32.totalorder %s31, 1
      %p369 = por %p367, %p368
      %p371 = scmp.ne.s32.totalorder %s356, %s370
      %p372 = scmp.eq.s32.totalorder %s31, 0
      %p373 = por %p371, %p372
      %s375 = sadd.s32 %s374, 1
      %p378 = scmp.eq.s32.totalorder %s25, 1
      %p379 = scmp.ne.s32.totalorder %s374, %s376
      %p380 = scmp.eq.s32.totalorder %s25, 0
      %p381 = por %p379, %p380
      %p382 = scmp.ne.s32.totalorder %s374, %s376
      %p383 = scmp.eq.s32.totalorder %s30, 1
      %p384 = por %p382, %p383
      %p385 = scmp.ne.s32.totalorder %s376, %s377
      %p386 = scmp.eq.s32.totalorder %s30, 0
      %p387 = por %p385, %p386
      %p388 = scmp.ne.s32.totalorder %s376, %s377
      %p389 = scmp.eq.s32.totalorder %s31, 1
      %p390 = por %p388, %p389
      %p392 = scmp.ne.s32.totalorder %s377, %s391
      %p393 = scmp.eq.s32.totalorder %s31, 0
      %p394 = por %p392, %p393
      %s396 = sadd.s32 %s395, 1
      %p399 = scmp.eq.s32.totalorder %s25, 1
      %p400 = scmp.ne.s32.totalorder %s395, %s397
      %p401 = scmp.eq.s32.totalorder %s25, 0
      %p402 = por %p400, %p401
      %p403 = scmp.ne.s32.totalorder %s395, %s397
      %p404 = scmp.eq.s32.totalorder %s30, 1
      %p405 = por %p403, %p404
      %p406 = scmp.ne.s32.totalorder %s397, %s398
      %p407 = scmp.eq.s32.totalorder %s30, 0
      %p408 = por %p406, %p407
      %p409 = scmp.ne.s32.totalorder %s397, %s398
      %p410 = scmp.eq.s32.totalorder %s31, 1
      %p411 = por %p409, %p410
      %p413 = scmp.ne.s32.totalorder %s398, %s412
      %p414 = scmp.eq.s32.totalorder %s31, 0
      %p415 = por %p413, %p414
      %s416 = ssub.s32 %s25, %s32
      %p417 = scmp.eq.s32.totalorder %s416, 0
      %s419 = sadd.s32 %s418, 1
      %s420 = scalar_select %p417, %s418, %s419
      %p423 = pneg %p417
      %p424 = scmp.eq.s32.totalorder %s25, 1
      %p425 = por %p423, %p424
      %p426 = scmp.ne.s32.totalorder %s418, %s421
      %p427 = scmp.eq.s32.totalorder %s25, 0
      %p428 = por %p426, %p427
      %p429 = scmp.ne.s32.totalorder %s418, %s421
      %p430 = scmp.eq.s32.totalorder %s30, 1
      %p431 = por %p429, %p430
      %p432 = scmp.ne.s32.totalorder %s421, %s422
      %p433 = scmp.eq.s32.totalorder %s30, 0
      %p434 = por %p432, %p433
      %p435 = scmp.ne.s32.totalorder %s421, %s422
      %p436 = scmp.eq.s32.totalorder %s31, 1
      %p437 = por %p435, %p436
      %p439 = scmp.ne.s32.totalorder %s422, %s438
      %p440 = scmp.eq.s32.totalorder %s31, 0
      %p441 = por %p439, %p440
      %p442 = scmp.le.s32.totalorder 1, %s25
      %p443 = scmp.lt.s32.totalorder %s25, 3
      %p444 = pnand %p442, %p443
      %p445 = pneg %p444
      // Predicated region
      $region9: #{fpa_forward.1} parent=5 // pred_check
        _
      $region10: #{fpa_forward.1} parent=5 // pred_check_branch
        %447 = sbr.rel (%p444) target = $region12
      $region11: #{fpa_forward.1} parent=5 // pred_region
        %s448 = ssub.s32 %s25, 1
        // Predicated region
        $region13: #{fpa_forward.1} parent=11 // pred_check
          %p449 = pneg %p72
        $region14: #{fpa_forward.1} parent=11 // pred_check_branch
          %451 = sbr.rel (%p449) target = $region16
        $region15: #{fpa_forward.1} parent=11 // pred_region
          _
        $region16: #{fpa_forward.1} parent=11 // pred_fallthru
          _
        // Predicated region
        $region17: #{fpa_forward.1} parent=11 // pred_check
          %p452 = pneg %p93
        $region18: #{fpa_forward.1} parent=11 // pred_check_branch
          %454 = sbr.rel (%p452) target = $region20
        $region19: #{fpa_forward.1} parent=11 // pred_region
          _
        $region20: #{fpa_forward.1} parent=11 // pred_fallthru
          _
        // Predicated region
        $region21: #{fpa_forward.1} parent=11 // pred_check
          %p455 = pneg %p114
        $region22: #{fpa_forward.1} parent=11 // pred_check_branch
          %457 = sbr.rel (%p455) target = $region24
        $region23: #{fpa_forward.1} parent=11 // pred_region
          _
        $region24: #{fpa_forward.1} parent=11 // pred_fallthru
          _
        // Predicated region
        $region25: #{fpa_forward.1} parent=11 // pred_check
          %p458 = pneg %p135
        $region26: #{fpa_forward.1} parent=11 // pred_check_branch
          %460 = sbr.rel (%p458) target = $region28
        $region27: #{fpa_forward.1} parent=11 // pred_region
          _
        $region28: #{fpa_forward.1} parent=11 // pred_fallthru
          _
        // Predicated region
        $region29: #{fpa_forward.1} parent=11 // pred_check
          %p461 = pneg %p156
        $region30: #{fpa_forward.1} parent=11 // pred_check_branch
          %463 = sbr.rel (%p461) target = $region32
        $region31: #{fpa_forward.1} parent=11 // pred_region
          _
        $region32: #{fpa_forward.1} parent=11 // pred_fallthru
          _
        // Predicated region
        $region33: #{fpa_forward.1} parent=11 // pred_check
          %p464 = pneg %p177
        $region34: #{fpa_forward.1} parent=11 // pred_check_branch
          %466 = sbr.rel (%p464) target = $region36
        $region35: #{fpa_forward.1} parent=11 // pred_region
          _
        $region36: #{fpa_forward.1} parent=11 // pred_fallthru
          _
        // Predicated region
        $region37: #{fpa_forward.1} parent=11 // pred_check
          %p467 = pneg %p198
        $region38: #{fpa_forward.1} parent=11 // pred_check_branch
          %469 = sbr.rel (%p467) target = $region40
        $region39: #{fpa_forward.1} parent=11 // pred_region
          _
        $region40: #{fpa_forward.1} parent=11 // pred_fallthru
          _
        // Predicated region
        $region41: #{fpa_forward.1} parent=11 // pred_check
          %p470 = pneg %p219
        $region42: #{fpa_forward.1} parent=11 // pred_check_branch
          %472 = sbr.rel (%p470) target = $region44
        $region43: #{fpa_forward.1} parent=11 // pred_region
          _
        $region44: #{fpa_forward.1} parent=11 // pred_fallthru
          _
        // Predicated region
        $region45: #{fpa_forward.1} parent=11 // pred_check
          %p473 = pneg %p240
        $region46: #{fpa_forward.1} parent=11 // pred_check_branch
          %475 = sbr.rel (%p473) target = $region48
        $region47: #{fpa_forward.1} parent=11 // pred_region
          _
        $region48: #{fpa_forward.1} parent=11 // pred_fallthru
          _
        // Predicated region
        $region49: #{fpa_forward.1} parent=11 // pred_check
          %p476 = pneg %p261
        $region50: #{fpa_forward.1} parent=11 // pred_check_branch
          %478 = sbr.rel (%p476) target = $region52
        $region51: #{fpa_forward.1} parent=11 // pred_region
          _
        $region52: #{fpa_forward.1} parent=11 // pred_fallthru
          _
        // Predicated region
        $region53: #{fpa_forward.1} parent=11 // pred_check
          %p479 = pneg %p282
        $region54: #{fpa_forward.1} parent=11 // pred_check_branch
          %481 = sbr.rel (%p479) target = $region56
        $region55: #{fpa_forward.1} parent=11 // pred_region
          _
        $region56: #{fpa_forward.1} parent=11 // pred_fallthru
          _
        // Predicated region
        $region57: #{fpa_forward.1} parent=11 // pred_check
          %p482 = pneg %p303
        $region58: #{fpa_forward.1} parent=11 // pred_check_branch
          %484 = sbr.rel (%p482) target = $region60
        $region59: #{fpa_forward.1} parent=11 // pred_region
          _
        $region60: #{fpa_forward.1} parent=11 // pred_fallthru
          _
        // Predicated region
        $region61: #{fpa_forward.1} parent=11 // pred_check
          %p485 = pneg %p324
        $region62: #{fpa_forward.1} parent=11 // pred_check_branch
          %487 = sbr.rel (%p485) target = $region64
        $region63: #{fpa_forward.1} parent=11 // pred_region
          _
        $region64: #{fpa_forward.1} parent=11 // pred_fallthru
          _
        // Predicated region
        $region65: #{fpa_forward.1} parent=11 // pred_check
          %p488 = pneg %p345
        $region66: #{fpa_forward.1} parent=11 // pred_check_branch
          %490 = sbr.rel (%p488) target = $region68
        $region67: #{fpa_forward.1} parent=11 // pred_region
          _
        $region68: #{fpa_forward.1} parent=11 // pred_fallthru
          _
        // Predicated region
        $region69: #{fpa_forward.1} parent=11 // pred_check
          %p491 = pneg %p366
        $region70: #{fpa_forward.1} parent=11 // pred_check_branch
          %493 = sbr.rel (%p491) target = $region72
        $region71: #{fpa_forward.1} parent=11 // pred_region
          _
        $region72: #{fpa_forward.1} parent=11 // pred_fallthru
          _
        // Predicated region
        $region73: #{fpa_forward.1} parent=11 // pred_check
          %p494 = pneg %p387
        $region74: #{fpa_forward.1} parent=11 // pred_check_branch
          %496 = sbr.rel (%p494) target = $region76
        $region75: #{fpa_forward.1} parent=11 // pred_region
          _
        $region76: #{fpa_forward.1} parent=11 // pred_fallthru
          _
        // Predicated region
        $region77: #{fpa_forward.1} parent=11 // pred_check
          %p497 = pneg %p408
        $region78: #{fpa_forward.1} parent=11 // pred_check_branch
          %499 = sbr.rel (%p497) target = $region80
        $region79: #{fpa_forward.1} parent=11 // pred_region
          %501 = vsyncadd [#allocation3], 0
          %s503 = sshll.u32 %s17, 4
          %s504 = int_to_ptr.vmem [resolvable:$true] %s503
          %506 = dma.vmem_to_smem %s504, 16, [#allocation2], [#allocation3]
        $region80: #{fpa_forward.1} parent=11 // pred_fallthru
          _
      $region12: #{fpa_forward.1} parent=5 // pred_fallthru
        _
      %p507 = scmp.lt.s32.totalorder %s25, 2
      // Predicated region
      $region81: #{fpa_forward.1} parent=5 // pred_check
        %p508 = pneg %p507
      $region82: #{fpa_forward.1} parent=5 // pred_check_branch
        %510 = sbr.rel (%p508) target = $region84
      $region83: #{fpa_forward.1} parent=5 // pred_region
        // Predicated region
        $region85: #{fpa_forward.1} parent=83 // pred_check
          %p511 = pneg %p45
        $region86: #{fpa_forward.1} parent=83 // pred_check_branch
          %513 = sbr.rel (%p511) target = $region88
        $region87: #{fpa_forward.1} parent=83 // pred_region
          %s514 = smul.u32 2, %s25
          %p515 = scmp.lt.s32.totalorder %s514, 3
          %s516 = scalar_select %p515, %s514, 3
          %s517 = smul.addr %s516, 2
          %s518 = smul.addr %s517, 4
          %s519 = scalar_lea.vmem %s0, %s518
          %s520 = smul.u32 2, %s25
        $region88: #{fpa_forward.1} parent=83 // pred_fallthru
          _
      $region84: #{fpa_forward.1} parent=5 // pred_fallthru
        _
      %p521 = scmp.le.s32.totalorder 1, %s25
      %p522 = scmp.lt.s32.totalorder %s25, 3
      %p523 = pnand %p521, %p522
      %p524 = pneg %p523
      // Predicated region
      $region89: #{fpa_forward.1} parent=5 // pred_check
        _
      $region90: #{fpa_forward.1} parent=5 // pred_check_branch
        %526 = sbr.rel (%p523) target = $region92
      $region91: #{fpa_forward.1} parent=5 // pred_region
        %s527 = ssub.s32 %s25, 1
        // Predicated region
        $region93: #{fpa_forward.1} parent=91 // pred_check
          %p528 = pneg %p408
        $region94: #{fpa_forward.1} parent=91 // pred_check_branch
          %530 = sbr.rel (%p528) target = $region96
        $region95: #{fpa_forward.1} parent=91 // pred_region
          %532 = dma.done [#allocation3], 16
        $region96: #{fpa_forward.1} parent=91 // pred_fallthru
          _
        %533 = sfence
        %s534 = smul.u32 2, %s30
        %p535 = scmp.lt.s32.totalorder %s534, 3
        %s536 = scalar_select %p535, %s534, 3
        %s537 = smul.addr %s536, 2
        %s538 = smul.addr %s537, 4
        %s539 = scalar_lea.vmem %s0, %s538
        %p540 = pneg %p51
        %p541 = pneg %p48
        %p542 = pneg %p72
        %p543 = pneg %p69
        %p544 = pneg %p93
        %p545 = pneg %p90
        %p546 = pneg %p114
        %p547 = pneg %p111
        %p548 = pneg %p135
        %p549 = pneg %p132
        %p550 = pneg %p156
        %p551 = pneg %p153
        %p552 = pneg %p177
        %p553 = pneg %p174
        %p554 = pneg %p198
        %p555 = pneg %p195
        %p556 = pneg %p219
        %p557 = pneg %p216
        %p558 = pneg %p240
        %p559 = pneg %p237
        %p560 = pneg %p261
        %p561 = pneg %p258
        %p562 = pneg %p282
        %p563 = pneg %p279
        %p564 = pneg %p303
        %p565 = pneg %p300
        %p566 = pneg %p324
        %p567 = pneg %p321
        %p568 = pneg %p345
        %p569 = pneg %p342
        %p570 = pneg %p366
        %p571 = pneg %p363
        %p572 = pneg %p387
        %p573 = pneg %p384
        %p574 = pneg %p408
        %p575 = pneg %p405
        %p576 = pneg %p434
        %p577 = pneg %p431
        %s578 = smul.u32 2, %s30
        %p579 = scmp.lt.s32.totalorder %s578, 3
        %s580 = scalar_select %p579, %s578, 3
        %s581 = smul.addr %s580, 2
        %s582 = smul.addr %s581, 4
        %s583 = scalar_lea.vmem %s18, %s582
        %s584 = smul.u32 2, %s30
        %p585 = scmp.lt.s32.totalorder %s584, 3
        %s586 = scalar_select %p585, %s584, 3
        %s587 = smul.addr %s586, 2
        %s588 = smul.addr %s587, 4
        %s589 = scalar_lea.vmem %s0, %s588
        %s590 = smul.u32 2, %s30
        %s591 = smul.u32 2, %s30
        %p592 = scmp.lt.s32.totalorder %s591, 3
        %s593 = scalar_select %p592, %s591, 3
        %s594 = smul.addr %s593, 2
        %s595 = smul.addr %s594, 4
        %s596 = scalar_lea.vmem %s18, %s595
        %s597 = smul.u32 2, %s30
        %v598 = vld [vmem:[%s1] sm:$0xf]
        %v599 = vld [vmem:[%s3] sm:$0xf]
        %v600 = vld [vmem:[%s2] sm:$0xf]
        %v601 = vld [vmem:[%s4] sm:$0xf]
        %v602 = vld [vmem:[%s589] sm:$0xff]
        %604 = vset.pattern.permute.xlu0 0
        %605 = vperm.xlu0 %604, %v600
        %v606 = vpop.permute.xlu0 %605
        %609 = vst [vmem:[#allocation1] ss:$2 sm:$0xff] %v602
        %v610 = vld.sshfl [vmem:[#allocation1] sm:$0xff pattern:$0x75316420]
        %v611 = vld.sshfl [vmem:[#allocation1 + $0x8] sm:$0xff pattern:$0x75316420]
        %vm612 = vcmask 31744
        %v614 = vsel %vm612, %v598, 0
        %vm616 = vcmask 1043456
        %v617 = vsel %vm616, %v610, 0
        %v619 = vsel %vm616, %v611, 0
        %621 = vmatpush.msra.mxu0 0.0
        %622 = vmatpush.msra.mxu0 0.0
        %623 = vmatpush.msra.mxu0 0.0
        %624 = vmatpush.msra.mxu0 0.0
        %625 = vmatpush.msra.mxu0 0.0
        %626 = vmatpush.msra.mxu0 0.0
        %627 = vmatpush.msra.mxu0 0.0
        %628 = vmatpush.msra.mxu0 0.0
        %629 = vmatpush.msra.mxu0 0.0
        %630 = vmatpush.msra.mxu0 0.0
        %631 = vmatpush.msra.mxu0 0.0
        %632 = vmatpush.msra.mxu0 0.0
        %633 = vmatpush.msra.mxu0 0.0
        %634 = vmatpush.msra.mxu0 0.0
        %635 = vmatpush.msra.mxu0 0.0
        %636 = vmatpush.msra.mxu0 %v617
        %637 = vmatmul.f32.gmra.mxu0 %v614
        %v638 = vpop.f32.mrf.mxu0
        %v639 = vadd.f32 %v606, %v638
        %640 = vdwg.mxu0
        %641 = vmatpush.msra.mxu0 0.0
        %642 = vmatpush.msra.mxu0 0.0
        %643 = vmatpush.msra.mxu0 0.0
        %644 = vmatpush.msra.mxu0 0.0
        %645 = vmatpush.msra.mxu0 0.0
        %646 = vmatpush.msra.mxu0 0.0
        %647 = vmatpush.msra.mxu0 0.0
        %648 = vmatpush.msra.mxu0 0.0
        %649 = vmatpush.msra.mxu0 0.0
        %650 = vmatpush.msra.mxu0 0.0
        %651 = vmatpush.msra.mxu0 0.0
        %652 = vmatpush.msra.mxu0 0.0
        %653 = vmatpush.msra.mxu0 0.0
        %654 = vmatpush.msra.mxu0 0.0
        %655 = vmatpush.msra.mxu0 0.0
        %656 = vmatpush.msra.mxu0 %v619
        %657 = vmatmul.f32.gmra.mxu0 %v614
        %v658 = vpop.f32.mrf.mxu0
        %v659 = vadd.f32 %v606, %v658
        %660 = vdwg.mxu0
        %v661 = vmax.f32 %v639, 0.0
        %v662 = vmax.f32 %v659, 0.0
        %663 = vst [vmem:[#allocation1] ss:$2 sm:$0xff] %v602
        %v664 = vld.sshfl [vmem:[#allocation1] sm:$0xff pattern:$0x75316420]
        %v665 = vld.sshfl [vmem:[#allocation1 + $0x8] sm:$0xff pattern:$0x75316420]
        %668 = vmatpush.msra.mxu0 0.00390625
        %669 = vmatpush.msra.mxu0 0.00390625
        %670 = vmatpush.msra.mxu0 0.00390625
        %671 = vmatpush.msra.mxu0 0.00390625
        %672 = vmatpush.msra.mxu0 0.00390625
        %673 = vmatpush.msra.mxu0 0.00390625
        %674 = vmatpush.msra.mxu0 0.00390625
        %675 = vmatpush.msra.mxu0 0.00390625
        %676 = vmatpush.msra.mxu0 0.00390625
        %677 = vmatpush.msra.mxu0 0.00390625
        %678 = vmatpush.msra.mxu0 0.00390625
        %679 = vmatpush.msra.mxu0 0.00390625
        %680 = vmatpush.msra.mxu0 0.00390625
        %681 = vmatpush.msra.mxu0 0.00390625
        %682 = vmatpush.msra.mxu0 0.00390625
        %683 = vmatpush.msra.mxu0 0.00390625
        %684 = vmatmul.f32.gmra.mxu0 %v664
        %v685 = vpop.f32.mrf.mxu0
        %v686 = vadd.f32 0.0, %v685
        %687 = vdwg.mxu0
        %688 = vmatpush.msra.mxu0 0.00390625
        %689 = vmatpush.msra.mxu0 0.00390625
        %690 = vmatpush.msra.mxu0 0.00390625
        %691 = vmatpush.msra.mxu0 0.00390625
        %692 = vmatpush.msra.mxu0 0.00390625
        %693 = vmatpush.msra.mxu0 0.00390625
        %694 = vmatpush.msra.mxu0 0.00390625
        %695 = vmatpush.msra.mxu0 0.00390625
        %696 = vmatpush.msra.mxu0 0.00390625
        %697 = vmatpush.msra.mxu0 0.00390625
        %698 = vmatpush.msra.mxu0 0.00390625
        %699 = vmatpush.msra.mxu0 0.00390625
        %700 = vmatpush.msra.mxu0 0.00390625
        %701 = vmatpush.msra.mxu0 0.00390625
        %702 = vmatpush.msra.mxu0 0.00390625
        %703 = vmatpush.msra.mxu0 0.00390625
        %704 = vmatmul.f32.gmra.mxu0 %v665
        %v705 = vpop.f32.mrf.mxu0
        %v706 = vadd.f32 %v686, %v705
        %707 = vdwg.mxu0
        %v709 = vsel %vm612, %v599, 0
        %v712 = vsel %vm616, %v706, 0
        %714 = vmatpush.msra.mxu0 0.0
        %715 = vmatpush.msra.mxu0 0.0
        %716 = vmatpush.msra.mxu0 0.0
        %717 = vmatpush.msra.mxu0 0.0
        %718 = vmatpush.msra.mxu0 0.0
        %719 = vmatpush.msra.mxu0 0.0
        %720 = vmatpush.msra.mxu0 0.0
        %721 = vmatpush.msra.mxu0 0.0
        %722 = vmatpush.msra.mxu0 0.0
        %723 = vmatpush.msra.mxu0 0.0
        %724 = vmatpush.msra.mxu0 0.0
        %725 = vmatpush.msra.mxu0 0.0
        %726 = vmatpush.msra.mxu0 0.0
        %727 = vmatpush.msra.mxu0 0.0
        %728 = vmatpush.msra.mxu0 0.0
        %729 = vmatpush.msra.mxu0 %v712
        %730 = vmatmul.f32.gmra.mxu0 %v709
        %v731 = vpop.f32.mrf.mxu0
        %v732 = vadd.f32 %v601, %v731
        %733 = vdwg.mxu0
        %v734 = vmax.f32 %v732, 0.0
        %v735 = vld [vmem:[%s5] sm:$0xff]
        %v736 = vld [vmem:[%s5 + $0x8] sm:$0xff]
        %v737 = vld [vmem:[%s5 + $0x10] sm:$0xff]
        %v738 = vld [vmem:[%s5 + $0x18] sm:$0xff]
        %v739 = vld [vmem:[%s5 + $0x20] sm:$0xff]
        %v740 = vld [vmem:[%s5 + $0x28] sm:$0xff]
        %v741 = vld [vmem:[%s5 + $0x30] sm:$0xff]
        %v742 = vld [vmem:[%s5 + $0x38] sm:$0xff]
        %v743 = vld [vmem:[%s5 + $0x40] sm:$0xff]
        %v744 = vld [vmem:[%s5 + $0x48] sm:$0xff]
        %v745 = vld [vmem:[%s5 + $0x50] sm:$0xff]
        %v746 = vld [vmem:[%s5 + $0x58] sm:$0xff]
        %v747 = vld [vmem:[%s5 + $0x60] sm:$0xff]
        %v748 = vld [vmem:[%s5 + $0x68] sm:$0xff]
        %v749 = vld [vmem:[%s5 + $0x70] sm:$0xff]
        %v750 = vld [vmem:[%s5 + $0x78] sm:$0xff]
        %v751 = vld [vmem:[%s5 + $0x80] sm:$0xff]
        %v752 = vld [vmem:[%s5 + $0x88] sm:$0xff]
        %v753 = vld [vmem:[%s5 + $0x90] sm:$0xff]
        %v754 = vld [vmem:[%s5 + $0x98] sm:$0xff]
        %v755 = vld [vmem:[%s5 + $0xa0] sm:$0xff]
        %v756 = vld [vmem:[%s5 + $0xa8] sm:$0xff]
        %v757 = vld [vmem:[%s5 + $0xb0] sm:$0xff]
        %v758 = vld [vmem:[%s5 + $0xb8] sm:$0xff]
        %v759 = vld [vmem:[%s5 + $0xc0] sm:$0xff]
        %v760 = vld [vmem:[%s5 + $0xc8] sm:$0xff]
        %v761 = vld [vmem:[%s5 + $0xd0] sm:$0xff]
        %v762 = vld [vmem:[%s5 + $0xd8] sm:$0xff]
        %v763 = vld [vmem:[%s5 + $0xe0] sm:$0xff]
        %v764 = vld [vmem:[%s5 + $0xe8] sm:$0xff]
        %v765 = vld [vmem:[%s5 + $0xf0] sm:$0xff]
        %v766 = vld [vmem:[%s5 + $0xf8] sm:$0xff]
        %767 = vst [vmem:[#allocation1] ss:$2 sm:$0xff] %v602
        %v768 = vld.sshfl [vmem:[#allocation1] sm:$0xff pattern:$0x75316420]
        %v769 = vld.sshfl [vmem:[#allocation1 + $0x8] sm:$0xff pattern:$0x75316420]
        %772 = vmatpush.msra.mxu0 %v750
        %773 = vmatpush.msra.mxu0 %v749
        %774 = vmatpush.msra.mxu0 %v748
        %775 = vmatpush.msra.mxu0 %v747
        %776 = vmatpush.msra.mxu0 %v746
        %777 = vmatpush.msra.mxu0 %v745
        %778 = vmatpush.msra.mxu0 %v744
        %779 = vmatpush.msra.mxu0 %v743
        %780 = vmatpush.msra.mxu0 %v742
        %781 = vmatpush.msra.mxu0 %v741
        %782 = vmatpush.msra.mxu0 %v740
        %783 = vmatpush.msra.mxu0 %v739
        %784 = vmatpush.msra.mxu0 %v738
        %785 = vmatpush.msra.mxu0 %v737
        %786 = vmatpush.msra.mxu0 %v736
        %787 = vmatpush.msra.mxu0 %v735
        %788 = vmatmul.f32.gmra.mxu0 %v768
        %v789 = vpop.f32.mrf.mxu0
        %v790 = vadd.f32 0.0, %v789
        %791 = vdwg.mxu0
        %792 = vmatpush.msra.mxu0 %v766
        %793 = vmatpush.msra.mxu0 %v765
        %794 = vmatpush.msra.mxu0 %v764
        %795 = vmatpush.msra.mxu0 %v763
        %796 = vmatpush.msra.mxu0 %v762
        %797 = vmatpush.msra.mxu0 %v761
        %798 = vmatpush.msra.mxu0 %v760
        %799 = vmatpush.msra.mxu0 %v759
        %800 = vmatpush.msra.mxu0 %v758
        %801 = vmatpush.msra.mxu0 %v757
        %802 = vmatpush.msra.mxu0 %v756
        %803 = vmatpush.msra.mxu0 %v755
        %804 = vmatpush.msra.mxu0 %v754
        %805 = vmatpush.msra.mxu0 %v753
        %806 = vmatpush.msra.mxu0 %v752
        %807 = vmatpush.msra.mxu0 %v751
        %808 = vmatmul.f32.gmra.mxu0 %v769
        %v809 = vpop.f32.mrf.mxu0
        %v810 = vadd.f32 %v790, %v809
        %811 = vdwg.mxu0
        %s812 = scalar_lea.vmem %s5, 256
        %v813 = vld [vmem:[%s812] sm:$0xff]
        %v814 = vld [vmem:[%s812 + $0x8] sm:$0xff]
        %v815 = vld [vmem:[%s812 + $0x10] sm:$0xff]
        %v816 = vld [vmem:[%s812 + $0x18] sm:$0xff]
        %v817 = vld [vmem:[%s812 + $0x20] sm:$0xff]
        %v818 = vld [vmem:[%s812 + $0x28] sm:$0xff]
        %v819 = vld [vmem:[%s812 + $0x30] sm:$0xff]
        %v820 = vld [vmem:[%s812 + $0x38] sm:$0xff]
        %v821 = vld [vmem:[%s812 + $0x40] sm:$0xff]
        %v822 = vld [vmem:[%s812 + $0x48] sm:$0xff]
        %v823 = vld [vmem:[%s812 + $0x50] sm:$0xff]
        %v824 = vld [vmem:[%s812 + $0x58] sm:$0xff]
        %v825 = vld [vmem:[%s812 + $0x60] sm:$0xff]
        %v826 = vld [vmem:[%s812 + $0x68] sm:$0xff]
        %v827 = vld [vmem:[%s812 + $0x70] sm:$0xff]
        %v828 = vld [vmem:[%s812 + $0x78] sm:$0xff]
        %v829 = vld [vmem:[%s812 + $0x80] sm:$0xff]
        %v830 = vld [vmem:[%s812 + $0x88] sm:$0xff]
        %v831 = vld [vmem:[%s812 + $0x90] sm:$0xff]
        %v832 = vld [vmem:[%s812 + $0x98] sm:$0xff]
        %v833 = vld [vmem:[%s812 + $0xa0] sm:$0xff]
        %v834 = vld [vmem:[%s812 + $0xa8] sm:$0xff]
        %v835 = vld [vmem:[%s812 + $0xb0] sm:$0xff]
        %v836 = vld [vmem:[%s812 + $0xb8] sm:$0xff]
        %v837 = vld [vmem:[%s812 + $0xc0] sm:$0xff]
        %v838 = vld [vmem:[%s812 + $0xc8] sm:$0xff]
        %v839 = vld [vmem:[%s812 + $0xd0] sm:$0xff]
        %v840 = vld [vmem:[%s812 + $0xd8] sm:$0xff]
        %v841 = vld [vmem:[%s812 + $0xe0] sm:$0xff]
        %v842 = vld [vmem:[%s812 + $0xe8] sm:$0xff]
        %v843 = vld [vmem:[%s812 + $0xf0] sm:$0xff]
        %v844 = vld [vmem:[%s812 + $0xf8] sm:$0xff]
        %845 = vst [vmem:[#allocation1] ss:$2 sm:$0xff] %v602
        %v846 = vld.sshfl [vmem:[#allocation1] sm:$0xff pattern:$0x75316420]
        %v847 = vld.sshfl [vmem:[#allocation1 + $0x8] sm:$0xff pattern:$0x75316420]
        %850 = vmatpush.msra.mxu0 %v828
        %851 = vmatpush.msra.mxu0 %v827
        %852 = vmatpush.msra.mxu0 %v826
        %853 = vmatpush.msra.mxu0 %v825
        %854 = vmatpush.msra.mxu0 %v824
        %855 = vmatpush.msra.mxu0 %v823
        %856 = vmatpush.msra.mxu0 %v822
        %857 = vmatpush.msra.mxu0 %v821
        %858 = vmatpush.msra.mxu0 %v820
        %859 = vmatpush.msra.mxu0 %v819
        %860 = vmatpush.msra.mxu0 %v818
        %861 = vmatpush.msra.mxu0 %v817
        %862 = vmatpush.msra.mxu0 %v816
        %863 = vmatpush.msra.mxu0 %v815
        %864 = vmatpush.msra.mxu0 %v814
        %865 = vmatpush.msra.mxu0 %v813
        %866 = vmatmul.f32.gmra.mxu0 %v846
        %v867 = vpop.f32.mrf.mxu0
        %v868 = vadd.f32 0.0, %v867
        %869 = vdwg.mxu0
        %870 = vmatpush.msra.mxu0 %v844
        %871 = vmatpush.msra.mxu0 %v843
        %872 = vmatpush.msra.mxu0 %v842
        %873 = vmatpush.msra.mxu0 %v841
        %874 = vmatpush.msra.mxu0 %v840
        %875 = vmatpush.msra.mxu0 %v839
        %876 = vmatpush.msra.mxu0 %v838
        %877 = vmatpush.msra.mxu0 %v837
        %878 = vmatpush.msra.mxu0 %v836
        %879 = vmatpush.msra.mxu0 %v835
        %880 = vmatpush.msra.mxu0 %v834
        %881 = vmatpush.msra.mxu0 %v833
        %882 = vmatpush.msra.mxu0 %v832
        %883 = vmatpush.msra.mxu0 %v831
        %884 = vmatpush.msra.mxu0 %v830
        %885 = vmatpush.msra.mxu0 %v829
        %886 = vmatmul.f32.gmra.mxu0 %v847
        %v887 = vpop.f32.mrf.mxu0
        %v888 = vadd.f32 %v868, %v887
        %889 = vdwg.mxu0
        %v890 = vmax.f32 %v810, %v888
        %s891 = scalar_lea.vmem %s5, 512
        %v892 = vld [vmem:[%s891] sm:$0xff]
        %v893 = vld [vmem:[%s891 + $0x8] sm:$0xff]
        %v894 = vld [vmem:[%s891 + $0x10] sm:$0xff]
        %v895 = vld [vmem:[%s891 + $0x18] sm:$0xff]
        %v896 = vld [vmem:[%s891 + $0x20] sm:$0xff]
        %v897 = vld [vmem:[%s891 + $0x28] sm:$0xff]
        %v898 = vld [vmem:[%s891 + $0x30] sm:$0xff]
        %v899 = vld [vmem:[%s891 + $0x38] sm:$0xff]
        %v900 = vld [vmem:[%s891 + $0x40] sm:$0xff]
        %v901 = vld [vmem:[%s891 + $0x48] sm:$0xff]
        %v902 = vld [vmem:[%s891 + $0x50] sm:$0xff]
        %v903 = vld [vmem:[%s891 + $0x58] sm:$0xff]
        %v904 = vld [vmem:[%s891 + $0x60] sm:$0xff]
        %v905 = vld [vmem:[%s891 + $0x68] sm:$0xff]
        %v906 = vld [vmem:[%s891 + $0x70] sm:$0xff]
        %v907 = vld [vmem:[%s891 + $0x78] sm:$0xff]
        %v908 = vld [vmem:[%s891 + $0x80] sm:$0xff]
        %v909 = vld [vmem:[%s891 + $0x88] sm:$0xff]
        %v910 = vld [vmem:[%s891 + $0x90] sm:$0xff]
        %v911 = vld [vmem:[%s891 + $0x98] sm:$0xff]
        %v912 = vld [vmem:[%s891 + $0xa0] sm:$0xff]
        %v913 = vld [vmem:[%s891 + $0xa8] sm:$0xff]
        %v914 = vld [vmem:[%s891 + $0xb0] sm:$0xff]
        %v915 = vld [vmem:[%s891 + $0xb8] sm:$0xff]
        %v916 = vld [vmem:[%s891 + $0xc0] sm:$0xff]
        %v917 = vld [vmem:[%s891 + $0xc8] sm:$0xff]
        %v918 = vld [vmem:[%s891 + $0xd0] sm:$0xff]
        %v919 = vld [vmem:[%s891 + $0xd8] sm:$0xff]
        %v920 = vld [vmem:[%s891 + $0xe0] sm:$0xff]
        %v921 = vld [vmem:[%s891 + $0xe8] sm:$0xff]
        %v922 = vld [vmem:[%s891 + $0xf0] sm:$0xff]
        %v923 = vld [vmem:[%s891 + $0xf8] sm:$0xff]
        %924 = vst [vmem:[#allocation1] ss:$2 sm:$0xff] %v602
        %v925 = vld.sshfl [vmem:[#allocation1] sm:$0xff pattern:$0x75316420]
        %v926 = vld.sshfl [vmem:[#allocation1 + $0x8] sm:$0xff pattern:$0x75316420]
        %929 = vmatpush.msra.mxu0 %v907
        %930 = vmatpush.msra.mxu0 %v906
        %931 = vmatpush.msra.mxu0 %v905
        %932 = vmatpush.msra.mxu0 %v904
        %933 = vmatpush.msra.mxu0 %v903
        %934 = vmatpush.msra.mxu0 %v902
        %935 = vmatpush.msra.mxu0 %v901
        %936 = vmatpush.msra.mxu0 %v900
        %937 = vmatpush.msra.mxu0 %v899
        %938 = vmatpush.msra.mxu0 %v898
        %939 = vmatpush.msra.mxu0 %v897
        %940 = vmatpush.msra.mxu0 %v896
        %941 = vmatpush.msra.mxu0 %v895
        %942 = vmatpush.msra.mxu0 %v894
        %943 = vmatpush.msra.mxu0 %v893
        %944 = vmatpush.msra.mxu0 %v892
        %945 = vmatmul.f32.gmra.mxu0 %v925
        %v946 = vpop.f32.mrf.mxu0
        %v947 = vadd.f32 0.0, %v946
        %948 = vdwg.mxu0
        %949 = vmatpush.msra.mxu0 %v923
        %950 = vmatpush.msra.mxu0 %v922
        %951 = vmatpush.msra.mxu0 %v921
        %952 = vmatpush.msra.mxu0 %v920
        %953 = vmatpush.msra.mxu0 %v919
        %954 = vmatpush.msra.mxu0 %v918
        %955 = vmatpush.msra.mxu0 %v917
        %956 = vmatpush.msra.mxu0 %v916
        %957 = vmatpush.msra.mxu0 %v915
        %958 = vmatpush.msra.mxu0 %v914
        %959 = vmatpush.msra.mxu0 %v913
        %960 = vmatpush.msra.mxu0 %v912
        %961 = vmatpush.msra.mxu0 %v911
        %962 = vmatpush.msra.mxu0 %v910
        %963 = vmatpush.msra.mxu0 %v909
        %964 = vmatpush.msra.mxu0 %v908
        %965 = vmatmul.f32.gmra.mxu0 %v926
        %v966 = vpop.f32.mrf.mxu0
        %v967 = vadd.f32 %v947, %v966
        %968 = vdwg.mxu0
        %v969 = vmax.f32 %v890, %v967
        %s970 = scalar_lea.vmem %s5, 768
        %v971 = vld [vmem:[%s970] sm:$0xff]
        %v972 = vld [vmem:[%s970 + $0x8] sm:$0xff]
        %v973 = vld [vmem:[%s970 + $0x10] sm:$0xff]
        %v974 = vld [vmem:[%s970 + $0x18] sm:$0xff]
        %v975 = vld [vmem:[%s970 + $0x20] sm:$0xff]
        %v976 = vld [vmem:[%s970 + $0x28] sm:$0xff]
        %v977 = vld [vmem:[%s970 + $0x30] sm:$0xff]
        %v978 = vld [vmem:[%s970 + $0x38] sm:$0xff]
        %v979 = vld [vmem:[%s970 + $0x40] sm:$0xff]
        %v980 = vld [vmem:[%s970 + $0x48] sm:$0xff]
        %v981 = vld [vmem:[%s970 + $0x50] sm:$0xff]
        %v982 = vld [vmem:[%s970 + $0x58] sm:$0xff]
        %v983 = vld [vmem:[%s970 + $0x60] sm:$0xff]
        %v984 = vld [vmem:[%s970 + $0x68] sm:$0xff]
        %v985 = vld [vmem:[%s970 + $0x70] sm:$0xff]
        %v986 = vld [vmem:[%s970 + $0x78] sm:$0xff]
        %v987 = vld [vmem:[%s970 + $0x80] sm:$0xff]
        %v988 = vld [vmem:[%s970 + $0x88] sm:$0xff]
        %v989 = vld [vmem:[%s970 + $0x90] sm:$0xff]
        %v990 = vld [vmem:[%s970 + $0x98] sm:$0xff]
        %v991 = vld [vmem:[%s970 + $0xa0] sm:$0xff]
        %v992 = vld [vmem:[%s970 + $0xa8] sm:$0xff]
        %v993 = vld [vmem:[%s970 + $0xb0] sm:$0xff]
        %v994 = vld [vmem:[%s970 + $0xb8] sm:$0xff]
        %v995 = vld [vmem:[%s970 + $0xc0] sm:$0xff]
        %v996 = vld [vmem:[%s970 + $0xc8] sm:$0xff]
        %v997 = vld [vmem:[%s970 + $0xd0] sm:$0xff]
        %v998 = vld [vmem:[%s970 + $0xd8] sm:$0xff]
        %v999 = vld [vmem:[%s970 + $0xe0] sm:$0xff]
        %v1000 = vld [vmem:[%s970 + $0xe8] sm:$0xff]
        %v1001 = vld [vmem:[%s970 + $0xf0] sm:$0xff]
        %v1002 = vld [vmem:[%s970 + $0xf8] sm:$0xff]
        %1003 = vst [vmem:[#allocation1] ss:$2 sm:$0xff] %v602
        %v1004 = vld.sshfl [vmem:[#allocation1] sm:$0xff pattern:$0x75316420]
        %v1005 = vld.sshfl [vmem:[#allocation1 + $0x8] sm:$0xff pattern:$0x75316420]
        %1008 = vmatpush.msra.mxu0 %v986
        %1009 = vmatpush.msra.mxu0 %v985
        %1010 = vmatpush.msra.mxu0 %v984
        %1011 = vmatpush.msra.mxu0 %v983
        %1012 = vmatpush.msra.mxu0 %v982
        %1013 = vmatpush.msra.mxu0 %v981
        %1014 = vmatpush.msra.mxu0 %v980
        %1015 = vmatpush.msra.mxu0 %v979
        %1016 = vmatpush.msra.mxu0 %v978
        %1017 = vmatpush.msra.mxu0 %v977
        %1018 = vmatpush.msra.mxu0 %v976
        %1019 = vmatpush.msra.mxu0 %v975
        %1020 = vmatpush.msra.mxu0 %v974
        %1021 = vmatpush.msra.mxu0 %v973
        %1022 = vmatpush.msra.mxu0 %v972
        %1023 = vmatpush.msra.mxu0 %v971
        %1024 = vmatmul.f32.gmra.mxu0 %v1004
        %v1025 = vpop.f32.mrf.mxu0
        %v1026 = vadd.f32 0.0, %v1025
        %1027 = vdwg.mxu0
        %1028 = vmatpush.msra.mxu0 %v1002
        %1029 = vmatpush.msra.mxu0 %v1001
        %1030 = vmatpush.msra.mxu0 %v1000
        %1031 = vmatpush.msra.mxu0 %v999
        %1032 = vmatpush.msra.mxu0 %v998
        %1033 = vmatpush.msra.mxu0 %v997
        %1034 = vmatpush.msra.mxu0 %v996
        %1035 = vmatpush.msra.mxu0 %v995
        %1036 = vmatpush.msra.mxu0 %v994
        %1037 = vmatpush.msra.mxu0 %v993
        %1038 = vmatpush.msra.mxu0 %v992
        %1039 = vmatpush.msra.mxu0 %v991
        %1040 = vmatpush.msra.mxu0 %v990
        %1041 = vmatpush.msra.mxu0 %v989
        %1042 = vmatpush.msra.mxu0 %v988
        %1043 = vmatpush.msra.mxu0 %v987
        %1044 = vmatmul.f32.gmra.mxu0 %v1005
        %v1045 = vpop.f32.mrf.mxu0
        %v1046 = vadd.f32 %v1026, %v1045
        %1047 = vdwg.mxu0
        %v1048 = vmax.f32 %v969, %v1046
        %v1049 = vld [vmem:[%s8] sm:$0xff]
        %v1050 = vld [vmem:[%s8 + $0x8] sm:$0xff]
        %v1051 = vld [vmem:[%s8 + $0x10] sm:$0xff]
        %v1052 = vld [vmem:[%s8 + $0x18] sm:$0xff]
        %v1053 = vld [vmem:[%s8 + $0x20] sm:$0xff]
        %v1054 = vld [vmem:[%s8 + $0x28] sm:$0xff]
        %v1055 = vld [vmem:[%s8 + $0x30] sm:$0xff]
        %v1056 = vld [vmem:[%s8 + $0x38] sm:$0xff]
        %s1057 = scalar_lea.vmem %s8, 64
        %v1058 = vld [vmem:[%s1057] sm:$0xff]
        %v1059 = vld [vmem:[%s1057 + $0x8] sm:$0xff]
        %v1060 = vld [vmem:[%s1057 + $0x10] sm:$0xff]
        %v1061 = vld [vmem:[%s1057 + $0x18] sm:$0xff]
        %v1062 = vld [vmem:[%s1057 + $0x20] sm:$0xff]
        %v1063 = vld [vmem:[%s1057 + $0x28] sm:$0xff]
        %v1064 = vld [vmem:[%s1057 + $0x30] sm:$0xff]
        %v1065 = vld [vmem:[%s1057 + $0x38] sm:$0xff]
        %v1067 = vrot.slane %v1048, 1
        %vm1068 = vcmask 523264
        %v1069 = vsel %vm1068, %v1067, 0
        %1071 = vmatpush.msra.mxu0 0.0
        %1072 = vmatpush.msra.mxu0 0.0
        %1073 = vmatpush.msra.mxu0 0.0
        %1074 = vmatpush.msra.mxu0 0.0
        %1075 = vmatpush.msra.mxu0 0.0
        %1076 = vmatpush.msra.mxu0 0.0
        %1077 = vmatpush.msra.mxu0 0.0
        %1078 = vmatpush.msra.mxu0 0.0
        %1079 = vmatpush.msra.mxu0 %v1065
        %1080 = vmatpush.msra.mxu0 %v1064
        %1081 = vmatpush.msra.mxu0 %v1063
        %1082 = vmatpush.msra.mxu0 %v1062
        %1083 = vmatpush.msra.mxu0 %v1061
        %1084 = vmatpush.msra.mxu0 %v1060
        %1085 = vmatpush.msra.mxu0 %v1059
        %1086 = vmatpush.msra.mxu0 %v1058
        %1087 = vmatmul.f32.gmra.mxu0 %v1069
        %v1088 = vpop.f32.mrf.mxu0
        %v1089 = vadd.f32 0.0, %v1088
        %1090 = vdwg.mxu0
        %v1091 = vsel %vm1068, %v1048, 0
        %1093 = vmatpush.msra.mxu0 0.0
        %1094 = vmatpush.msra.mxu0 0.0
        %1095 = vmatpush.msra.mxu0 0.0
        %1096 = vmatpush.msra.mxu0 0.0
        %1097 = vmatpush.msra.mxu0 0.0
        %1098 = vmatpush.msra.mxu0 0.0
        %1099 = vmatpush.msra.mxu0 0.0
        %1100 = vmatpush.msra.mxu0 0.0
        %1101 = vmatpush.msra.mxu0 %v1056
        %1102 = vmatpush.msra.mxu0 %v1055
        %1103 = vmatpush.msra.mxu0 %v1054
        %1104 = vmatpush.msra.mxu0 %v1053
        %1105 = vmatpush.msra.mxu0 %v1052
        %1106 = vmatpush.msra.mxu0 %v1051
        %1107 = vmatpush.msra.mxu0 %v1050
        %1108 = vmatpush.msra.mxu0 %v1049
        %1109 = vmatmul.f32.gmra.mxu0 %v1091
        %v1110 = vpop.f32.mrf.mxu0
        %v1111 = vadd.f32 %v1089, %v1110
        %1112 = vdwg.mxu0
        %s1113 = scalar_lea.vmem %s8, 128
        %v1114 = vld [vmem:[%s1113] sm:$0xff]
        %v1115 = vld [vmem:[%s1113 + $0x8] sm:$0xff]
        %v1116 = vld [vmem:[%s1113 + $0x10] sm:$0xff]
        %v1117 = vld [vmem:[%s1113 + $0x18] sm:$0xff]
        %v1118 = vld [vmem:[%s1113 + $0x20] sm:$0xff]
        %v1119 = vld [vmem:[%s1113 + $0x28] sm:$0xff]
        %v1120 = vld [vmem:[%s1113 + $0x30] sm:$0xff]
        %v1121 = vld [vmem:[%s1113 + $0x38] sm:$0xff]
        %v1122 = vrot.slane %v1048, 2
        %v1123 = vsel %vm1068, %v1122, 0
        %1125 = vmatpush.msra.mxu0 0.0
        %1126 = vmatpush.msra.mxu0 0.0
        %1127 = vmatpush.msra.mxu0 0.0
        %1128 = vmatpush.msra.mxu0 0.0
        %1129 = vmatpush.msra.mxu0 0.0
        %1130 = vmatpush.msra.mxu0 0.0
        %1131 = vmatpush.msra.mxu0 0.0
        %1132 = vmatpush.msra.mxu0 0.0
        %1133 = vmatpush.msra.mxu0 %v1121
        %1134 = vmatpush.msra.mxu0 %v1120
        %1135 = vmatpush.msra.mxu0 %v1119
        %1136 = vmatpush.msra.mxu0 %v1118
        %1137 = vmatpush.msra.mxu0 %v1117
        %1138 = vmatpush.msra.mxu0 %v1116
        %1139 = vmatpush.msra.mxu0 %v1115
        %1140 = vmatpush.msra.mxu0 %v1114
        %1141 = vmatmul.f32.gmra.mxu0 %v1123
        %v1142 = vpop.f32.mrf.mxu0
        %v1143 = vadd.f32 0.0, %v1142
        %1144 = vdwg.mxu0
        %v1145 = vadd.f32 %v1111, %v1143
        %s1146 = scalar_lea.vmem %s8, 192
        %v1147 = vld [vmem:[%s1146] sm:$0xff]
        %v1148 = vld [vmem:[%s1146 + $0x8] sm:$0xff]
        %v1149 = vld [vmem:[%s1146 + $0x10] sm:$0xff]
        %v1150 = vld [vmem:[%s1146 + $0x18] sm:$0xff]
        %v1151 = vld [vmem:[%s1146 + $0x20] sm:$0xff]
        %v1152 = vld [vmem:[%s1146 + $0x28] sm:$0xff]
        %v1153 = vld [vmem:[%s1146 + $0x30] sm:$0xff]
        %v1154 = vld [vmem:[%s1146 + $0x38] sm:$0xff]
        %v1155 = vrot.slane %v1048, 3
        %v1156 = vsel %vm1068, %v1155, 0
        %1158 = vmatpush.msra.mxu0 0.0
        %1159 = vmatpush.msra.mxu0 0.0
        %1160 = vmatpush.msra.mxu0 0.0
        %1161 = vmatpush.msra.mxu0 0.0
        %1162 = vmatpush.msra.mxu0 0.0
        %1163 = vmatpush.msra.mxu0 0.0
        %1164 = vmatpush.msra.mxu0 0.0
        %1165 = vmatpush.msra.mxu0 0.0
        %1166 = vmatpush.msra.mxu0 %v1154
        %1167 = vmatpush.msra.mxu0 %v1153
        %1168 = vmatpush.msra.mxu0 %v1152
        %1169 = vmatpush.msra.mxu0 %v1151
        %1170 = vmatpush.msra.mxu0 %v1150
        %1171 = vmatpush.msra.mxu0 %v1149
        %1172 = vmatpush.msra.mxu0 %v1148
        %1173 = vmatpush.msra.mxu0 %v1147
        %1174 = vmatmul.f32.gmra.mxu0 %v1156
        %v1175 = vpop.f32.mrf.mxu0
        %v1176 = vadd.f32 0.0, %v1175
        %1177 = vdwg.mxu0
        %v1178 = vadd.f32 %v1145, %v1176
        %s1179 = sld [smem:[#allocation2]]
        %v1180 = vstv %s1179
        %v1181 = vadd.f32 %v1178, %v1180
        %v1182 = vmax.f32 %v1181, 0.0
        %v1183 = vld [vmem:[%s6] sm:$0xff]
        %v1184 = vld [vmem:[%s6 + $0x8] sm:$0xff]
        %v1185 = vld [vmem:[%s6 + $0x10] sm:$0xff]
        %v1186 = vld [vmem:[%s6 + $0x18] sm:$0xff]
        %v1187 = vld [vmem:[%s6 + $0x20] sm:$0xff]
        %v1188 = vld [vmem:[%s6 + $0x28] sm:$0xff]
        %v1189 = vld [vmem:[%s6 + $0x30] sm:$0xff]
        %v1190 = vld [vmem:[%s6 + $0x38] sm:$0xff]
        %v1192 = vsel %vm1068, %v1182, 0
        %1194 = vmatpush.msra.mxu0 0.0
        %1195 = vmatpush.msra.mxu0 0.0
        %1196 = vmatpush.msra.mxu0 0.0
        %1197 = vmatpush.msra.mxu0 0.0
        %1198 = vmatpush.msra.mxu0 0.0
        %1199 = vmatpush.msra.mxu0 0.0
        %1200 = vmatpush.msra.mxu0 0.0
        %1201 = vmatpush.msra.mxu0 0.0
        %1202 = vmatpush.msra.mxu0 %v1190
        %1203 = vmatpush.msra.mxu0 %v1189
        %1204 = vmatpush.msra.mxu0 %v1188
        %1205 = vmatpush.msra.mxu0 %v1187
        %1206 = vmatpush.msra.mxu0 %v1186
        %1207 = vmatpush.msra.mxu0 %v1185
        %1208 = vmatpush.msra.mxu0 %v1184
        %1209 = vmatpush.msra.mxu0 %v1183
        %1210 = vmatmul.f32.gmra.mxu0 %v1192
        %v1211 = vpop.f32.mrf.mxu0
        %v1212 = vadd.f32 0.0, %v1211
        %1213 = vdwg.mxu0
        %s1214 = scalar_lea.vmem %s6, 64
        %v1215 = vld [vmem:[%s1214] sm:$0xff]
        %v1216 = vld [vmem:[%s1214 + $0x8] sm:$0xff]
        %v1217 = vld [vmem:[%s1214 + $0x10] sm:$0xff]
        %v1218 = vld [vmem:[%s1214 + $0x18] sm:$0xff]
        %v1219 = vld [vmem:[%s1214 + $0x20] sm:$0xff]
        %v1220 = vld [vmem:[%s1214 + $0x28] sm:$0xff]
        %v1221 = vld [vmem:[%s1214 + $0x30] sm:$0xff]
        %v1222 = vld [vmem:[%s1214 + $0x38] sm:$0xff]
        %1223 = vmatpush.msra.mxu0 0.0
        %1224 = vmatpush.msra.mxu0 0.0
        %1225 = vmatpush.msra.mxu0 0.0
        %1226 = vmatpush.msra.mxu0 0.0
        %1227 = vmatpush.msra.mxu0 0.0
        %1228 = vmatpush.msra.mxu0 0.0
        %1229 = vmatpush.msra.mxu0 0.0
        %1230 = vmatpush.msra.mxu0 0.0
        %1231 = vmatpush.msra.mxu0 %v1222
        %1232 = vmatpush.msra.mxu0 %v1221
        %1233 = vmatpush.msra.mxu0 %v1220
        %1234 = vmatpush.msra.mxu0 %v1219
        %1235 = vmatpush.msra.mxu0 %v1218
        %1236 = vmatpush.msra.mxu0 %v1217
        %1237 = vmatpush.msra.mxu0 %v1216
        %1238 = vmatpush.msra.mxu0 %v1215
        %1239 = vmatmul.f32.gmra.mxu0 %v1192
        %v1240 = vpop.f32.mrf.mxu0
        %v1241 = vadd.f32 0.0, %v1240
        %1242 = vdwg.mxu0
        %v1243 = vmax.f32 %v1212, %v1241
        %s1244 = scalar_lea.vmem %s6, 128
        %v1245 = vld [vmem:[%s1244] sm:$0xff]
        %v1246 = vld [vmem:[%s1244 + $0x8] sm:$0xff]
        %v1247 = vld [vmem:[%s1244 + $0x10] sm:$0xff]
        %v1248 = vld [vmem:[%s1244 + $0x18] sm:$0xff]
        %v1249 = vld [vmem:[%s1244 + $0x20] sm:$0xff]
        %v1250 = vld [vmem:[%s1244 + $0x28] sm:$0xff]
        %v1251 = vld [vmem:[%s1244 + $0x30] sm:$0xff]
        %v1252 = vld [vmem:[%s1244 + $0x38] sm:$0xff]
        %1253 = vmatpush.msra.mxu0 0.0
        %1254 = vmatpush.msra.mxu0 0.0
        %1255 = vmatpush.msra.mxu0 0.0
        %1256 = vmatpush.msra.mxu0 0.0
        %1257 = vmatpush.msra.mxu0 0.0
        %1258 = vmatpush.msra.mxu0 0.0
        %1259 = vmatpush.msra.mxu0 0.0
        %1260 = vmatpush.msra.mxu0 0.0
        %1261 = vmatpush.msra.mxu0 %v1252
        %1262 = vmatpush.msra.mxu0 %v1251
        %1263 = vmatpush.msra.mxu0 %v1250
        %1264 = vmatpush.msra.mxu0 %v1249
        %1265 = vmatpush.msra.mxu0 %v1248
        %1266 = vmatpush.msra.mxu0 %v1247
        %1267 = vmatpush.msra.mxu0 %v1246
        %1268 = vmatpush.msra.mxu0 %v1245
        %1269 = vmatmul.f32.gmra.mxu0 %v1192
        %v1270 = vpop.f32.mrf.mxu0
        %v1271 = vadd.f32 0.0, %v1270
        %1272 = vdwg.mxu0
        %v1273 = vmax.f32 %v1243, %v1271
        %s1274 = scalar_lea.vmem %s6, 192
        %v1275 = vld [vmem:[%s1274] sm:$0xff]
        %v1276 = vld [vmem:[%s1274 + $0x8] sm:$0xff]
        %v1277 = vld [vmem:[%s1274 + $0x10] sm:$0xff]
        %v1278 = vld [vmem:[%s1274 + $0x18] sm:$0xff]
        %v1279 = vld [vmem:[%s1274 + $0x20] sm:$0xff]
        %v1280 = vld [vmem:[%s1274 + $0x28] sm:$0xff]
        %v1281 = vld [vmem:[%s1274 + $0x30] sm:$0xff]
        %v1282 = vld [vmem:[%s1274 + $0x38] sm:$0xff]
        %1283 = vmatpush.msra.mxu0 0.0
        %1284 = vmatpush.msra.mxu0 0.0
        %1285 = vmatpush.msra.mxu0 0.0
        %1286 = vmatpush.msra.mxu0 0.0
        %1287 = vmatpush.msra.mxu0 0.0
        %1288 = vmatpush.msra.mxu0 0.0
        %1289 = vmatpush.msra.mxu0 0.0
        %1290 = vmatpush.msra.mxu0 0.0
        %1291 = vmatpush.msra.mxu0 %v1282
        %1292 = vmatpush.msra.mxu0 %v1281
        %1293 = vmatpush.msra.mxu0 %v1280
        %1294 = vmatpush.msra.mxu0 %v1279
        %1295 = vmatpush.msra.mxu0 %v1278
        %1296 = vmatpush.msra.mxu0 %v1277
        %1297 = vmatpush.msra.mxu0 %v1276
        %1298 = vmatpush.msra.mxu0 %v1275
        %1299 = vmatmul.f32.gmra.mxu0 %v1192
        %v1300 = vpop.f32.mrf.mxu0
        %v1301 = vadd.f32 0.0, %v1300
        %1302 = vdwg.mxu0
        %v1303 = vmax.f32 %v1273, %v1301
        %v1304 = vld [vmem:[%s9] sm:$0xff]
        %v1305 = vld [vmem:[%s9 + $0x8] sm:$0xff]
        %s1306 = sld [smem:[#allocation2 + $0x1]]
        %v1307 = vstv %s1306
        %vm1308 = vcmask 130048
        %v1310 = vsel %vm1308, %v1303, 0
        %1312 = vmatpush.msra.mxu0 0.0
        %1313 = vmatpush.msra.mxu0 0.0
        %1314 = vmatpush.msra.mxu0 0.0
        %1315 = vmatpush.msra.mxu0 0.0
        %1316 = vmatpush.msra.mxu0 0.0
        %1317 = vmatpush.msra.mxu0 0.0
        %1318 = vmatpush.msra.mxu0 0.0
        %1319 = vmatpush.msra.mxu0 0.0
        %1320 = vmatpush.msra.mxu0 0.0
        %1321 = vmatpush.msra.mxu0 0.0
        %1322 = vmatpush.msra.mxu0 0.0
        %1323 = vmatpush.msra.mxu0 0.0
        %1324 = vmatpush.msra.mxu0 0.0
        %1325 = vmatpush.msra.mxu0 0.0
        %1326 = vmatpush.msra.mxu0 %v1305
        %1327 = vmatpush.msra.mxu0 %v1304
        %1328 = vmatmul.f32.gmra.mxu0 %v1310
        %v1329 = vpop.f32.mrf.mxu0
        %v1330 = vadd.f32 %v1307, %v1329
        %1331 = vdwg.mxu0
        %v1332 = vmax.f32 %v1330, 0.0
        %v1333 = vld [vmem:[%s7] sm:$0xff]
        %v1334 = vld [vmem:[%s7 + $0x8] sm:$0xff]
        %v1336 = vsel %vm1308, %v1332, 0
        %1338 = vmatpush.msra.mxu0 0.0
        %1339 = vmatpush.msra.mxu0 0.0
        %1340 = vmatpush.msra.mxu0 0.0
        %1341 = vmatpush.msra.mxu0 0.0
        %1342 = vmatpush.msra.mxu0 0.0
        %1343 = vmatpush.msra.mxu0 0.0
        %1344 = vmatpush.msra.mxu0 0.0
        %1345 = vmatpush.msra.mxu0 0.0
        %1346 = vmatpush.msra.mxu0 0.0
        %1347 = vmatpush.msra.mxu0 0.0
        %1348 = vmatpush.msra.mxu0 0.0
        %1349 = vmatpush.msra.mxu0 0.0
        %1350 = vmatpush.msra.mxu0 0.0
        %1351 = vmatpush.msra.mxu0 0.0
        %1352 = vmatpush.msra.mxu0 %v1334
        %1353 = vmatpush.msra.mxu0 %v1333
        %1354 = vmatmul.f32.gmra.mxu0 %v1336
        %v1355 = vpop.f32.mrf.mxu0
        %v1356 = vadd.f32 0.0, %v1355
        %1357 = vdwg.mxu0
        %s1358 = scalar_lea.vmem %s7, 16
        %v1359 = vld [vmem:[%s1358] sm:$0xff]
        %v1360 = vld [vmem:[%s1358 + $0x8] sm:$0xff]
        %1361 = vmatpush.msra.mxu0 0.0
        %1362 = vmatpush.msra.mxu0 0.0
        %1363 = vmatpush.msra.mxu0 0.0
        %1364 = vmatpush.msra.mxu0 0.0
        %1365 = vmatpush.msra.mxu0 0.0
        %1366 = vmatpush.msra.mxu0 0.0
        %1367 = vmatpush.msra.mxu0 0.0
        %1368 = vmatpush.msra.mxu0 0.0
        %1369 = vmatpush.msra.mxu0 0.0
        %1370 = vmatpush.msra.mxu0 0.0
        %1371 = vmatpush.msra.mxu0 0.0
        %1372 = vmatpush.msra.mxu0 0.0
        %1373 = vmatpush.msra.mxu0 0.0
        %1374 = vmatpush.msra.mxu0 0.0
        %1375 = vmatpush.msra.mxu0 %v1360
        %1376 = vmatpush.msra.mxu0 %v1359
        %1377 = vmatmul.f32.gmra.mxu0 %v1336
        %v1378 = vpop.f32.mrf.mxu0
        %v1379 = vadd.f32 0.0, %v1378
        %1380 = vdwg.mxu0
        %v1381 = vmax.f32 %v1356, %v1379
        %s1382 = scalar_lea.vmem %s7, 32
        %v1383 = vld [vmem:[%s1382] sm:$0xff]
        %v1384 = vld [vmem:[%s1382 + $0x8] sm:$0xff]
        %1385 = vmatpush.msra.mxu0 0.0
        %1386 = vmatpush.msra.mxu0 0.0
        %1387 = vmatpush.msra.mxu0 0.0
        %1388 = vmatpush.msra.mxu0 0.0
        %1389 = vmatpush.msra.mxu0 0.0
        %1390 = vmatpush.msra.mxu0 0.0
        %1391 = vmatpush.msra.mxu0 0.0
        %1392 = vmatpush.msra.mxu0 0.0
        %1393 = vmatpush.msra.mxu0 0.0
        %1394 = vmatpush.msra.mxu0 0.0
        %1395 = vmatpush.msra.mxu0 0.0
        %1396 = vmatpush.msra.mxu0 0.0
        %1397 = vmatpush.msra.mxu0 0.0
        %1398 = vmatpush.msra.mxu0 0.0
        %1399 = vmatpush.msra.mxu0 %v1384
        %1400 = vmatpush.msra.mxu0 %v1383
        %1401 = vmatmul.f32.gmra.mxu0 %v1336
        %v1402 = vpop.f32.mrf.mxu0
        %v1403 = vadd.f32 0.0, %v1402
        %1404 = vdwg.mxu0
        %v1405 = vmax.f32 %v1381, %v1403
        %s1406 = scalar_lea.vmem %s7, 48
        %v1407 = vld [vmem:[%s1406] sm:$0xff]
        %v1408 = vld [vmem:[%s1406 + $0x8] sm:$0xff]
        %1409 = vmatpush.msra.mxu0 0.0
        %1410 = vmatpush.msra.mxu0 0.0
        %1411 = vmatpush.msra.mxu0 0.0
        %1412 = vmatpush.msra.mxu0 0.0
        %1413 = vmatpush.msra.mxu0 0.0
        %1414 = vmatpush.msra.mxu0 0.0
        %1415 = vmatpush.msra.mxu0 0.0
        %1416 = vmatpush.msra.mxu0 0.0
        %1417 = vmatpush.msra.mxu0 0.0
        %1418 = vmatpush.msra.mxu0 0.0
        %1419 = vmatpush.msra.mxu0 0.0
        %1420 = vmatpush.msra.mxu0 0.0
        %1421 = vmatpush.msra.mxu0 0.0
        %1422 = vmatpush.msra.mxu0 0.0
        %1423 = vmatpush.msra.mxu0 %v1408
        %1424 = vmatpush.msra.mxu0 %v1407
        %1425 = vmatmul.f32.gmra.mxu0 %v1336
        %v1426 = vpop.f32.mrf.mxu0
        %v1427 = vadd.f32 0.0, %v1426
        %1428 = vdwg.mxu0
        %v1429 = vmax.f32 %v1405, %v1427
        %v1430 = vld [vmem:[%s10] sm:$0xf]
        %s1431 = sld [smem:[#allocation2 + $0x2]]
        %v1432 = vstv %s1431
        %v1434 = vsel %vm612, %v1429, 0
        %v1437 = vsel %vm616, %v1430, 0
        %1439 = vmatpush.msra.mxu0 0.0
        %1440 = vmatpush.msra.mxu0 0.0
        %1441 = vmatpush.msra.mxu0 0.0
        %1442 = vmatpush.msra.mxu0 0.0
        %1443 = vmatpush.msra.mxu0 0.0
        %1444 = vmatpush.msra.mxu0 0.0
        %1445 = vmatpush.msra.mxu0 0.0
        %1446 = vmatpush.msra.mxu0 0.0
        %1447 = vmatpush.msra.mxu0 0.0
        %1448 = vmatpush.msra.mxu0 0.0
        %1449 = vmatpush.msra.mxu0 0.0
        %1450 = vmatpush.msra.mxu0 0.0
        %1451 = vmatpush.msra.mxu0 0.0
        %1452 = vmatpush.msra.mxu0 0.0
        %1453 = vmatpush.msra.mxu0 0.0
        %1454 = vmatpush.msra.mxu0 %v1437
        %1455 = vmatmul.f32.gmra.mxu0 %v1434
        %v1456 = vpop.f32.mrf.mxu0
        %v1457 = vadd.f32 %v1432, %v1456
        %1458 = vdwg.mxu0
        %v1459 = vmax.f32 %v1457, 0.0
        %v1460 = vld [vmem:[%s11] sm:$0xf]
        %s1461 = sld [smem:[#allocation2 + $0x3]]
        %v1462 = vstv %s1461
        %v1464 = vsel %vm612, %v1459, 0
        %v1467 = vsel %vm616, %v1460, 0
        %1469 = vmatpush.msra.mxu0 0.0
        %1470 = vmatpush.msra.mxu0 0.0
        %1471 = vmatpush.msra.mxu0 0.0
        %1472 = vmatpush.msra.mxu0 0.0
        %1473 = vmatpush.msra.mxu0 0.0
        %1474 = vmatpush.msra.mxu0 0.0
        %1475 = vmatpush.msra.mxu0 0.0
        %1476 = vmatpush.msra.mxu0 0.0
        %1477 = vmatpush.msra.mxu0 0.0
        %1478 = vmatpush.msra.mxu0 0.0
        %1479 = vmatpush.msra.mxu0 0.0
        %1480 = vmatpush.msra.mxu0 0.0
        %1481 = vmatpush.msra.mxu0 0.0
        %1482 = vmatpush.msra.mxu0 0.0
        %1483 = vmatpush.msra.mxu0 0.0
        %1484 = vmatpush.msra.mxu0 %v1467
        %1485 = vmatmul.f32.gmra.mxu0 %v1464
        %v1486 = vpop.f32.mrf.mxu0
        %v1487 = vadd.f32 %v1462, %v1486
        %1488 = vdwg.mxu0
        %v1489 = vmax.f32 %v1487, 0.0
        %v1490 = vld [vmem:[%s12] sm:$0xff]
        %v1491 = vld [vmem:[%s12 + $0x8] sm:$0xff]
        %s1492 = sld [smem:[#allocation2 + $0x4]]
        %v1493 = vstv %s1492
        %1494 = vmatpush.msra.mxu0 0.0
        %1495 = vmatpush.msra.mxu0 0.0
        %1496 = vmatpush.msra.mxu0 0.0
        %1497 = vmatpush.msra.mxu0 0.0
        %1498 = vmatpush.msra.mxu0 0.0
        %1499 = vmatpush.msra.mxu0 0.0
        %1500 = vmatpush.msra.mxu0 0.0
        %1501 = vmatpush.msra.mxu0 0.0
        %1502 = vmatpush.msra.mxu0 0.0
        %1503 = vmatpush.msra.mxu0 0.0
        %1504 = vmatpush.msra.mxu0 0.0
        %1505 = vmatpush.msra.mxu0 0.0
        %1506 = vmatpush.msra.mxu0 0.0
        %1507 = vmatpush.msra.mxu0 0.0
        %1508 = vmatpush.msra.mxu0 %v1491
        %1509 = vmatpush.msra.mxu0 %v1490
        %1510 = vmatmul.f32.gmra.mxu0 %v1336
        %v1511 = vpop.f32.mrf.mxu0
        %v1512 = vadd.f32 %v1493, %v1511
        %1513 = vdwg.mxu0
        %v1514 = vmax.f32 %v1512, 0.0
        %v1515 = vld [vmem:[%s13] sm:$0xff]
        %v1516 = vld [vmem:[%s13 + $0x8] sm:$0xff]
        %v1517 = vld [vmem:[%s13 + $0x10] sm:$0xff]
        %v1518 = vld [vmem:[%s13 + $0x18] sm:$0xff]
        %v1519 = vld [vmem:[%s13 + $0x20] sm:$0xff]
        %v1520 = vld [vmem:[%s13 + $0x28] sm:$0xff]
        %v1521 = vld [vmem:[%s13 + $0x30] sm:$0xff]
        %v1522 = vld [vmem:[%s13 + $0x38] sm:$0xff]
        %s1523 = sld [smem:[#allocation2 + $0x5]]
        %v1524 = vstv %s1523
        %1525 = vmatpush.msra.mxu0 0.0
        %1526 = vmatpush.msra.mxu0 0.0
        %1527 = vmatpush.msra.mxu0 0.0
        %1528 = vmatpush.msra.mxu0 0.0
        %1529 = vmatpush.msra.mxu0 0.0
        %1530 = vmatpush.msra.mxu0 0.0
        %1531 = vmatpush.msra.mxu0 0.0
        %1532 = vmatpush.msra.mxu0 0.0
        %1533 = vmatpush.msra.mxu0 %v1522
        %1534 = vmatpush.msra.mxu0 %v1521
        %1535 = vmatpush.msra.mxu0 %v1520
        %1536 = vmatpush.msra.mxu0 %v1519
        %1537 = vmatpush.msra.mxu0 %v1518
        %1538 = vmatpush.msra.mxu0 %v1517
        %1539 = vmatpush.msra.mxu0 %v1516
        %1540 = vmatpush.msra.mxu0 %v1515
        %1541 = vmatmul.f32.gmra.mxu0 %v1192
        %v1542 = vpop.f32.mrf.mxu0
        %v1543 = vadd.f32 %v1524, %v1542
        %1544 = vdwg.mxu0
        %v1545 = vmax.f32 %v1543, 0.0
        %v1546 = vld [vmem:[%s14] sm:$0xf]
        %v1548 = vsel %vm612, %v1489, 0
        %v1551 = vsel %vm616, %v1546, 0
        %1553 = vmatpush.msra.mxu0 0.0
        %1554 = vmatpush.msra.mxu0 0.0
        %1555 = vmatpush.msra.mxu0 0.0
        %1556 = vmatpush.msra.mxu0 0.0
        %1557 = vmatpush.msra.mxu0 0.0
        %1558 = vmatpush.msra.mxu0 0.0
        %1559 = vmatpush.msra.mxu0 0.0
        %1560 = vmatpush.msra.mxu0 0.0
        %1561 = vmatpush.msra.mxu0 0.0
        %1562 = vmatpush.msra.mxu0 0.0
        %1563 = vmatpush.msra.mxu0 0.0
        %1564 = vmatpush.msra.mxu0 0.0
        %1565 = vmatpush.msra.mxu0 0.0
        %1566 = vmatpush.msra.mxu0 0.0
        %1567 = vmatpush.msra.mxu0 0.0
        %1568 = vmatpush.msra.mxu0 %v1551
        %1569 = vmatmul.f32.gmra.mxu0 %v1548
        %v1570 = vpop.f32.mrf.mxu0
        %v1571 = vadd.f32 0.0, %v1570
        %1572 = vdwg.mxu0
        %v1573 = vadd.f32 %v1514, %v1571
        %v1574 = vld [vmem:[%s15] sm:$0xff]
        %v1575 = vld [vmem:[%s15 + $0x8] sm:$0xff]
        %v1577 = vsel %vm1308, %v1573, 0
        %1579 = vmatpush.msra.mxu0 0.0
        %1580 = vmatpush.msra.mxu0 0.0
        %1581 = vmatpush.msra.mxu0 0.0
        %1582 = vmatpush.msra.mxu0 0.0
        %1583 = vmatpush.msra.mxu0 0.0
        %1584 = vmatpush.msra.mxu0 0.0
        %1585 = vmatpush.msra.mxu0 0.0
        %1586 = vmatpush.msra.mxu0 0.0
        %1587 = vmatpush.msra.mxu0 0.0
        %1588 = vmatpush.msra.mxu0 0.0
        %1589 = vmatpush.msra.mxu0 0.0
        %1590 = vmatpush.msra.mxu0 0.0
        %1591 = vmatpush.msra.mxu0 0.0
        %1592 = vmatpush.msra.mxu0 0.0
        %1593 = vmatpush.msra.mxu0 %v1575
        %1594 = vmatpush.msra.mxu0 %v1574
        %1595 = vmatmul.f32.gmra.mxu0 %v1577
        %v1596 = vpop.f32.mrf.mxu0
        %v1597 = vadd.f32 0.0, %v1596
        %1598 = vdwg.mxu0
        %v1599 = vadd.f32 %v1545, %v1597
        %v1600 = vld [vmem:[%s16] sm:$0xff]
        %v1601 = vld [vmem:[%s16 + $0x8] sm:$0xff]
        %v1602 = vld [vmem:[%s16 + $0x10] sm:$0xff]
        %v1603 = vld [vmem:[%s16 + $0x18] sm:$0xff]
        %v1604 = vld [vmem:[%s16 + $0x20] sm:$0xff]
        %v1605 = vld [vmem:[%s16 + $0x28] sm:$0xff]
        %v1606 = vld [vmem:[%s16 + $0x30] sm:$0xff]
        %v1607 = vld [vmem:[%s16 + $0x38] sm:$0xff]
        %v1608 = vld [vmem:[%s16 + $0x40] sm:$0xff]
        %v1609 = vld [vmem:[%s16 + $0x48] sm:$0xff]
        %v1610 = vld [vmem:[%s16 + $0x50] sm:$0xff]
        %v1611 = vld [vmem:[%s16 + $0x58] sm:$0xff]
        %v1612 = vld [vmem:[%s16 + $0x60] sm:$0xff]
        %v1613 = vld [vmem:[%s16 + $0x68] sm:$0xff]
        %v1614 = vld [vmem:[%s16 + $0x70] sm:$0xff]
        %v1615 = vld [vmem:[%s16 + $0x78] sm:$0xff]
        %v1617 = vsel %vm1068, %v1599, 0
        %1619 = vmatpush.msra.mxu0 0.0
        %1620 = vmatpush.msra.mxu0 0.0
        %1621 = vmatpush.msra.mxu0 0.0
        %1622 = vmatpush.msra.mxu0 0.0
        %1623 = vmatpush.msra.mxu0 0.0
        %1624 = vmatpush.msra.mxu0 0.0
        %1625 = vmatpush.msra.mxu0 0.0
        %1626 = vmatpush.msra.mxu0 0.0
        %1627 = vmatpush.msra.mxu0 %v1614
        %1628 = vmatpush.msra.mxu0 %v1612
        %1629 = vmatpush.msra.mxu0 %v1610
        %1630 = vmatpush.msra.mxu0 %v1608
        %1631 = vmatpush.msra.mxu0 %v1606
        %1632 = vmatpush.msra.mxu0 %v1604
        %1633 = vmatpush.msra.mxu0 %v1602
        %1634 = vmatpush.msra.mxu0 %v1600
        %1635 = vmatmul.f32.gmra.mxu0 %v1617
        %v1636 = vpop.f32.mrf.mxu0
        %v1637 = vadd.f32 0.0, %v1636
        %1638 = vdwg.mxu0
        %1639 = vmatpush.msra.mxu0 0.0
        %1640 = vmatpush.msra.mxu0 0.0
        %1641 = vmatpush.msra.mxu0 0.0
        %1642 = vmatpush.msra.mxu0 0.0
        %1643 = vmatpush.msra.mxu0 0.0
        %1644 = vmatpush.msra.mxu0 0.0
        %1645 = vmatpush.msra.mxu0 0.0
        %1646 = vmatpush.msra.mxu0 0.0
        %1647 = vmatpush.msra.mxu0 %v1615
        %1648 = vmatpush.msra.mxu0 %v1613
        %1649 = vmatpush.msra.mxu0 %v1611
        %1650 = vmatpush.msra.mxu0 %v1609
        %1651 = vmatpush.msra.mxu0 %v1607
        %1652 = vmatpush.msra.mxu0 %v1605
        %1653 = vmatpush.msra.mxu0 %v1603
        %1654 = vmatpush.msra.mxu0 %v1601
        %1655 = vmatmul.f32.gmra.mxu0 %v1617
        %v1656 = vpop.f32.mrf.mxu0
        %v1657 = vadd.f32 0.0, %v1656
        %1658 = vdwg.mxu0
        %v1659 = vperm.slane %v1637, 0
        %v1660 = vperm.slane %v1657, 0
        %v1661 = vmul.f32 %v1659, %v661
        %v1662 = vmul.f32 %v1660, %v662
        %1664 = vset.pattern.permute.xlu0 0
        %1665 = vperm.xlu0 %1664, %v734
        %v1666 = vpop.permute.xlu0 %1665
        %v1668 = vadd.f32 %v1661, %v1666
        %v1669 = vadd.f32 %v1662, %v1666
        %v1672 = vrot.slane %v1669, 4
        %v1673 = vsel %vm616, %v1668, %v1672
        %1675 = vst [vmem:[%s596] sm:$0xff] %v1673
        %s1676 = scalar_lea.vmem %s589, 8
        %v1677 = vld [vmem:[%s1676] sm:$0xff]
        %1679 = vst [vmem:[#allocation1] ss:$2 sm:$0xff] %v1677
        %v1680 = vld.sshfl [vmem:[#allocation1] sm:$0xff pattern:$0x75316420]
        %v1681 = vld.sshfl [vmem:[#allocation1 + $0x8] sm:$0xff pattern:$0x75316420]
        %v1682 = vsel %vm616, %v1680, 0
        %v1684 = vsel %vm616, %v1681, 0
        %1686 = vmatpush.msra.mxu0 0.0
        %1687 = vmatpush.msra.mxu0 0.0
        %1688 = vmatpush.msra.mxu0 0.0
        %1689 = vmatpush.msra.mxu0 0.0
        %1690 = vmatpush.msra.mxu0 0.0
        %1691 = vmatpush.msra.mxu0 0.0
        %1692 = vmatpush.msra.mxu0 0.0
        %1693 = vmatpush.msra.mxu0 0.0
        %1694 = vmatpush.msra.mxu0 0.0
        %1695 = vmatpush.msra.mxu0 0.0
        %1696 = vmatpush.msra.mxu0 0.0
        %1697 = vmatpush.msra.mxu0 0.0
        %1698 = vmatpush.msra.mxu0 0.0
        %1699 = vmatpush.msra.mxu0 0.0
        %1700 = vmatpush.msra.mxu0 0.0
        %1701 = vmatpush.msra.mxu0 %v1682
        %1702 = vmatmul.f32.gmra.mxu0 %v614
        %v1703 = vpop.f32.mrf.mxu0
        %v1704 = vadd.f32 %v606, %v1703
        %1705 = vdwg.mxu0
        %1706 = vmatpush.msra.mxu0 0.0
        %1707 = vmatpush.msra.mxu0 0.0
        %1708 = vmatpush.msra.mxu0 0.0
        %1709 = vmatpush.msra.mxu0 0.0
        %1710 = vmatpush.msra.mxu0 0.0
        %1711 = vmatpush.msra.mxu0 0.0
        %1712 = vmatpush.msra.mxu0 0.0
        %1713 = vmatpush.msra.mxu0 0.0
        %1714 = vmatpush.msra.mxu0 0.0
        %1715 = vmatpush.msra.mxu0 0.0
        %1716 = vmatpush.msra.mxu0 0.0
        %1717 = vmatpush.msra.mxu0 0.0
        %1718 = vmatpush.msra.mxu0 0.0
        %1719 = vmatpush.msra.mxu0 0.0
        %1720 = vmatpush.msra.mxu0 0.0
        %1721 = vmatpush.msra.mxu0 %v1684
        %1722 = vmatmul.f32.gmra.mxu0 %v614
        %v1723 = vpop.f32.mrf.mxu0
        %v1724 = vadd.f32 %v606, %v1723
        %1725 = vdwg.mxu0
        %v1726 = vmax.f32 %v1704, 0.0
        %v1727 = vmax.f32 %v1724, 0.0
        %1728 = vst [vmem:[#allocation1] ss:$2 sm:$0xff] %v1677
        %v1729 = vld.sshfl [vmem:[#allocation1] sm:$0xff pattern:$0x75316420]
        %v1730 = vld.sshfl [vmem:[#allocation1 + $0x8] sm:$0xff pattern:$0x75316420]
        %1733 = vmatpush.msra.mxu0 0.00390625
        %1734 = vmatpush.msra.mxu0 0.00390625
        %1735 = vmatpush.msra.mxu0 0.00390625
        %1736 = vmatpush.msra.mxu0 0.00390625
        %1737 = vmatpush.msra.mxu0 0.00390625
        %1738 = vmatpush.msra.mxu0 0.00390625
        %1739 = vmatpush.msra.mxu0 0.00390625
        %1740 = vmatpush.msra.mxu0 0.00390625
        %1741 = vmatpush.msra.mxu0 0.00390625
        %1742 = vmatpush.msra.mxu0 0.00390625
        %1743 = vmatpush.msra.mxu0 0.00390625
        %1744 = vmatpush.msra.mxu0 0.00390625
        %1745 = vmatpush.msra.mxu0 0.00390625
        %1746 = vmatpush.msra.mxu0 0.00390625
        %1747 = vmatpush.msra.mxu0 0.00390625
        %1748 = vmatpush.msra.mxu0 0.00390625
        %1749 = vmatmul.f32.gmra.mxu0 %v1729
        %v1750 = vpop.f32.mrf.mxu0
        %v1751 = vadd.f32 0.0, %v1750
        %1752 = vdwg.mxu0
        %1753 = vmatpush.msra.mxu0 0.00390625
        %1754 = vmatpush.msra.mxu0 0.00390625
        %1755 = vmatpush.msra.mxu0 0.00390625
        %1756 = vmatpush.msra.mxu0 0.00390625
        %1757 = vmatpush.msra.mxu0 0.00390625
        %1758 = vmatpush.msra.mxu0 0.00390625
        %1759 = vmatpush.msra.mxu0 0.00390625
        %1760 = vmatpush.msra.mxu0 0.00390625
        %1761 = vmatpush.msra.mxu0 0.00390625
        %1762 = vmatpush.msra.mxu0 0.00390625
        %1763 = vmatpush.msra.mxu0 0.00390625
        %1764 = vmatpush.msra.mxu0 0.00390625
        %1765 = vmatpush.msra.mxu0 0.00390625
        %1766 = vmatpush.msra.mxu0 0.00390625
        %1767 = vmatpush.msra.mxu0 0.00390625
        %1768 = vmatpush.msra.mxu0 0.00390625
        %1769 = vmatmul.f32.gmra.mxu0 %v1730
        %v1770 = vpop.f32.mrf.mxu0
        %v1771 = vadd.f32 %v1751, %v1770
        %1772 = vdwg.mxu0
        %v1774 = vsel %vm616, %v1771, 0
        %1776 = vmatpush.msra.mxu0 0.0
        %1777 = vmatpush.msra.mxu0 0.0
        %1778 = vmatpush.msra.mxu0 0.0
        %1779 = vmatpush.msra.mxu0 0.0
        %1780 = vmatpush.msra.mxu0 0.0
        %1781 = vmatpush.msra.mxu0 0.0
        %1782 = vmatpush.msra.mxu0 0.0
        %1783 = vmatpush.msra.mxu0 0.0
        %1784 = vmatpush.msra.mxu0 0.0
        %1785 = vmatpush.msra.mxu0 0.0
        %1786 = vmatpush.msra.mxu0 0.0
        %1787 = vmatpush.msra.mxu0 0.0
        %1788 = vmatpush.msra.mxu0 0.0
        %1789 = vmatpush.msra.mxu0 0.0
        %1790 = vmatpush.msra.mxu0 0.0
        %1791 = vmatpush.msra.mxu0 %v1774
        %1792 = vmatmul.f32.gmra.mxu0 %v709
        %v1793 = vpop.f32.mrf.mxu0
        %v1794 = vadd.f32 %v601, %v1793
        %1795 = vdwg.mxu0
        %v1796 = vmax.f32 %v1794, 0.0
        %v1797 = vld [vmem:[%s5] sm:$0xff]
        %v1798 = vld [vmem:[%s5 + $0x8] sm:$0xff]
        %v1799 = vld [vmem:[%s5 + $0x10] sm:$0xff]
        %v1800 = vld [vmem:[%s5 + $0x18] sm:$0xff]
        %v1801 = vld [vmem:[%s5 + $0x20] sm:$0xff]
        %v1802 = vld [vmem:[%s5 + $0x28] sm:$0xff]
        %v1803 = vld [vmem:[%s5 + $0x30] sm:$0xff]
        %v1804 = vld [vmem:[%s5 + $0x38] sm:$0xff]
        %v1805 = vld [vmem:[%s5 + $0x40] sm:$0xff]
        %v1806 = vld [vmem:[%s5 + $0x48] sm:$0xff]
        %v1807 = vld [vmem:[%s5 + $0x50] sm:$0xff]
        %v1808 = vld [vmem:[%s5 + $0x58] sm:$0xff]
        %v1809 = vld [vmem:[%s5 + $0x60] sm:$0xff]
        %v1810 = vld [vmem:[%s5 + $0x68] sm:$0xff]
        %v1811 = vld [vmem:[%s5 + $0x70] sm:$0xff]
        %v1812 = vld [vmem:[%s5 + $0x78] sm:$0xff]
        %v1813 = vld [vmem:[%s5 + $0x80] sm:$0xff]
        %v1814 = vld [vmem:[%s5 + $0x88] sm:$0xff]
        %v1815 = vld [vmem:[%s5 + $0x90] sm:$0xff]
        %v1816 = vld [vmem:[%s5 + $0x98] sm:$0xff]
        %v1817 = vld [vmem:[%s5 + $0xa0] sm:$0xff]
        %v1818 = vld [vmem:[%s5 + $0xa8] sm:$0xff]
        %v1819 = vld [vmem:[%s5 + $0xb0] sm:$0xff]
        %v1820 = vld [vmem:[%s5 + $0xb8] sm:$0xff]
        %v1821 = vld [vmem:[%s5 + $0xc0] sm:$0xff]
        %v1822 = vld [vmem:[%s5 + $0xc8] sm:$0xff]
        %v1823 = vld [vmem:[%s5 + $0xd0] sm:$0xff]
        %v1824 = vld [vmem:[%s5 + $0xd8] sm:$0xff]
        %v1825 = vld [vmem:[%s5 + $0xe0] sm:$0xff]
        %v1826 = vld [vmem:[%s5 + $0xe8] sm:$0xff]
        %v1827 = vld [vmem:[%s5 + $0xf0] sm:$0xff]
        %v1828 = vld [vmem:[%s5 + $0xf8] sm:$0xff]
        %1829 = vst [vmem:[#allocation1] ss:$2 sm:$0xff] %v1677
        %v1830 = vld.sshfl [vmem:[#allocation1] sm:$0xff pattern:$0x75316420]
        %v1831 = vld.sshfl [vmem:[#allocation1 + $0x8] sm:$0xff pattern:$0x75316420]
        %1834 = vmatpush.msra.mxu0 %v1812
        %1835 = vmatpush.msra.mxu0 %v1811
        %1836 = vmatpush.msra.mxu0 %v1810
        %1837 = vmatpush.msra.mxu0 %v1809
        %1838 = vmatpush.msra.mxu0 %v1808
        %1839 = vmatpush.msra.mxu0 %v1807
        %1840 = vmatpush.msra.mxu0 %v1806
        %1841 = vmatpush.msra.mxu0 %v1805
        %1842 = vmatpush.msra.mxu0 %v1804
        %1843 = vmatpush.msra.mxu0 %v1803
        %1844 = vmatpush.msra.mxu0 %v1802
        %1845 = vmatpush.msra.mxu0 %v1801
        %1846 = vmatpush.msra.mxu0 %v1800
        %1847 = vmatpush.msra.mxu0 %v1799
        %1848 = vmatpush.msra.mxu0 %v1798
        %1849 = vmatpush.msra.mxu0 %v1797
        %1850 = vmatmul.f32.gmra.mxu0 %v1830
        %v1851 = vpop.f32.mrf.mxu0
        %v1852 = vadd.f32 0.0, %v1851
        %1853 = vdwg.mxu0
        %1854 = vmatpush.msra.mxu0 %v1828
        %1855 = vmatpush.msra.mxu0 %v1827
        %1856 = vmatpush.msra.mxu0 %v1826
        %1857 = vmatpush.msra.mxu0 %v1825
        %1858 = vmatpush.msra.mxu0 %v1824
        %1859 = vmatpush.msra.mxu0 %v1823
        %1860 = vmatpush.msra.mxu0 %v1822
        %1861 = vmatpush.msra.mxu0 %v1821
        %1862 = vmatpush.msra.mxu0 %v1820
        %1863 = vmatpush.msra.mxu0 %v1819
        %1864 = vmatpush.msra.mxu0 %v1818
        %1865 = vmatpush.msra.mxu0 %v1817
        %1866 = vmatpush.msra.mxu0 %v1816
        %1867 = vmatpush.msra.mxu0 %v1815
        %1868 = vmatpush.msra.mxu0 %v1814
        %1869 = vmatpush.msra.mxu0 %v1813
        %1870 = vmatmul.f32.gmra.mxu0 %v1831
        %v1871 = vpop.f32.mrf.mxu0
        %v1872 = vadd.f32 %v1852, %v1871
        %1873 = vdwg.mxu0
        %v1874 = vld [vmem:[%s812] sm:$0xff]
        %v1875 = vld [vmem:[%s812 + $0x8] sm:$0xff]
        %v1876 = vld [vmem:[%s812 + $0x10] sm:$0xff]
        %v1877 = vld [vmem:[%s812 + $0x18] sm:$0xff]
        %v1878 = vld [vmem:[%s812 + $0x20] sm:$0xff]
        %v1879 = vld [vmem:[%s812 + $0x28] sm:$0xff]
        %v1880 = vld [vmem:[%s812 + $0x30] sm:$0xff]
        %v1881 = vld [vmem:[%s812 + $0x38] sm:$0xff]
        %v1882 = vld [vmem:[%s812 + $0x40] sm:$0xff]
        %v1883 = vld [vmem:[%s812 + $0x48] sm:$0xff]
        %v1884 = vld [vmem:[%s812 + $0x50] sm:$0xff]
        %v1885 = vld [vmem:[%s812 + $0x58] sm:$0xff]
        %v1886 = vld [vmem:[%s812 + $0x60] sm:$0xff]
        %v1887 = vld [vmem:[%s812 + $0x68] sm:$0xff]
        %v1888 = vld [vmem:[%s812 + $0x70] sm:$0xff]
        %v1889 = vld [vmem:[%s812 + $0x78] sm:$0xff]
        %v1890 = vld [vmem:[%s812 + $0x80] sm:$0xff]
        %v1891 = vld [vmem:[%s812 + $0x88] sm:$0xff]
        %v1892 = vld [vmem:[%s812 + $0x90] sm:$0xff]
        %v1893 = vld [vmem:[%s812 + $0x98] sm:$0xff]
        %v1894 = vld [vmem:[%s812 + $0xa0] sm:$0xff]
        %v1895 = vld [vmem:[%s812 + $0xa8] sm:$0xff]
        %v1896 = vld [vmem:[%s812 + $0xb0] sm:$0xff]
        %v1897 = vld [vmem:[%s812 + $0xb8] sm:$0xff]
        %v1898 = vld [vmem:[%s812 + $0xc0] sm:$0xff]
        %v1899 = vld [vmem:[%s812 + $0xc8] sm:$0xff]
        %v1900 = vld [vmem:[%s812 + $0xd0] sm:$0xff]
        %v1901 = vld [vmem:[%s812 + $0xd8] sm:$0xff]
        %v1902 = vld [vmem:[%s812 + $0xe0] sm:$0xff]
        %v1903 = vld [vmem:[%s812 + $0xe8] sm:$0xff]
        %v1904 = vld [vmem:[%s812 + $0xf0] sm:$0xff]
        %v1905 = vld [vmem:[%s812 + $0xf8] sm:$0xff]
        %1906 = vst [vmem:[#allocation1] ss:$2 sm:$0xff] %v1677
        %v1907 = vld.sshfl [vmem:[#allocation1] sm:$0xff pattern:$0x75316420]
        %v1908 = vld.sshfl [vmem:[#allocation1 + $0x8] sm:$0xff pattern:$0x75316420]
        %1911 = vmatpush.msra.mxu0 %v1889
        %1912 = vmatpush.msra.mxu0 %v1888
        %1913 = vmatpush.msra.mxu0 %v1887
        %1914 = vmatpush.msra.mxu0 %v1886
        %1915 = vmatpush.msra.mxu0 %v1885
        %1916 = vmatpush.msra.mxu0 %v1884
        %1917 = vmatpush.msra.mxu0 %v1883
        %1918 = vmatpush.msra.mxu0 %v1882
        %1919 = vmatpush.msra.mxu0 %v1881
        %1920 = vmatpush.msra.mxu0 %v1880
        %1921 = vmatpush.msra.mxu0 %v1879
        %1922 = vmatpush.msra.mxu0 %v1878
        %1923 = vmatpush.msra.mxu0 %v1877
        %1924 = vmatpush.msra.mxu0 %v1876
        %1925 = vmatpush.msra.mxu0 %v1875
        %1926 = vmatpush.msra.mxu0 %v1874
        %1927 = vmatmul.f32.gmra.mxu0 %v1907
        %v1928 = vpop.f32.mrf.mxu0
        %v1929 = vadd.f32 0.0, %v1928
        %1930 = vdwg.mxu0
        %1931 = vmatpush.msra.mxu0 %v1905
        %1932 = vmatpush.msra.mxu0 %v1904
        %1933 = vmatpush.msra.mxu0 %v1903
        %1934 = vmatpush.msra.mxu0 %v1902
        %1935 = vmatpush.msra.mxu0 %v1901
        %1936 = vmatpush.msra.mxu0 %v1900
        %1937 = vmatpush.msra.mxu0 %v1899
        %1938 = vmatpush.msra.mxu0 %v1898
        %1939 = vmatpush.msra.mxu0 %v1897
        %1940 = vmatpush.msra.mxu0 %v1896
        %1941 = vmatpush.msra.mxu0 %v1895
        %1942 = vmatpush.msra.mxu0 %v1894
        %1943 = vmatpush.msra.mxu0 %v1893
        %1944 = vmatpush.msra.mxu0 %v1892
        %1945 = vmatpush.msra.mxu0 %v1891
        %1946 = vmatpush.msra.mxu0 %v1890
        %1947 = vmatmul.f32.gmra.mxu0 %v1908
        %v1948 = vpop.f32.mrf.mxu0
        %v1949 = vadd.f32 %v1929, %v1948
        %1950 = vdwg.mxu0
        %v1951 = vmax.f32 %v1872, %v1949
        %v1952 = vld [vmem:[%s891] sm:$0xff]
        %v1953 = vld [vmem:[%s891 + $0x8] sm:$0xff]
        %v1954 = vld [vmem:[%s891 + $0x10] sm:$0xff]
        %v1955 = vld [vmem:[%s891 + $0x18] sm:$0xff]
        %v1956 = vld [vmem:[%s891 + $0x20] sm:$0xff]
        %v1957 = vld [vmem:[%s891 + $0x28] sm:$0xff]
        %v1958 = vld [vmem:[%s891 + $0x30] sm:$0xff]
        %v1959 = vld [vmem:[%s891 + $0x38] sm:$0xff]
        %v1960 = vld [vmem:[%s891 + $0x40] sm:$0xff]
        %v1961 = vld [vmem:[%s891 + $0x48] sm:$0xff]
        %v1962 = vld [vmem:[%s891 + $0x50] sm:$0xff]
        %v1963 = vld [vmem:[%s891 + $0x58] sm:$0xff]
        %v1964 = vld [vmem:[%s891 + $0x60] sm:$0xff]
        %v1965 = vld [vmem:[%s891 + $0x68] sm:$0xff]
        %v1966 = vld [vmem:[%s891 + $0x70] sm:$0xff]
        %v1967 = vld [vmem:[%s891 + $0x78] sm:$0xff]
        %v1968 = vld [vmem:[%s891 + $0x80] sm:$0xff]
        %v1969 = vld [vmem:[%s891 + $0x88] sm:$0xff]
        %v1970 = vld [vmem:[%s891 + $0x90] sm:$0xff]
        %v1971 = vld [vmem:[%s891 + $0x98] sm:$0xff]
        %v1972 = vld [vmem:[%s891 + $0xa0] sm:$0xff]
        %v1973 = vld [vmem:[%s891 + $0xa8] sm:$0xff]
        %v1974 = vld [vmem:[%s891 + $0xb0] sm:$0xff]
        %v1975 = vld [vmem:[%s891 + $0xb8] sm:$0xff]
        %v1976 = vld [vmem:[%s891 + $0xc0] sm:$0xff]
        %v1977 = vld [vmem:[%s891 + $0xc8] sm:$0xff]
        %v1978 = vld [vmem:[%s891 + $0xd0] sm:$0xff]
        %v1979 = vld [vmem:[%s891 + $0xd8] sm:$0xff]
        %v1980 = vld [vmem:[%s891 + $0xe0] sm:$0xff]
        %v1981 = vld [vmem:[%s891 + $0xe8] sm:$0xff]
        %v1982 = vld [vmem:[%s891 + $0xf0] sm:$0xff]
        %v1983 = vld [vmem:[%s891 + $0xf8] sm:$0xff]
        %1984 = vst [vmem:[#allocation1] ss:$2 sm:$0xff] %v1677
        %v1985 = vld.sshfl [vmem:[#allocation1] sm:$0xff pattern:$0x75316420]
        %v1986 = vld.sshfl [vmem:[#allocation1 + $0x8] sm:$0xff pattern:$0x75316420]
        %1989 = vmatpush.msra.mxu0 %v1967
        %1990 = vmatpush.msra.mxu0 %v1966
        %1991 = vmatpush.msra.mxu0 %v1965
        %1992 = vmatpush.msra.mxu0 %v1964
        %1993 = vmatpush.msra.mxu0 %v1963
        %1994 = vmatpush.msra.mxu0 %v1962
        %1995 = vmatpush.msra.mxu0 %v1961
        %1996 = vmatpush.msra.mxu0 %v1960
        %1997 = vmatpush.msra.mxu0 %v1959
        %1998 = vmatpush.msra.mxu0 %v1958
        %1999 = vmatpush.msra.mxu0 %v1957
        %2000 = vmatpush.msra.mxu0 %v1956
        %2001 = vmatpush.msra.mxu0 %v1955
        %2002 = vmatpush.msra.mxu0 %v1954
        %2003 = vmatpush.msra.mxu0 %v1953
        %2004 = vmatpush.msra.mxu0 %v1952
        %2005 = vmatmul.f32.gmra.mxu0 %v1985
        %v2006 = vpop.f32.mrf.mxu0
        %v2007 = vadd.f32 0.0, %v2006
        %2008 = vdwg.mxu0
        %2009 = vmatpush.msra.mxu0 %v1983
        %2010 = vmatpush.msra.mxu0 %v1982
        %2011 = vmatpush.msra.mxu0 %v1981
        %2012 = vmatpush.msra.mxu0 %v1980
        %2013 = vmatpush.msra.mxu0 %v1979
        %2014 = vmatpush.msra.mxu0 %v1978
        %2015 = vmatpush.msra.mxu0 %v1977
        %2016 = vmatpush.msra.mxu0 %v1976
        %2017 = vmatpush.msra.mxu0 %v1975
        %2018 = vmatpush.msra.mxu0 %v1974
        %2019 = vmatpush.msra.mxu0 %v1973
        %2020 = vmatpush.msra.mxu0 %v1972
        %2021 = vmatpush.msra.mxu0 %v1971
        %2022 = vmatpush.msra.mxu0 %v1970
        %2023 = vmatpush.msra.mxu0 %v1969
        %2024 = vmatpush.msra.mxu0 %v1968
        %2025 = vmatmul.f32.gmra.mxu0 %v1986
        %v2026 = vpop.f32.mrf.mxu0
        %v2027 = vadd.f32 %v2007, %v2026
        %2028 = vdwg.mxu0
        %v2029 = vmax.f32 %v1951, %v2027
        %v2030 = vld [vmem:[%s970] sm:$0xff]
        %v2031 = vld [vmem:[%s970 + $0x8] sm:$0xff]
        %v2032 = vld [vmem:[%s970 + $0x10] sm:$0xff]
        %v2033 = vld [vmem:[%s970 + $0x18] sm:$0xff]
        %v2034 = vld [vmem:[%s970 + $0x20] sm:$0xff]
        %v2035 = vld [vmem:[%s970 + $0x28] sm:$0xff]
        %v2036 = vld [vmem:[%s970 + $0x30] sm:$0xff]
        %v2037 = vld [vmem:[%s970 + $0x38] sm:$0xff]
        %v2038 = vld [vmem:[%s970 + $0x40] sm:$0xff]
        %v2039 = vld [vmem:[%s970 + $0x48] sm:$0xff]
        %v2040 = vld [vmem:[%s970 + $0x50] sm:$0xff]
        %v2041 = vld [vmem:[%s970 + $0x58] sm:$0xff]
        %v2042 = vld [vmem:[%s970 + $0x60] sm:$0xff]
        %v2043 = vld [vmem:[%s970 + $0x68] sm:$0xff]
        %v2044 = vld [vmem:[%s970 + $0x70] sm:$0xff]
        %v2045 = vld [vmem:[%s970 + $0x78] sm:$0xff]
        %v2046 = vld [vmem:[%s970 + $0x80] sm:$0xff]
        %v2047 = vld [vmem:[%s970 + $0x88] sm:$0xff]
        %v2048 = vld [vmem:[%s970 + $0x90] sm:$0xff]
        %v2049 = vld [vmem:[%s970 + $0x98] sm:$0xff]
        %v2050 = vld [vmem:[%s970 + $0xa0] sm:$0xff]
        %v2051 = vld [vmem:[%s970 + $0xa8] sm:$0xff]
        %v2052 = vld [vmem:[%s970 + $0xb0] sm:$0xff]
        %v2053 = vld [vmem:[%s970 + $0xb8] sm:$0xff]
        %v2054 = vld [vmem:[%s970 + $0xc0] sm:$0xff]
        %v2055 = vld [vmem:[%s970 + $0xc8] sm:$0xff]
        %v2056 = vld [vmem:[%s970 + $0xd0] sm:$0xff]
        %v2057 = vld [vmem:[%s970 + $0xd8] sm:$0xff]
        %v2058 = vld [vmem:[%s970 + $0xe0] sm:$0xff]
        %v2059 = vld [vmem:[%s970 + $0xe8] sm:$0xff]
        %v2060 = vld [vmem:[%s970 + $0xf0] sm:$0xff]
        %v2061 = vld [vmem:[%s970 + $0xf8] sm:$0xff]
        %2062 = vst [vmem:[#allocation1] ss:$2 sm:$0xff] %v1677
        %v2063 = vld.sshfl [vmem:[#allocation1] sm:$0xff pattern:$0x75316420]
        %v2064 = vld.sshfl [vmem:[#allocation1 + $0x8] sm:$0xff pattern:$0x75316420]
        %2067 = vmatpush.msra.mxu0 %v2045
        %2068 = vmatpush.msra.mxu0 %v2044
        %2069 = vmatpush.msra.mxu0 %v2043
        %2070 = vmatpush.msra.mxu0 %v2042
        %2071 = vmatpush.msra.mxu0 %v2041
        %2072 = vmatpush.msra.mxu0 %v2040
        %2073 = vmatpush.msra.mxu0 %v2039
        %2074 = vmatpush.msra.mxu0 %v2038
        %2075 = vmatpush.msra.mxu0 %v2037
        %2076 = vmatpush.msra.mxu0 %v2036
        %2077 = vmatpush.msra.mxu0 %v2035
        %2078 = vmatpush.msra.mxu0 %v2034
        %2079 = vmatpush.msra.mxu0 %v2033
        %2080 = vmatpush.msra.mxu0 %v2032
        %2081 = vmatpush.msra.mxu0 %v2031
        %2082 = vmatpush.msra.mxu0 %v2030
        %2083 = vmatmul.f32.gmra.mxu0 %v2063
        %v2084 = vpop.f32.mrf.mxu0
        %v2085 = vadd.f32 0.0, %v2084
        %2086 = vdwg.mxu0
        %2087 = vmatpush.msra.mxu0 %v2061
        %2088 = vmatpush.msra.mxu0 %v2060
        %2089 = vmatpush.msra.mxu0 %v2059
        %2090 = vmatpush.msra.mxu0 %v2058
        %2091 = vmatpush.msra.mxu0 %v2057
        %2092 = vmatpush.msra.mxu0 %v2056
        %2093 = vmatpush.msra.mxu0 %v2055
        %2094 = vmatpush.msra.mxu0 %v2054
        %2095 = vmatpush.msra.mxu0 %v2053
        %2096 = vmatpush.msra.mxu0 %v2052
        %2097 = vmatpush.msra.mxu0 %v2051
        %2098 = vmatpush.msra.mxu0 %v2050
        %2099 = vmatpush.msra.mxu0 %v2049
        %2100 = vmatpush.msra.mxu0 %v2048
        %2101 = vmatpush.msra.mxu0 %v2047
        %2102 = vmatpush.msra.mxu0 %v2046
        %2103 = vmatmul.f32.gmra.mxu0 %v2064
        %v2104 = vpop.f32.mrf.mxu0
        %v2105 = vadd.f32 %v2085, %v2104
        %2106 = vdwg.mxu0
        %v2107 = vmax.f32 %v2029, %v2105
        %v2108 = vld [vmem:[%s8] sm:$0xff]
        %v2109 = vld [vmem:[%s8 + $0x8] sm:$0xff]
        %v2110 = vld [vmem:[%s8 + $0x10] sm:$0xff]
        %v2111 = vld [vmem:[%s8 + $0x18] sm:$0xff]
        %v2112 = vld [vmem:[%s8 + $0x20] sm:$0xff]
        %v2113 = vld [vmem:[%s8 + $0x28] sm:$0xff]
        %v2114 = vld [vmem:[%s8 + $0x30] sm:$0xff]
        %v2115 = vld [vmem:[%s8 + $0x38] sm:$0xff]
        %v2116 = vld [vmem:[%s1057] sm:$0xff]
        %v2117 = vld [vmem:[%s1057 + $0x8] sm:$0xff]
        %v2118 = vld [vmem:[%s1057 + $0x10] sm:$0xff]
        %v2119 = vld [vmem:[%s1057 + $0x18] sm:$0xff]
        %v2120 = vld [vmem:[%s1057 + $0x20] sm:$0xff]
        %v2121 = vld [vmem:[%s1057 + $0x28] sm:$0xff]
        %v2122 = vld [vmem:[%s1057 + $0x30] sm:$0xff]
        %v2123 = vld [vmem:[%s1057 + $0x38] sm:$0xff]
        %v2125 = vrot.slane %v2107, 1
        %v2126 = vsel %vm1068, %v2125, 0
        %2128 = vmatpush.msra.mxu0 0.0
        %2129 = vmatpush.msra.mxu0 0.0
        %2130 = vmatpush.msra.mxu0 0.0
        %2131 = vmatpush.msra.mxu0 0.0
        %2132 = vmatpush.msra.mxu0 0.0
        %2133 = vmatpush.msra.mxu0 0.0
        %2134 = vmatpush.msra.mxu0 0.0
        %2135 = vmatpush.msra.mxu0 0.0
        %2136 = vmatpush.msra.mxu0 %v2123
        %2137 = vmatpush.msra.mxu0 %v2122
        %2138 = vmatpush.msra.mxu0 %v2121
        %2139 = vmatpush.msra.mxu0 %v2120
        %2140 = vmatpush.msra.mxu0 %v2119
        %2141 = vmatpush.msra.mxu0 %v2118
        %2142 = vmatpush.msra.mxu0 %v2117
        %2143 = vmatpush.msra.mxu0 %v2116
        %2144 = vmatmul.f32.gmra.mxu0 %v2126
        %v2145 = vpop.f32.mrf.mxu0
        %v2146 = vadd.f32 0.0, %v2145
        %2147 = vdwg.mxu0
        %v2148 = vsel %vm1068, %v2107, 0
        %2150 = vmatpush.msra.mxu0 0.0
        %2151 = vmatpush.msra.mxu0 0.0
        %2152 = vmatpush.msra.mxu0 0.0
        %2153 = vmatpush.msra.mxu0 0.0
        %2154 = vmatpush.msra.mxu0 0.0
        %2155 = vmatpush.msra.mxu0 0.0
        %2156 = vmatpush.msra.mxu0 0.0
        %2157 = vmatpush.msra.mxu0 0.0
        %2158 = vmatpush.msra.mxu0 %v2115
        %2159 = vmatpush.msra.mxu0 %v2114
        %2160 = vmatpush.msra.mxu0 %v2113
        %2161 = vmatpush.msra.mxu0 %v2112
        %2162 = vmatpush.msra.mxu0 %v2111
        %2163 = vmatpush.msra.mxu0 %v2110
        %2164 = vmatpush.msra.mxu0 %v2109
        %2165 = vmatpush.msra.mxu0 %v2108
        %2166 = vmatmul.f32.gmra.mxu0 %v2148
        %v2167 = vpop.f32.mrf.mxu0
        %v2168 = vadd.f32 %v2146, %v2167
        %2169 = vdwg.mxu0
        %v2170 = vld [vmem:[%s1113] sm:$0xff]
        %v2171 = vld [vmem:[%s1113 + $0x8] sm:$0xff]
        %v2172 = vld [vmem:[%s1113 + $0x10] sm:$0xff]
        %v2173 = vld [vmem:[%s1113 + $0x18] sm:$0xff]
        %v2174 = vld [vmem:[%s1113 + $0x20] sm:$0xff]
        %v2175 = vld [vmem:[%s1113 + $0x28] sm:$0xff]
        %v2176 = vld [vmem:[%s1113 + $0x30] sm:$0xff]
        %v2177 = vld [vmem:[%s1113 + $0x38] sm:$0xff]
        %v2178 = vrot.slane %v2107, 2
        %v2179 = vsel %vm1068, %v2178, 0
        %2181 = vmatpush.msra.mxu0 0.0
        %2182 = vmatpush.msra.mxu0 0.0
        %2183 = vmatpush.msra.mxu0 0.0
        %2184 = vmatpush.msra.mxu0 0.0
        %2185 = vmatpush.msra.mxu0 0.0
        %2186 = vmatpush.msra.mxu0 0.0
        %2187 = vmatpush.msra.mxu0 0.0
        %2188 = vmatpush.msra.mxu0 0.0
        %2189 = vmatpush.msra.mxu0 %v2177
        %2190 = vmatpush.msra.mxu0 %v2176
        %2191 = vmatpush.msra.mxu0 %v2175
        %2192 = vmatpush.msra.mxu0 %v2174
        %2193 = vmatpush.msra.mxu0 %v2173
        %2194 = vmatpush.msra.mxu0 %v2172
        %2195 = vmatpush.msra.mxu0 %v2171
        %2196 = vmatpush.msra.mxu0 %v2170
        %2197 = vmatmul.f32.gmra.mxu0 %v2179
        %v2198 = vpop.f32.mrf.mxu0
        %v2199 = vadd.f32 0.0, %v2198
        %2200 = vdwg.mxu0
        %v2201 = vadd.f32 %v2168, %v2199
        %v2202 = vld [vmem:[%s1146] sm:$0xff]
        %v2203 = vld [vmem:[%s1146 + $0x8] sm:$0xff]
        %v2204 = vld [vmem:[%s1146 + $0x10] sm:$0xff]
        %v2205 = vld [vmem:[%s1146 + $0x18] sm:$0xff]
        %v2206 = vld [vmem:[%s1146 + $0x20] sm:$0xff]
        %v2207 = vld [vmem:[%s1146 + $0x28] sm:$0xff]
        %v2208 = vld [vmem:[%s1146 + $0x30] sm:$0xff]
        %v2209 = vld [vmem:[%s1146 + $0x38] sm:$0xff]
        %v2210 = vrot.slane %v2107, 3
        %v2211 = vsel %vm1068, %v2210, 0
        %2213 = vmatpush.msra.mxu0 0.0
        %2214 = vmatpush.msra.mxu0 0.0
        %2215 = vmatpush.msra.mxu0 0.0
        %2216 = vmatpush.msra.mxu0 0.0
        %2217 = vmatpush.msra.mxu0 0.0
        %2218 = vmatpush.msra.mxu0 0.0
        %2219 = vmatpush.msra.mxu0 0.0
        %2220 = vmatpush.msra.mxu0 0.0
        %2221 = vmatpush.msra.mxu0 %v2209
        %2222 = vmatpush.msra.mxu0 %v2208
        %2223 = vmatpush.msra.mxu0 %v2207
        %2224 = vmatpush.msra.mxu0 %v2206
        %2225 = vmatpush.msra.mxu0 %v2205
        %2226 = vmatpush.msra.mxu0 %v2204
        %2227 = vmatpush.msra.mxu0 %v2203
        %2228 = vmatpush.msra.mxu0 %v2202
        %2229 = vmatmul.f32.gmra.mxu0 %v2211
        %v2230 = vpop.f32.mrf.mxu0
        %v2231 = vadd.f32 0.0, %v2230
        %2232 = vdwg.mxu0
        %v2233 = vadd.f32 %v2201, %v2231
        %s2234 = sld [smem:[#allocation2]]
        %v2235 = vstv %s2234
        %v2236 = vadd.f32 %v2233, %v2235
        %v2237 = vmax.f32 %v2236, 0.0
        %v2238 = vld [vmem:[%s6] sm:$0xff]
        %v2239 = vld [vmem:[%s6 + $0x8] sm:$0xff]
        %v2240 = vld [vmem:[%s6 + $0x10] sm:$0xff]
        %v2241 = vld [vmem:[%s6 + $0x18] sm:$0xff]
        %v2242 = vld [vmem:[%s6 + $0x20] sm:$0xff]
        %v2243 = vld [vmem:[%s6 + $0x28] sm:$0xff]
        %v2244 = vld [vmem:[%s6 + $0x30] sm:$0xff]
        %v2245 = vld [vmem:[%s6 + $0x38] sm:$0xff]
        %v2247 = vsel %vm1068, %v2237, 0
        %2249 = vmatpush.msra.mxu0 0.0
        %2250 = vmatpush.msra.mxu0 0.0
        %2251 = vmatpush.msra.mxu0 0.0
        %2252 = vmatpush.msra.mxu0 0.0
        %2253 = vmatpush.msra.mxu0 0.0
        %2254 = vmatpush.msra.mxu0 0.0
        %2255 = vmatpush.msra.mxu0 0.0
        %2256 = vmatpush.msra.mxu0 0.0
        %2257 = vmatpush.msra.mxu0 %v2245
        %2258 = vmatpush.msra.mxu0 %v2244
        %2259 = vmatpush.msra.mxu0 %v2243
        %2260 = vmatpush.msra.mxu0 %v2242
        %2261 = vmatpush.msra.mxu0 %v2241
        %2262 = vmatpush.msra.mxu0 %v2240
        %2263 = vmatpush.msra.mxu0 %v2239
        %2264 = vmatpush.msra.mxu0 %v2238
        %2265 = vmatmul.f32.gmra.mxu0 %v2247
        %v2266 = vpop.f32.mrf.mxu0
        %v2267 = vadd.f32 0.0, %v2266
        %2268 = vdwg.mxu0
        %v2269 = vld [vmem:[%s1214] sm:$0xff]
        %v2270 = vld [vmem:[%s1214 + $0x8] sm:$0xff]
        %v2271 = vld [vmem:[%s1214 + $0x10] sm:$0xff]
        %v2272 = vld [vmem:[%s1214 + $0x18] sm:$0xff]
        %v2273 = vld [vmem:[%s1214 + $0x20] sm:$0xff]
        %v2274 = vld [vmem:[%s1214 + $0x28] sm:$0xff]
        %v2275 = vld [vmem:[%s1214 + $0x30] sm:$0xff]
        %v2276 = vld [vmem:[%s1214 + $0x38] sm:$0xff]
        %2277 = vmatpush.msra.mxu0 0.0
        %2278 = vmatpush.msra.mxu0 0.0
        %2279 = vmatpush.msra.mxu0 0.0
        %2280 = vmatpush.msra.mxu0 0.0
        %2281 = vmatpush.msra.mxu0 0.0
        %2282 = vmatpush.msra.mxu0 0.0
        %2283 = vmatpush.msra.mxu0 0.0
        %2284 = vmatpush.msra.mxu0 0.0
        %2285 = vmatpush.msra.mxu0 %v2276
        %2286 = vmatpush.msra.mxu0 %v2275
        %2287 = vmatpush.msra.mxu0 %v2274
        %2288 = vmatpush.msra.mxu0 %v2273
        %2289 = vmatpush.msra.mxu0 %v2272
        %2290 = vmatpush.msra.mxu0 %v2271
        %2291 = vmatpush.msra.mxu0 %v2270
        %2292 = vmatpush.msra.mxu0 %v2269
        %2293 = vmatmul.f32.gmra.mxu0 %v2247
        %v2294 = vpop.f32.mrf.mxu0
        %v2295 = vadd.f32 0.0, %v2294
        %2296 = vdwg.mxu0
        %v2297 = vmax.f32 %v2267, %v2295
        %v2298 = vld [vmem:[%s1244] sm:$0xff]
        %v2299 = vld [vmem:[%s1244 + $0x8] sm:$0xff]
        %v2300 = vld [vmem:[%s1244 + $0x10] sm:$0xff]
        %v2301 = vld [vmem:[%s1244 + $0x18] sm:$0xff]
        %v2302 = vld [vmem:[%s1244 + $0x20] sm:$0xff]
        %v2303 = vld [vmem:[%s1244 + $0x28] sm:$0xff]
        %v2304 = vld [vmem:[%s1244 + $0x30] sm:$0xff]
        %v2305 = vld [vmem:[%s1244 + $0x38] sm:$0xff]
        %2306 = vmatpush.msra.mxu0 0.0
        %2307 = vmatpush.msra.mxu0 0.0
        %2308 = vmatpush.msra.mxu0 0.0
        %2309 = vmatpush.msra.mxu0 0.0
        %2310 = vmatpush.msra.mxu0 0.0
        %2311 = vmatpush.msra.mxu0 0.0
        %2312 = vmatpush.msra.mxu0 0.0
        %2313 = vmatpush.msra.mxu0 0.0
        %2314 = vmatpush.msra.mxu0 %v2305
        %2315 = vmatpush.msra.mxu0 %v2304
        %2316 = vmatpush.msra.mxu0 %v2303
        %2317 = vmatpush.msra.mxu0 %v2302
        %2318 = vmatpush.msra.mxu0 %v2301
        %2319 = vmatpush.msra.mxu0 %v2300
        %2320 = vmatpush.msra.mxu0 %v2299
        %2321 = vmatpush.msra.mxu0 %v2298
        %2322 = vmatmul.f32.gmra.mxu0 %v2247
        %v2323 = vpop.f32.mrf.mxu0
        %v2324 = vadd.f32 0.0, %v2323
        %2325 = vdwg.mxu0
        %v2326 = vmax.f32 %v2297, %v2324
        %v2327 = vld [vmem:[%s1274] sm:$0xff]
        %v2328 = vld [vmem:[%s1274 + $0x8] sm:$0xff]
        %v2329 = vld [vmem:[%s1274 + $0x10] sm:$0xff]
        %v2330 = vld [vmem:[%s1274 + $0x18] sm:$0xff]
        %v2331 = vld [vmem:[%s1274 + $0x20] sm:$0xff]
        %v2332 = vld [vmem:[%s1274 + $0x28] sm:$0xff]
        %v2333 = vld [vmem:[%s1274 + $0x30] sm:$0xff]
        %v2334 = vld [vmem:[%s1274 + $0x38] sm:$0xff]
        %2335 = vmatpush.msra.mxu0 0.0
        %2336 = vmatpush.msra.mxu0 0.0
        %2337 = vmatpush.msra.mxu0 0.0
        %2338 = vmatpush.msra.mxu0 0.0
        %2339 = vmatpush.msra.mxu0 0.0
        %2340 = vmatpush.msra.mxu0 0.0
        %2341 = vmatpush.msra.mxu0 0.0
        %2342 = vmatpush.msra.mxu0 0.0
        %2343 = vmatpush.msra.mxu0 %v2334
        %2344 = vmatpush.msra.mxu0 %v2333
        %2345 = vmatpush.msra.mxu0 %v2332
        %2346 = vmatpush.msra.mxu0 %v2331
        %2347 = vmatpush.msra.mxu0 %v2330
        %2348 = vmatpush.msra.mxu0 %v2329
        %2349 = vmatpush.msra.mxu0 %v2328
        %2350 = vmatpush.msra.mxu0 %v2327
        %2351 = vmatmul.f32.gmra.mxu0 %v2247
        %v2352 = vpop.f32.mrf.mxu0
        %v2353 = vadd.f32 0.0, %v2352
        %2354 = vdwg.mxu0
        %v2355 = vmax.f32 %v2326, %v2353
        %v2356 = vld [vmem:[%s9] sm:$0xff]
        %v2357 = vld [vmem:[%s9 + $0x8] sm:$0xff]
        %s2358 = sld [smem:[#allocation2 + $0x1]]
        %v2359 = vstv %s2358
        %v2361 = vsel %vm1308, %v2355, 0
        %2363 = vmatpush.msra.mxu0 0.0
        %2364 = vmatpush.msra.mxu0 0.0
        %2365 = vmatpush.msra.mxu0 0.0
        %2366 = vmatpush.msra.mxu0 0.0
        %2367 = vmatpush.msra.mxu0 0.0
        %2368 = vmatpush.msra.mxu0 0.0
        %2369 = vmatpush.msra.mxu0 0.0
        %2370 = vmatpush.msra.mxu0 0.0
        %2371 = vmatpush.msra.mxu0 0.0
        %2372 = vmatpush.msra.mxu0 0.0
        %2373 = vmatpush.msra.mxu0 0.0
        %2374 = vmatpush.msra.mxu0 0.0
        %2375 = vmatpush.msra.mxu0 0.0
        %2376 = vmatpush.msra.mxu0 0.0
        %2377 = vmatpush.msra.mxu0 %v2357
        %2378 = vmatpush.msra.mxu0 %v2356
        %2379 = vmatmul.f32.gmra.mxu0 %v2361
        %v2380 = vpop.f32.mrf.mxu0
        %v2381 = vadd.f32 %v2359, %v2380
        %2382 = vdwg.mxu0
        %v2383 = vmax.f32 %v2381, 0.0
        %v2384 = vld [vmem:[%s7] sm:$0xff]
        %v2385 = vld [vmem:[%s7 + $0x8] sm:$0xff]
        %v2387 = vsel %vm1308, %v2383, 0
        %2389 = vmatpush.msra.mxu0 0.0
        %2390 = vmatpush.msra.mxu0 0.0
        %2391 = vmatpush.msra.mxu0 0.0
        %2392 = vmatpush.msra.mxu0 0.0
        %2393 = vmatpush.msra.mxu0 0.0
        %2394 = vmatpush.msra.mxu0 0.0
        %2395 = vmatpush.msra.mxu0 0.0
        %2396 = vmatpush.msra.mxu0 0.0
        %2397 = vmatpush.msra.mxu0 0.0
        %2398 = vmatpush.msra.mxu0 0.0
        %2399 = vmatpush.msra.mxu0 0.0
        %2400 = vmatpush.msra.mxu0 0.0
        %2401 = vmatpush.msra.mxu0 0.0
        %2402 = vmatpush.msra.mxu0 0.0
        %2403 = vmatpush.msra.mxu0 %v2385
        %2404 = vmatpush.msra.mxu0 %v2384
        %2405 = vmatmul.f32.gmra.mxu0 %v2387
        %v2406 = vpop.f32.mrf.mxu0
        %v2407 = vadd.f32 0.0, %v2406
        %2408 = vdwg.mxu0
        %v2409 = vld [vmem:[%s1358] sm:$0xff]
        %v2410 = vld [vmem:[%s1358 + $0x8] sm:$0xff]
        %2411 = vmatpush.msra.mxu0 0.0
        %2412 = vmatpush.msra.mxu0 0.0
        %2413 = vmatpush.msra.mxu0 0.0
        %2414 = vmatpush.msra.mxu0 0.0
        %2415 = vmatpush.msra.mxu0 0.0
        %2416 = vmatpush.msra.mxu0 0.0
        %2417 = vmatpush.msra.mxu0 0.0
        %2418 = vmatpush.msra.mxu0 0.0
        %2419 = vmatpush.msra.mxu0 0.0
        %2420 = vmatpush.msra.mxu0 0.0
        %2421 = vmatpush.msra.mxu0 0.0
        %2422 = vmatpush.msra.mxu0 0.0
        %2423 = vmatpush.msra.mxu0 0.0
        %2424 = vmatpush.msra.mxu0 0.0
        %2425 = vmatpush.msra.mxu0 %v2410
        %2426 = vmatpush.msra.mxu0 %v2409
        %2427 = vmatmul.f32.gmra.mxu0 %v2387
        %v2428 = vpop.f32.mrf.mxu0
        %v2429 = vadd.f32 0.0, %v2428
        %2430 = vdwg.mxu0
        %v2431 = vmax.f32 %v2407, %v2429
        %v2432 = vld [vmem:[%s1382] sm:$0xff]
        %v2433 = vld [vmem:[%s1382 + $0x8] sm:$0xff]
        %2434 = vmatpush.msra.mxu0 0.0
        %2435 = vmatpush.msra.mxu0 0.0
        %2436 = vmatpush.msra.mxu0 0.0
        %2437 = vmatpush.msra.mxu0 0.0
        %2438 = vmatpush.msra.mxu0 0.0
        %2439 = vmatpush.msra.mxu0 0.0
        %2440 = vmatpush.msra.mxu0 0.0
        %2441 = vmatpush.msra.mxu0 0.0
        %2442 = vmatpush.msra.mxu0 0.0
        %2443 = vmatpush.msra.mxu0 0.0
        %2444 = vmatpush.msra.mxu0 0.0
        %2445 = vmatpush.msra.mxu0 0.0
        %2446 = vmatpush.msra.mxu0 0.0
        %2447 = vmatpush.msra.mxu0 0.0
        %2448 = vmatpush.msra.mxu0 %v2433
        %2449 = vmatpush.msra.mxu0 %v2432
        %2450 = vmatmul.f32.gmra.mxu0 %v2387
        %v2451 = vpop.f32.mrf.mxu0
        %v2452 = vadd.f32 0.0, %v2451
        %2453 = vdwg.mxu0
        %v2454 = vmax.f32 %v2431, %v2452
        %v2455 = vld [vmem:[%s1406] sm:$0xff]
        %v2456 = vld [vmem:[%s1406 + $0x8] sm:$0xff]
        %2457 = vmatpush.msra.mxu0 0.0
        %2458 = vmatpush.msra.mxu0 0.0
        %2459 = vmatpush.msra.mxu0 0.0
        %2460 = vmatpush.msra.mxu0 0.0
        %2461 = vmatpush.msra.mxu0 0.0
        %2462 = vmatpush.msra.mxu0 0.0
        %2463 = vmatpush.msra.mxu0 0.0
        %2464 = vmatpush.msra.mxu0 0.0
        %2465 = vmatpush.msra.mxu0 0.0
        %2466 = vmatpush.msra.mxu0 0.0
        %2467 = vmatpush.msra.mxu0 0.0
        %2468 = vmatpush.msra.mxu0 0.0
        %2469 = vmatpush.msra.mxu0 0.0
        %2470 = vmatpush.msra.mxu0 0.0
        %2471 = vmatpush.msra.mxu0 %v2456
        %2472 = vmatpush.msra.mxu0 %v2455
        %2473 = vmatmul.f32.gmra.mxu0 %v2387
        %v2474 = vpop.f32.mrf.mxu0
        %v2475 = vadd.f32 0.0, %v2474
        %2476 = vdwg.mxu0
        %v2477 = vmax.f32 %v2454, %v2475
        %v2478 = vld [vmem:[%s10] sm:$0xf]
        %s2479 = sld [smem:[#allocation2 + $0x2]]
        %v2480 = vstv %s2479
        %v2482 = vsel %vm612, %v2477, 0
        %v2485 = vsel %vm616, %v2478, 0
        %2487 = vmatpush.msra.mxu0 0.0
        %2488 = vmatpush.msra.mxu0 0.0
        %2489 = vmatpush.msra.mxu0 0.0
        %2490 = vmatpush.msra.mxu0 0.0
        %2491 = vmatpush.msra.mxu0 0.0
        %2492 = vmatpush.msra.mxu0 0.0
        %2493 = vmatpush.msra.mxu0 0.0
        %2494 = vmatpush.msra.mxu0 0.0
        %2495 = vmatpush.msra.mxu0 0.0
        %2496 = vmatpush.msra.mxu0 0.0
        %2497 = vmatpush.msra.mxu0 0.0
        %2498 = vmatpush.msra.mxu0 0.0
        %2499 = vmatpush.msra.mxu0 0.0
        %2500 = vmatpush.msra.mxu0 0.0
        %2501 = vmatpush.msra.mxu0 0.0
        %2502 = vmatpush.msra.mxu0 %v2485
        %2503 = vmatmul.f32.gmra.mxu0 %v2482
        %v2504 = vpop.f32.mrf.mxu0
        %v2505 = vadd.f32 %v2480, %v2504
        %2506 = vdwg.mxu0
        %v2507 = vmax.f32 %v2505, 0.0
        %v2508 = vld [vmem:[%s11] sm:$0xf]
        %s2509 = sld [smem:[#allocation2 + $0x3]]
        %v2510 = vstv %s2509
        %v2512 = vsel %vm612, %v2507, 0
        %v2515 = vsel %vm616, %v2508, 0
        %2517 = vmatpush.msra.mxu0 0.0
        %2518 = vmatpush.msra.mxu0 0.0
        %2519 = vmatpush.msra.mxu0 0.0
        %2520 = vmatpush.msra.mxu0 0.0
        %2521 = vmatpush.msra.mxu0 0.0
        %2522 = vmatpush.msra.mxu0 0.0
        %2523 = vmatpush.msra.mxu0 0.0
        %2524 = vmatpush.msra.mxu0 0.0
        %2525 = vmatpush.msra.mxu0 0.0
        %2526 = vmatpush.msra.mxu0 0.0
        %2527 = vmatpush.msra.mxu0 0.0
        %2528 = vmatpush.msra.mxu0 0.0
        %2529 = vmatpush.msra.mxu0 0.0
        %2530 = vmatpush.msra.mxu0 0.0
        %2531 = vmatpush.msra.mxu0 0.0
        %2532 = vmatpush.msra.mxu0 %v2515
        %2533 = vmatmul.f32.gmra.mxu0 %v2512
        %v2534 = vpop.f32.mrf.mxu0
        %v2535 = vadd.f32 %v2510, %v2534
        %2536 = vdwg.mxu0
        %v2537 = vmax.f32 %v2535, 0.0
        %v2538 = vld [vmem:[%s12] sm:$0xff]
        %v2539 = vld [vmem:[%s12 + $0x8] sm:$0xff]
        %s2540 = sld [smem:[#allocation2 + $0x4]]
        %v2541 = vstv %s2540
        %2542 = vmatpush.msra.mxu0 0.0
        %2543 = vmatpush.msra.mxu0 0.0
        %2544 = vmatpush.msra.mxu0 0.0
        %2545 = vmatpush.msra.mxu0 0.0
        %2546 = vmatpush.msra.mxu0 0.0
        %2547 = vmatpush.msra.mxu0 0.0
        %2548 = vmatpush.msra.mxu0 0.0
        %2549 = vmatpush.msra.mxu0 0.0
        %2550 = vmatpush.msra.mxu0 0.0
        %2551 = vmatpush.msra.mxu0 0.0
        %2552 = vmatpush.msra.mxu0 0.0
        %2553 = vmatpush.msra.mxu0 0.0
        %2554 = vmatpush.msra.mxu0 0.0
        %2555 = vmatpush.msra.mxu0 0.0
        %2556 = vmatpush.msra.mxu0 %v2539
        %2557 = vmatpush.msra.mxu0 %v2538
        %2558 = vmatmul.f32.gmra.mxu0 %v2387
        %v2559 = vpop.f32.mrf.mxu0
        %v2560 = vadd.f32 %v2541, %v2559
        %2561 = vdwg.mxu0
        %v2562 = vmax.f32 %v2560, 0.0
        %v2563 = vld [vmem:[%s13] sm:$0xff]
        %v2564 = vld [vmem:[%s13 + $0x8] sm:$0xff]
        %v2565 = vld [vmem:[%s13 + $0x10] sm:$0xff]
        %v2566 = vld [vmem:[%s13 + $0x18] sm:$0xff]
        %v2567 = vld [vmem:[%s13 + $0x20] sm:$0xff]
        %v2568 = vld [vmem:[%s13 + $0x28] sm:$0xff]
        %v2569 = vld [vmem:[%s13 + $0x30] sm:$0xff]
        %v2570 = vld [vmem:[%s13 + $0x38] sm:$0xff]
        %s2571 = sld [smem:[#allocation2 + $0x5]]
        %v2572 = vstv %s2571
        %2573 = vmatpush.msra.mxu0 0.0
        %2574 = vmatpush.msra.mxu0 0.0
        %2575 = vmatpush.msra.mxu0 0.0
        %2576 = vmatpush.msra.mxu0 0.0
        %2577 = vmatpush.msra.mxu0 0.0
        %2578 = vmatpush.msra.mxu0 0.0
        %2579 = vmatpush.msra.mxu0 0.0
        %2580 = vmatpush.msra.mxu0 0.0
        %2581 = vmatpush.msra.mxu0 %v2570
        %2582 = vmatpush.msra.mxu0 %v2569
        %2583 = vmatpush.msra.mxu0 %v2568
        %2584 = vmatpush.msra.mxu0 %v2567
        %2585 = vmatpush.msra.mxu0 %v2566
        %2586 = vmatpush.msra.mxu0 %v2565
        %2587 = vmatpush.msra.mxu0 %v2564
        %2588 = vmatpush.msra.mxu0 %v2563
        %2589 = vmatmul.f32.gmra.mxu0 %v2247
        %v2590 = vpop.f32.mrf.mxu0
        %v2591 = vadd.f32 %v2572, %v2590
        %2592 = vdwg.mxu0
        %v2593 = vmax.f32 %v2591, 0.0
        %v2594 = vld [vmem:[%s14] sm:$0xf]
        %v2596 = vsel %vm612, %v2537, 0
        %v2599 = vsel %vm616, %v2594, 0
        %2601 = vmatpush.msra.mxu0 0.0
        %2602 = vmatpush.msra.mxu0 0.0
        %2603 = vmatpush.msra.mxu0 0.0
        %2604 = vmatpush.msra.mxu0 0.0
        %2605 = vmatpush.msra.mxu0 0.0
        %2606 = vmatpush.msra.mxu0 0.0
        %2607 = vmatpush.msra.mxu0 0.0
        %2608 = vmatpush.msra.mxu0 0.0
        %2609 = vmatpush.msra.mxu0 0.0
        %2610 = vmatpush.msra.mxu0 0.0
        %2611 = vmatpush.msra.mxu0 0.0
        %2612 = vmatpush.msra.mxu0 0.0
        %2613 = vmatpush.msra.mxu0 0.0
        %2614 = vmatpush.msra.mxu0 0.0
        %2615 = vmatpush.msra.mxu0 0.0
        %2616 = vmatpush.msra.mxu0 %v2599
        %2617 = vmatmul.f32.gmra.mxu0 %v2596
        %v2618 = vpop.f32.mrf.mxu0
        %v2619 = vadd.f32 0.0, %v2618
        %2620 = vdwg.mxu0
        %v2621 = vadd.f32 %v2562, %v2619
        %v2622 = vld [vmem:[%s15] sm:$0xff]
        %v2623 = vld [vmem:[%s15 + $0x8] sm:$0xff]
        %v2625 = vsel %vm1308, %v2621, 0
        %2627 = vmatpush.msra.mxu0 0.0
        %2628 = vmatpush.msra.mxu0 0.0
        %2629 = vmatpush.msra.mxu0 0.0
        %2630 = vmatpush.msra.mxu0 0.0
        %2631 = vmatpush.msra.mxu0 0.0
        %2632 = vmatpush.msra.mxu0 0.0
        %2633 = vmatpush.msra.mxu0 0.0
        %2634 = vmatpush.msra.mxu0 0.0
        %2635 = vmatpush.msra.mxu0 0.0
        %2636 = vmatpush.msra.mxu0 0.0
        %2637 = vmatpush.msra.mxu0 0.0
        %2638 = vmatpush.msra.mxu0 0.0
        %2639 = vmatpush.msra.mxu0 0.0
        %2640 = vmatpush.msra.mxu0 0.0
        %2641 = vmatpush.msra.mxu0 %v2623
        %2642 = vmatpush.msra.mxu0 %v2622
        %2643 = vmatmul.f32.gmra.mxu0 %v2625
        %v2644 = vpop.f32.mrf.mxu0
        %v2645 = vadd.f32 0.0, %v2644
        %2646 = vdwg.mxu0
        %v2647 = vadd.f32 %v2593, %v2645
        %v2648 = vld [vmem:[%s16] sm:$0xff]
        %v2649 = vld [vmem:[%s16 + $0x8] sm:$0xff]
        %v2650 = vld [vmem:[%s16 + $0x10] sm:$0xff]
        %v2651 = vld [vmem:[%s16 + $0x18] sm:$0xff]
        %v2652 = vld [vmem:[%s16 + $0x20] sm:$0xff]
        %v2653 = vld [vmem:[%s16 + $0x28] sm:$0xff]
        %v2654 = vld [vmem:[%s16 + $0x30] sm:$0xff]
        %v2655 = vld [vmem:[%s16 + $0x38] sm:$0xff]
        %v2656 = vld [vmem:[%s16 + $0x40] sm:$0xff]
        %v2657 = vld [vmem:[%s16 + $0x48] sm:$0xff]
        %v2658 = vld [vmem:[%s16 + $0x50] sm:$0xff]
        %v2659 = vld [vmem:[%s16 + $0x58] sm:$0xff]
        %v2660 = vld [vmem:[%s16 + $0x60] sm:$0xff]
        %v2661 = vld [vmem:[%s16 + $0x68] sm:$0xff]
        %v2662 = vld [vmem:[%s16 + $0x70] sm:$0xff]
        %v2663 = vld [vmem:[%s16 + $0x78] sm:$0xff]
        %v2665 = vsel %vm1068, %v2647, 0
        %2667 = vmatpush.msra.mxu0 0.0
        %2668 = vmatpush.msra.mxu0 0.0
        %2669 = vmatpush.msra.mxu0 0.0
        %2670 = vmatpush.msra.mxu0 0.0
        %2671 = vmatpush.msra.mxu0 0.0
        %2672 = vmatpush.msra.mxu0 0.0
        %2673 = vmatpush.msra.mxu0 0.0
        %2674 = vmatpush.msra.mxu0 0.0
        %2675 = vmatpush.msra.mxu0 %v2662
        %2676 = vmatpush.msra.mxu0 %v2660
        %2677 = vmatpush.msra.mxu0 %v2658
        %2678 = vmatpush.msra.mxu0 %v2656
        %2679 = vmatpush.msra.mxu0 %v2654
        %2680 = vmatpush.msra.mxu0 %v2652
        %2681 = vmatpush.msra.mxu0 %v2650
        %2682 = vmatpush.msra.mxu0 %v2648
        %2683 = vmatmul.f32.gmra.mxu0 %v2665
        %v2684 = vpop.f32.mrf.mxu0
        %v2685 = vadd.f32 0.0, %v2684
        %2686 = vdwg.mxu0
        %2687 = vmatpush.msra.mxu0 0.0
        %2688 = vmatpush.msra.mxu0 0.0
        %2689 = vmatpush.msra.mxu0 0.0
        %2690 = vmatpush.msra.mxu0 0.0
        %2691 = vmatpush.msra.mxu0 0.0
        %2692 = vmatpush.msra.mxu0 0.0
        %2693 = vmatpush.msra.mxu0 0.0
        %2694 = vmatpush.msra.mxu0 0.0
        %2695 = vmatpush.msra.mxu0 %v2663
        %2696 = vmatpush.msra.mxu0 %v2661
        %2697 = vmatpush.msra.mxu0 %v2659
        %2698 = vmatpush.msra.mxu0 %v2657
        %2699 = vmatpush.msra.mxu0 %v2655
        %2700 = vmatpush.msra.mxu0 %v2653
        %2701 = vmatpush.msra.mxu0 %v2651
        %2702 = vmatpush.msra.mxu0 %v2649
        %2703 = vmatmul.f32.gmra.mxu0 %v2665
        %v2704 = vpop.f32.mrf.mxu0
        %v2705 = vadd.f32 0.0, %v2704
        %2706 = vdwg.mxu0
        %v2707 = vperm.slane %v2685, 0
        %v2708 = vperm.slane %v2705, 0
        %v2709 = vmul.f32 %v2707, %v1726
        %v2710 = vmul.f32 %v2708, %v1727
        %2712 = vset.pattern.permute.xlu0 0
        %2713 = vperm.xlu0 %2712, %v1796
        %v2714 = vpop.permute.xlu0 %2713
        %v2716 = vadd.f32 %v2709, %v2714
        %v2717 = vadd.f32 %v2710, %v2714
        %v2720 = vrot.slane %v2717, 4
        %v2721 = vsel %vm616, %v2716, %v2720
        %s2723 = scalar_lea.vmem %s596, 8
        %2724 = vst [vmem:[%s2723] sm:$0xff] %v2721
        %s2725 = smul.u32 2, %s30
        %p2726 = scmp.lt.s32.totalorder %s2725, 3
        %s2727 = scalar_select %p2726, %s2725, 3
        %s2728 = smul.addr %s2727, 2
        %s2729 = smul.addr %s2728, 4
        %s2730 = scalar_lea.vmem %s18, %s2729
        // Predicated region
        $region97: #{fpa_forward.1} parent=91 // pred_check
          %p2731 = pneg %p431
        $region98: #{fpa_forward.1} parent=91 // pred_check_branch
          %2733 = sbr.rel (%p2731) target = $region100
        $region99: #{fpa_forward.1} parent=91 // pred_region
          %s2734 = smul.u32 2, %s30
        $region100: #{fpa_forward.1} parent=91 // pred_fallthru
          _
      $region92: #{fpa_forward.1} parent=5 // pred_fallthru
        _
      %p2735 = scmp.le.s32.totalorder 2, %s25
      // Predicated region
      $region101: #{fpa_forward.1} parent=5 // pred_check
        %p2736 = pneg %p2735
      $region102: #{fpa_forward.1} parent=5 // pred_check_branch
        %2738 = sbr.rel (%p2736) target = $region104
      $region103: #{fpa_forward.1} parent=5 // pred_region
        %s2739 = ssub.s32 %s25, 2
        // Predicated region
        $region105: #{fpa_forward.1} parent=103 // pred_check
          %p2740 = pneg %p437
        $region106: #{fpa_forward.1} parent=103 // pred_check_branch
          %2742 = sbr.rel (%p2740) target = $region108
        $region107: #{fpa_forward.1} parent=103 // pred_region
          %s2743 = smul.u32 2, %s31
          %p2744 = scmp.lt.s32.totalorder %s2743, 3
          %s2745 = scalar_select %p2744, %s2743, 3
          %s2746 = smul.addr %s2745, 2
          %s2747 = smul.addr %s2746, 4
          %s2748 = scalar_lea.vmem %s18, %s2747
        $region108: #{fpa_forward.1} parent=103 // pred_fallthru
          _
      $region104: #{fpa_forward.1} parent=5 // pred_fallthru
        _
    $region6: #{fpa_forward.1} parent=1 // loop_footer
      %s29 = sadd.s32 1, %s25
    $region7: #{fpa_forward.1} parent=1 // loop_footer_branch
      %24 = sbr.rel target = $region3
    $region8: #{fpa_forward.1} parent=1 // loop_exit
      _
    %2749 = vsyncpa [#allocation3], 1
    %s2750 = scalar_lea.sflag [#allocation3], 1
    %2751 = vsyncpa %s2750, 1

</llo_original>
